<compile_context>
chip_gen: v7x
topology: tpu7x:2x2x1
jax: 0.10.0
libtpu: 0.0.40
codegen_flags: <defaults>
</compile_context>

<pallas_src>
import functools

import jax
import jax.numpy as jnp
from jax import lax
from jax.experimental import pallas as pl
from jax.experimental.pallas import tpu as pltpu

_LG = 128  # lane-group width (vreg lane count)


# ----------------------------- Pallas kernel --------------------------------
def _vae_kernel(node_dim, x_ref, adj_ref, noise_ref, mask_ref, w_ref, b_ref,
                out_ref):
    f32 = jnp.float32

    def mm(a, b):
        return jnp.dot(a, b, preferred_element_type=f32)

    relu = lambda v: jnp.maximum(v, 0.0)

    x = x_ref[...]        # [NB, node_dim]   (Gb graphs stacked along the node axis)
    adj = adj_ref[...]    # [NB, NB]         block-diagonal normalized adjacency

    # 128-lane-aligned static views of the packed parameter slabs (zero-cost).
    w_eff = w_ref[0:node_dim, 0:_LG]          # W_mlp @ W_gcn1 (zero-padded lanes)
    w2 = w_ref[:, _LG:2 * _LG]                # W_gcn2
    w_head = w_ref[:, 2 * _LG:4 * _LG]        # [W_mean | pad | W_logstd | pad]
    c1 = b_ref[:, 0:_LG]                      # b_mlp @ W_gcn1
    b1 = b_ref[:, _LG:2 * _LG]                # b_gcn1
    b2 = b_ref[:, 2 * _LG:3 * _LG]            # b_gcn2
    bh = b_ref[:, 3 * _LG:5 * _LG]            # [b_mean | pad | b_logstd | pad]

    # folded  mlp + relu(first_gcn):
    #   adj @ ((x@Wm + bm) @ W1) + b1
    # = adj @ (x @ (Wm@W1)) + rowsum(adj)[:,None] * (bm@W1) + b1   (exact)
    rowsum = jnp.sum(adj, axis=1, keepdims=True)            # [NB, 1]
    h = relu(mm(adj, mm(x, w_eff)) + rowsum * c1 + b1)       # [NB, 128]

    # hidden_x = relu(second_gcn(hidden_x))
    h = relu(mm(adj, mm(h, w2)) + b2)                        # [NB, 128]

    # fused mean / log_stddev heads (each head in its own 128-lane group, so
    # the two slices below are vreg-boundary aligned).
    t = mm(adj, mm(h, w_head)) + bh                          # [NB, 256]
    mean = relu(t[:, 0:_LG])
    log_stddev = relu(t[:, _LG:2 * _LG])

    # reparameterization: z = noise * exp(log_stddev) + mean
    # (noise is zero-padded to 128 lanes in the wrapper, so padding cols of z
    #  stay exactly zero and do not perturb the decode contraction).
    z = noise_ref[...] * jnp.exp(log_stddev) + mean          # [NB, 128]

    # decode: sigmoid(z @ z^T) over the whole block (no explicit transpose).
    # The precomputed block-diag strict-upper mask zeroes both the cross-graph
    # blocks and the lower triangle; the store stays lane-dense (NB lanes).
    logits = lax.dot_general(z, z,
                             dimension_numbers=(((1,), (1,)), ((), ())),
                             preferred_element_type=f32)     # [NB, NB]
    out_ref[...] = jax.nn.sigmoid(logits) * mask_ref[...]


# ------------------------------ wrapper --------------------------------------
@functools.partial(jax.jit, static_argnames=("hidden_dim", "graphs_per_block"))
def vae_forward(x, adj, noise, w_slab, b_slab, *, hidden_dim, graphs_per_block):
    """Batched forward: x [B,N,node_dim], adj [B,N,N], noise [B,N,out_dim]."""
    B, N, node_dim = x.shape
    out_dim = noise.shape[-1]
    Gb = graphs_per_block
    assert B % Gb == 0, "batch must be a multiple of graphs_per_block"
    G = B // Gb                    # grid length (keep it a multiple of 2 for v7x)
    NB = Gb * N                    # nodes per grid step

    # stack Gb graphs per grid step along the node axis
    x_blocks = x.reshape(G, NB, node_dim)
    noise_pad = jnp.pad(noise.reshape(G, NB, out_dim),
                        ((0, 0), (0, 0), (0, _LG - out_dim)))

    # block-diagonal adjacency per block -> one big MXU operand per GCN stage
    eye = jnp.eye(Gb, dtype=jnp.float32)
    adj_bd = jnp.einsum("gbij,bc->gbicj",
                        adj.reshape(G, Gb, N, N), eye).reshape(G, NB, NB)

    # constant block-diag strict-upper-triangle mask (constant index_map ->
    # DMA'd once, stays resident in VMEM across grid steps)
    triu = jnp.triu(jnp.ones((N, N), jnp.float32), k=1)
    mask = jnp.einsum("bc,ij->bicj", eye, triu).reshape(NB, NB)

    kernel = functools.partial(_vae_kernel, node_dim)

    H, D = hidden_dim, out_dim
    flops = 2 * B * (N * node_dim * H + N * H * H + 2 * N * H * D
                     + 2 * N * N * H + 2 * N * N * D + N * N * D)
    transcendentals = B * N * (D + N)
    bytes_accessed = 4 * (x_blocks.size + adj_bd.size + noise_pad.size
                          + mask.size + w_slab.size + b_slab.size + G * NB * NB)

    out_full = pl.pallas_call(
        kernel,
        out_shape=jax.ShapeDtypeStruct((G, NB, NB), jnp.float32),
        grid=(G,),
        in_specs=[
            pl.BlockSpec((None, NB, node_dim), lambda g: (g, 0, 0)),   # x
            pl.BlockSpec((None, NB, NB),       lambda g: (g, 0, 0)),   # adj (blk-diag)
            pl.BlockSpec((None, NB, _LG),      lambda g: (g, 0, 0)),   # noise (padded)
            pl.BlockSpec((NB, NB),             lambda g: (0, 0)),      # mask (const)
            pl.BlockSpec(w_slab.shape,         lambda g: (0, 0)),      # weight slab
            pl.BlockSpec(b_slab.shape,         lambda g: (0, 0)),      # bias slab
        ],
        out_specs=pl.BlockSpec((None, NB, NB), lambda g: (g, 0, 0)),
        compiler_params=pltpu.CompilerParams(
            dimension_semantics=("parallel",)),   # both TCs busy on v7x
        cost_estimate=pl.CostEstimate(flops=flops,
                                      transcendentals=transcendentals,
                                      bytes_accessed=bytes_accessed),
    )(x_blocks, adj_bd, noise_pad, mask, w_slab, b_slab)

    # extract the per-graph diagonal [N, N] blocks -> [B, N, N]
    out5 = out_full.reshape(G, Gb, N, Gb, N)
    diag = jnp.diagonal(out5, axis1=1, axis2=3)        # [G, N, N, Gb]
    return jnp.moveaxis(diag, -1, 1).reshape(B, N, N)


# --------------------------- parameter packing --------------------------------
def pack_params(params, node_dim, hidden_dim, out_dim):
    """Pack all weights/biases into two lane-dense f32 slabs.

    Weight slab [128, 4*128]: column groups = [W_mlp@W_gcn1 | W_gcn2 | W_mean | W_logstd]
    Bias slab   [1,   5*128]: column groups = [b_mlp@W_gcn1 | b_gcn1 | b_gcn2 | b_mean | b_logstd]
    Every sub-block sits in its own 128-lane group so all kernel slices are
    vreg-boundary aligned.  The mlp fold is exact:
      adj @ ((x@Wm+bm)@W1) == adj@(x@(Wm@W1)) + rowsum(adj)*(bm@W1)
    """
    f32 = jnp.float32
    w_eff = (params["w_mlp"] @ params["w_gcn1"]).astype(f32)   # [node_dim, H]
    c1 = (params["b_mlp"] @ params["w_gcn1"]).astype(f32)      # [1, H]

    def place_w(w):
        out = jnp.zeros((_LG, _LG), f32)
        return out.at[:w.shape[0], :w.shape[1]].set(w.astype(f32))

    def place_b(b):
        out = jnp.zeros((1, _LG), f32)
        return out.at[:, :b.shape[1]].set(b.astype(f32))

    w_slab = jnp.concatenate(
        [place_w(w_eff), place_w(params["w_gcn2"]),
         place_w(params["w_mean"]), place_w(params["w_logstd"])], axis=1)
    b_slab = jnp.concatenate(
        [place_b(c1), place_b(params["b_gcn1"]), place_b(params["b_gcn2"]),
         place_b(params["b_mean"]), place_b(params["b_logstd"])], axis=1)
    return w_slab, b_slab


# --------------------------- graph preprocessing ------------------------------
def gcn_normalized_adjacency(edge_index, num_nodes):
    """Dense GCN normalization (self-loops + symmetric deg^-1/2 scaling)."""
    src, dst = edge_index[0], edge_index[1]
    a = jnp.zeros((num_nodes, num_nodes), jnp.float32)
    a = a.at[dst, src].add(1.0)
    a = a + jnp.eye(num_nodes, dtype=jnp.float32)
    deg = jnp.sum(a, axis=1)
    dinv = jnp.where(deg > 0, 1.0 / jnp.sqrt(deg), 0.0)
    return dinv[:, None] * a * dinv[None, :]


# ------------------------------ parameters ------------------------------------
def init_params(key, node_dim, hidden_dim, out_dim):
    """Deterministic kaiming-style init (weights stored as [in, out])."""
    ks = jax.random.split(key, 10)

    def kaiming(k, fi, fo):
        return jax.random.normal(k, (fi, fo), jnp.float32) * jnp.sqrt(2.0 / fi)

    def bias(k, fo):  # small non-zero biases so the bias fold is exercised
        return jax.random.normal(k, (1, fo), jnp.float32) * 0.1

    return {
        "w_mlp":    kaiming(ks[0], node_dim, hidden_dim),
        "b_mlp":    bias(ks[1], hidden_dim),
        "w_gcn1":   kaiming(ks[2], hidden_dim, hidden_dim),
        "b_gcn1":   bias(ks[3], hidden_dim),
        "w_gcn2":   kaiming(ks[4], hidden_dim, hidden_dim),
        "b_gcn2":   bias(ks[5], hidden_dim),
        "w_mean":   kaiming(ks[6], hidden_dim, out_dim),
        "b_mean":   bias(ks[7], out_dim),
        "w_logstd": kaiming(ks[8], hidden_dim, out_dim),
        "b_logstd": bias(ks[9], out_dim),
    }


# ------------------------------- reference ------------------------------------
def vae_reference(x, adj, noise, params):
    """Straightforward (unfused) plain-JAX forward, batched via vmap."""
    def single(xg, ag, ng):
        relu = jax.nn.relu
        h = xg @ params["w_mlp"] + params["b_mlp"]
        h = relu(ag @ (h @ params["w_gcn1"]) + params["b_gcn1"])
        h = relu(ag @ (h @ params["w_gcn2"]) + params["b_gcn2"])
        mean = relu(ag @ (h @ params["w_mean"]) + params["b_mean"])
        logstd = relu(ag @ (h @ params["w_logstd"]) + params["b_logstd"])
        z = ng * jnp.exp(logstd) + mean
        return jnp.triu(jax.nn.sigmoid(z @ z.T), k=1)
    return jax.vmap(single)(x, adj, noise)


# --------------------------------- main ---------------------------------------
if __name__ == "__main__":
    # 32 graphs of 16 nodes, 16 graphs per grid step -> grid=(2,), 256x256 blocks
    B, N, NODE_DIM, HIDDEN_DIM, OUT_DIM = 32, 16, 8, 32, 16
    GRAPHS_PER_BLOCK = 16

    key = jax.random.PRNGKey(0)
    k_x, k_p, k_noise = jax.random.split(key, 3)

    # node features g.x for a batch of graphs
    x = jax.random.normal(k_x, (B, N, NODE_DIM), jnp.float32)

    # bidirectional ring graph edge_index [2, E] (same topology per graph)
    src = jnp.arange(N, dtype=jnp.int32)
    dst = (src + 1) % N
    edge_index = jnp.concatenate(
        [jnp.stack([src, dst]), jnp.stack([dst, src])], axis=1)
    adj_single = gcn_normalized_adjacency(edge_index, N)
    adj = jnp.tile(adj_single[None], (B, 1, 1))

    params = init_params(k_p, NODE_DIM, HIDDEN_DIM, OUT_DIM)
    noise = jax.random.normal(k_noise, (B, N, OUT_DIM), jnp.float32)

    w_slab, b_slab = pack_params(params, NODE_DIM, HIDDEN_DIM, OUT_DIM)

    adj_pred = vae_forward(x, adj, noise, w_slab, b_slab,
                           hidden_dim=HIDDEN_DIM,
                           graphs_per_block=GRAPHS_PER_BLOCK)
    adj_pred = jax.block_until_ready(adj_pred)

    assert adj_pred.shape == (B, N, N)
    assert bool(jnp.all(jnp.isfinite(adj_pred)))
    # strict upper triangular check (diagonal=1)
    tri, trj = jnp.tril_indices(N)
    assert bool(jnp.all(adj_pred[:, tri, trj] == 0.0))
    # numeric check against the unfused plain-JAX reference (loose f32/MXU tol)
    ref = vae_reference(x, adj, noise, params)
    max_err = float(jnp.max(jnp.abs(adj_pred - ref)))
    assert max_err < 5e-2, f"mismatch vs reference: {max_err}"

    print("KERNEL_OK")
</pallas_src>

<mosaic_0001>
module attributes {stable_mosaic.version = 11 : i64} {
  func.func @_vae_kernel(%arg0: i32, %arg1: memref<1x256x8xf32, #tpu.memory_space<vmem>>, %arg2: memref<1x256x256xf32, #tpu.memory_space<vmem>>, %arg3: memref<1x256x128xf32, #tpu.memory_space<vmem>>, %arg4: memref<256x256xf32, #tpu.memory_space<vmem>>, %arg5: memref<128x512xf32, #tpu.memory_space<vmem>>, %arg6: memref<1x640xf32, #tpu.memory_space<vmem>>, %arg7: memref<1x256x256xf32, #tpu.memory_space<vmem>>) attributes {dimension_semantics = [#tpu.dimension_semantics<parallel>], iteration_bounds = array<i64: 2>, scalar_prefetch = 0 : i64, scratch_operands = 0 : i64, tpu.core_type = #tpu.core_type<tc>, window_params = [{transform_indices = @transform_0, window_bounds = array<i64: 1, 256, 8>}, {transform_indices = @transform_1, window_bounds = array<i64: 1, 256, 256>}, {transform_indices = @transform_2, window_bounds = array<i64: 1, 256, 128>}, {pipeline_mode = #tpu.pipeline_mode<synchronous>, transform_indices = @transform_3, window_bounds = array<i64: 256, 256>}, {pipeline_mode = #tpu.pipeline_mode<synchronous>, transform_indices = @transform_4, window_bounds = array<i64: 128, 512>}, {pipeline_mode = #tpu.pipeline_mode<synchronous>, transform_indices = @transform_5, window_bounds = array<i64: 1, 640>}, {transform_indices = @transform_6, window_bounds = array<i64: 1, 256, 256>}]} {
    %c0 = arith.constant 0 : index
    %c0_0 = arith.constant 0 : index
    %c0_1 = arith.constant 0 : index
    %0 = vector.load %arg1[%c0, %c0_0, %c0_1] : memref<1x256x8xf32, #tpu.memory_space<vmem>>, vector<1x256x8xf32>
    %1 = vector.shape_cast %0 : vector<1x256x8xf32> to vector<256x8xf32>
    %c0_2 = arith.constant 0 : index
    %c0_3 = arith.constant 0 : index
    %c0_4 = arith.constant 0 : index
    %2 = vector.load %arg2[%c0_2, %c0_3, %c0_4] : memref<1x256x256xf32, #tpu.memory_space<vmem>>, vector<1x256x256xf32>
    %3 = vector.shape_cast %2 : vector<1x256x256xf32> to vector<256x256xf32>
    %c0_5 = arith.constant 0 : index
    %c0_6 = arith.constant 0 : index
    %4 = vector.load %arg5[%c0_5, %c0_6] : memref<128x512xf32, #tpu.memory_space<vmem>>, vector<8x128xf32>
    %c0_7 = arith.constant 0 : index
    %c128 = arith.constant 128 : index
    %5 = vector.load %arg5[%c0_7, %c128] : memref<128x512xf32, #tpu.memory_space<vmem>>, vector<128x128xf32>
    %c0_8 = arith.constant 0 : index
    %c256 = arith.constant 256 : index
    %6 = vector.load %arg5[%c0_8, %c256] : memref<128x512xf32, #tpu.memory_space<vmem>>, vector<128x256xf32>
    %c0_9 = arith.constant 0 : index
    %c0_10 = arith.constant 0 : index
    %7 = vector.load %arg6[%c0_9, %c0_10] : memref<1x640xf32, #tpu.memory_space<vmem>>, vector<1x128xf32>
    %c0_11 = arith.constant 0 : index
    %c128_12 = arith.constant 128 : index
    %8 = vector.load %arg6[%c0_11, %c128_12] : memref<1x640xf32, #tpu.memory_space<vmem>>, vector<1x128xf32>
    %c0_13 = arith.constant 0 : index
    %c256_14 = arith.constant 256 : index
    %9 = vector.load %arg6[%c0_13, %c256_14] : memref<1x640xf32, #tpu.memory_space<vmem>>, vector<1x128xf32>
    %c0_15 = arith.constant 0 : index
    %c384 = arith.constant 384 : index
    %10 = vector.load %arg6[%c0_15, %c384] : memref<1x640xf32, #tpu.memory_space<vmem>>, vector<1x256xf32>
    %cst = arith.constant dense<0.000000e+00> : vector<256xf32>
    %11 = vector.multi_reduction <add>, %3, %cst [1] : vector<256x256xf32> to vector<256xf32>
    %12 = vector.shape_cast %11 : vector<256xf32> to vector<256x1xf32>
    %cst_16 = arith.constant dense<0.000000e+00> : vector<256x128xf32>
    %13 = tpu.matmul %1, %4, %cst_16 {dimension_numbers = #tpu.dot_dimension_numbers<[1], [0], [0], [1], [0, 0, 1, 1], [], []>} : vector<256x8xf32>, vector<8x128xf32>, vector<256x128xf32> -> vector<256x128xf32>
    %cst_17 = arith.constant dense<0.000000e+00> : vector<256x128xf32>
    %14 = tpu.matmul %3, %13, %cst_17 {dimension_numbers = #tpu.dot_dimension_numbers<[1], [0], [0], [1], [0, 0, 1, 1], [], []>} : vector<256x256xf32>, vector<256x128xf32>, vector<256x128xf32> -> vector<256x128xf32>
    %15 = vector.broadcast %12 : vector<256x1xf32> to vector<256x128xf32>
    %16 = vector.broadcast %7 : vector<1x128xf32> to vector<256x128xf32>
    %17 = arith.mulf %15, %16 : vector<256x128xf32>
    %18 = arith.addf %14, %17 : vector<256x128xf32>
    %19 = vector.broadcast %8 : vector<1x128xf32> to vector<256x128xf32>
    %20 = arith.addf %18, %19 : vector<256x128xf32>
    %cst_18 = arith.constant 0.000000e+00 : f32
    %21 = vector.broadcast %cst_18 : f32 to vector<256x128xf32>
    %22 = arith.maximumf %20, %21 : vector<256x128xf32>
    %cst_19 = arith.constant dense<0.000000e+00> : vector<256x128xf32>
    %23 = tpu.matmul %22, %5, %cst_19 {dimension_numbers = #tpu.dot_dimension_numbers<[1], [0], [0], [1], [0, 0, 1, 1], [], []>} : vector<256x128xf32>, vector<128x128xf32>, vector<256x128xf32> -> vector<256x128xf32>
    %cst_20 = arith.constant dense<0.000000e+00> : vector<256x128xf32>
    %24 = tpu.matmul %3, %23, %cst_20 {dimension_numbers = #tpu.dot_dimension_numbers<[1], [0], [0], [1], [0, 0, 1, 1], [], []>} : vector<256x256xf32>, vector<256x128xf32>, vector<256x128xf32> -> vector<256x128xf32>
    %25 = vector.broadcast %9 : vector<1x128xf32> to vector<256x128xf32>
    %26 = arith.addf %24, %25 : vector<256x128xf32>
    %cst_21 = arith.constant 0.000000e+00 : f32
    %27 = vector.broadcast %cst_21 : f32 to vector<256x128xf32>
    %28 = arith.maximumf %26, %27 : vector<256x128xf32>
    %cst_22 = arith.constant dense<0.000000e+00> : vector<256x256xf32>
    %29 = tpu.matmul %28, %6, %cst_22 {dimension_numbers = #tpu.dot_dimension_numbers<[1], [0], [0], [1], [0, 0, 1, 1], [], []>} : vector<256x128xf32>, vector<128x256xf32>, vector<256x256xf32> -> vector<256x256xf32>
    %cst_23 = arith.constant dense<0.000000e+00> : vector<256x256xf32>
    %30 = tpu.matmul %3, %29, %cst_23 {dimension_numbers = #tpu.dot_dimension_numbers<[1], [0], [0], [1], [0, 0, 1, 1], [], []>} : vector<256x256xf32>, vector<256x256xf32>, vector<256x256xf32> -> vector<256x256xf32>
    %31 = vector.broadcast %10 : vector<1x256xf32> to vector<256x256xf32>
    %32 = arith.addf %30, %31 : vector<256x256xf32>
    %33 = vector.extract_strided_slice %32 {offsets = [0, 0], sizes = [256, 128], strides = [1, 1]} : vector<256x256xf32> to vector<256x128xf32>
    %cst_24 = arith.constant 0.000000e+00 : f32
    %34 = vector.broadcast %cst_24 : f32 to vector<256x128xf32>
    %35 = arith.maximumf %33, %34 : vector<256x128xf32>
    %36 = vector.extract_strided_slice %32 {offsets = [0, 128], sizes = [256, 128], strides = [1, 1]} : vector<256x256xf32> to vector<256x128xf32>
    %cst_25 = arith.constant 0.000000e+00 : f32
    %37 = vector.broadcast %cst_25 : f32 to vector<256x128xf32>
    %38 = arith.maximumf %36, %37 : vector<256x128xf32>
    %c0_26 = arith.constant 0 : index
    %c0_27 = arith.constant 0 : index
    %c0_28 = arith.constant 0 : index
    %39 = vector.load %arg3[%c0_26, %c0_27, %c0_28] : memref<1x256x128xf32, #tpu.memory_space<vmem>>, vector<1x256x128xf32>
    %40 = vector.shape_cast %39 : vector<1x256x128xf32> to vector<256x128xf32>
    %41 = math.exp %38 : vector<256x128xf32>
    %42 = arith.mulf %40, %41 : vector<256x128xf32>
    %43 = arith.addf %42, %35 : vector<256x128xf32>
    %cst_29 = arith.constant dense<0.000000e+00> : vector<256x256xf32>
    %44 = tpu.matmul %43, %43, %cst_29 {dimension_numbers = #tpu.dot_dimension_numbers<[1], [1], [0], [0], [0, 0, 1, 0], [], []>} : vector<256x128xf32>, vector<256x128xf32>, vector<256x256xf32> -> vector<256x256xf32>
    %45 = arith.negf %44 : vector<256x256xf32>
    %46 = math.exp %45 : vector<256x256xf32>
    %cst_30 = arith.constant 1.000000e+00 : f32
    %47 = vector.broadcast %cst_30 : f32 to vector<256x256xf32>
    %48 = arith.addf %47, %46 : vector<256x256xf32>
    %49 = arith.divf %47, %48 : vector<256x256xf32>
    %c0_31 = arith.constant 0 : index
    %c0_32 = arith.constant 0 : index
    %50 = vector.load %arg4[%c0_31, %c0_32] : memref<256x256xf32, #tpu.memory_space<vmem>>, vector<256x256xf32>
    %51 = arith.mulf %49, %50 : vector<256x256xf32>
    %c0_33 = arith.constant 0 : index
    %c0_34 = arith.constant 0 : index
    %c0_35 = arith.constant 0 : index
    %52 = vector.load %arg7[%c0_33, %c0_34, %c0_35] : memref<1x256x256xf32, #tpu.memory_space<vmem>>, vector<1x256x256xf32>
    %53 = vector.shape_cast %52 : vector<1x256x256xf32> to vector<256x256xf32>
    %54 = vector.shape_cast %51 : vector<256x256xf32> to vector<1x256x256xf32>
    tpu.vector_store %arg7[%c0_33, %c0_34, %c0_35], %54 {strides = array<i32>} : memref<1x256x256xf32, #tpu.memory_space<vmem>>, vector<1x256x256xf32>,
    return
  }
  func.func @transform_0(%arg0: i32) -> (i32, i32, i32) {
    %c0_i32 = arith.constant 0 : i32
    %c0_i32_0 = arith.constant 0 : i32
    %c0_i32_1 = arith.constant 0 : i32
    return %arg0, %c0_i32, %c0_i32_0 : i32, i32, i32
  }
  func.func @transform_1(%arg0: i32) -> (i32, i32, i32) {
    %c0_i32 = arith.constant 0 : i32
    %c0_i32_0 = arith.constant 0 : i32
    %c0_i32_1 = arith.constant 0 : i32
    return %arg0, %c0_i32, %c0_i32_0 : i32, i32, i32
  }
  func.func @transform_2(%arg0: i32) -> (i32, i32, i32) {
    %c0_i32 = arith.constant 0 : i32
    %c0_i32_0 = arith.constant 0 : i32
    %c0_i32_1 = arith.constant 0 : i32
    return %arg0, %c0_i32, %c0_i32_0 : i32, i32, i32
  }
  func.func @transform_3(%arg0: i32) -> (i32, i32) {
    %c0_i32 = arith.constant 0 : i32
    %c0_i32_0 = arith.constant 0 : i32
    %c0_i32_1 = arith.constant 0 : i32
    return %c0_i32, %c0_i32_0 : i32, i32
  }
  func.func @transform_4(%arg0: i32) -> (i32, i32) {
    %c0_i32 = arith.constant 0 : i32
    %c0_i32_0 = arith.constant 0 : i32
    %c0_i32_1 = arith.constant 0 : i32
    return %c0_i32, %c0_i32_0 : i32, i32
  }
  func.func @transform_5(%arg0: i32) -> (i32, i32) {
    %c0_i32 = arith.constant 0 : i32
    %c0_i32_0 = arith.constant 0 : i32
    %c0_i32_1 = arith.constant 0 : i32
    return %c0_i32, %c0_i32_0 : i32, i32
  }
  func.func @transform_6(%arg0: i32) -> (i32, i32, i32) {
    %c0_i32 = arith.constant 0 : i32
    %c0_i32_0 = arith.constant 0 : i32
    %c0_i32_1 = arith.constant 0 : i32
    return %arg0, %c0_i32, %c0_i32_0 : i32, i32, i32
  }
}

</mosaic_0001>

<llo_original>
// kernel: vae_forward.1
$region0: #{vae_forward.1}
  #allocation0 [shape = 'u32[]', space=smem, size = 0x4, offset = 0x4, fixed_abs, tag = 'smem constant byte address 0x4 - core index']
  #allocation1 [shape = 'u32[144,128]{1,0:T(1,128)}', space=vmem, size = 0x12000, scoped, tag = 'internal scratch']
  %s0 = inlined_call_operand.vmem [shape: f32[2,256,8], index: 0, kind: input, shape index: {}]
  %s1 = inlined_call_operand.vmem [shape: f32[2,256,256], index: 1, kind: input, shape index: {}]
  %s2 = inlined_call_operand.vmem [shape: f32[2,256,128], index: 2, kind: input, shape index: {}]
  %s3 = inlined_call_operand.vmem [shape: f32[256,256], index: 3, kind: input, shape index: {}]
  %s4 = inlined_call_operand.vmem [shape: f32[128,512], index: 4, kind: input, shape index: {}]
  %s5 = inlined_call_operand.vmem [shape: f32[1,640], index: 5, kind: input, shape index: {}]
  %s6 = inlined_call_operand.vmem [shape: f32[2,256,256], index: 6, kind: output, shape index: {}]
  %s7 = sld [smem:[#allocation0]]
  $region57: #{vae_forward.1} parent=0
    _
  %s9 = ssub.s32 1, %s7
  %s10 = scalar_select 0, %s9, %s7
  loop: start=0, step=1, limit=4
  $region2: #{vae_forward.1} parent=0 // loop_pre_header
    _
  $region3: #{vae_forward.1} parent=0 // loop_header
    %s12 = sphi 0, %s16
    %p13 = scmp.ge.s32.totalorder %s12, 4
    %s22 = sphi 0, %s24
    %s25 = sphi 0, %s22
    %s26 = sphi 0, %s25
    %s42 = sphi 0, %s26
    %s48 = sphi 0, %s50
    %s51 = sphi 0, %s48
    %s52 = sphi 0, %s51
    %s68 = sphi 0, %s52
    %s74 = sphi 0, %s76
    %s77 = sphi 0, %s74
    %s78 = sphi 0, %s77
    %s94 = sphi 0, %s78
    %s98 = sphi 0, %s98
    %s100 = sphi 0, %s98
    %s101 = sphi 0, %s100
    %s115 = sphi 0, %s101
    %s119 = sphi 0, %s119
    %s121 = sphi 0, %s119
    %s122 = sphi 0, %s121
    %s136 = sphi 0, %s122
    %s140 = sphi 0, %s140
    %s142 = sphi 0, %s140
    %s143 = sphi 0, %s142
    %s157 = sphi 0, %s143
    %s163 = sphi 0, %s165
    %s166 = sphi 0, %s163
    %s167 = sphi 0, %s166
    %s183 = sphi 0, %s167
  $region4: #{vae_forward.1} parent=0 // loop_header_branch
    %15 = sbr.rel (%p13) target = $region8
  $region5: #{vae_forward.1} parent=0 // loop_body
    %s17 = ssub.s32 %s12, 1
    %s18 = ssub.s32 %s12, 2
    %s19 = sadd.s32 %s12, 1
    %s20 = ssub.s32 %s12, %s19
    %p21 = scmp.eq.s32.totalorder %s20, 0
    %s23 = sadd.s32 %s22, 1
    %s24 = scalar_select %p21, %s22, %s23
    %p27 = pneg %p21
    %p28 = scmp.eq.s32.totalorder %s12, 1
    %p29 = por %p27, %p28
    %p30 = scmp.ne.s32.totalorder %s22, %s25
    %p31 = scmp.eq.s32.totalorder %s12, 0
    %p32 = por %p30, %p31
    %p33 = scmp.ne.s32.totalorder %s22, %s25
    %p34 = scmp.eq.s32.totalorder %s17, 1
    %p35 = por %p33, %p34
    %p36 = scmp.ne.s32.totalorder %s25, %s26
    %p37 = scmp.eq.s32.totalorder %s17, 0
    %p38 = por %p36, %p37
    %p39 = scmp.ne.s32.totalorder %s25, %s26
    %p40 = scmp.eq.s32.totalorder %s18, 1
    %p41 = por %p39, %p40
    %p43 = scmp.ne.s32.totalorder %s26, %s42
    %p44 = scmp.eq.s32.totalorder %s18, 0
    %p45 = por %p43, %p44
    %s46 = ssub.s32 %s12, %s19
    %p47 = scmp.eq.s32.totalorder %s46, 0
    %s49 = sadd.s32 %s48, 1
    %s50 = scalar_select %p47, %s48, %s49
    %p53 = pneg %p47
    %p54 = scmp.eq.s32.totalorder %s12, 1
    %p55 = por %p53, %p54
    %p56 = scmp.ne.s32.totalorder %s48, %s51
    %p57 = scmp.eq.s32.totalorder %s12, 0
    %p58 = por %p56, %p57
    %p59 = scmp.ne.s32.totalorder %s48, %s51
    %p60 = scmp.eq.s32.totalorder %s17, 1
    %p61 = por %p59, %p60
    %p62 = scmp.ne.s32.totalorder %s51, %s52
    %p63 = scmp.eq.s32.totalorder %s17, 0
    %p64 = por %p62, %p63
    %p65 = scmp.ne.s32.totalorder %s51, %s52
    %p66 = scmp.eq.s32.totalorder %s18, 1
    %p67 = por %p65, %p66
    %p69 = scmp.ne.s32.totalorder %s52, %s68
    %p70 = scmp.eq.s32.totalorder %s18, 0
    %p71 = por %p69, %p70
    %s72 = ssub.s32 %s12, %s19
    %p73 = scmp.eq.s32.totalorder %s72, 0
    %s75 = sadd.s32 %s74, 1
    %s76 = scalar_select %p73, %s74, %s75
    %p79 = pneg %p73
    %p80 = scmp.eq.s32.totalorder %s12, 1
    %p81 = por %p79, %p80
    %p82 = scmp.ne.s32.totalorder %s74, %s77
    %p83 = scmp.eq.s32.totalorder %s12, 0
    %p84 = por %p82, %p83
    %p85 = scmp.ne.s32.totalorder %s74, %s77
    %p86 = scmp.eq.s32.totalorder %s17, 1
    %p87 = por %p85, %p86
    %p88 = scmp.ne.s32.totalorder %s77, %s78
    %p89 = scmp.eq.s32.totalorder %s17, 0
    %p90 = por %p88, %p89
    %p91 = scmp.ne.s32.totalorder %s77, %s78
    %p92 = scmp.eq.s32.totalorder %s18, 1
    %p93 = por %p91, %p92
    %p95 = scmp.ne.s32.totalorder %s78, %s94
    %p96 = scmp.eq.s32.totalorder %s18, 0
    %p97 = por %p95, %p96
    %s99 = sadd.s32 %s98, 1
    %p102 = scmp.eq.s32.totalorder %s12, 1
    %p103 = scmp.ne.s32.totalorder %s98, %s100
    %p104 = scmp.eq.s32.totalorder %s12, 0
    %p105 = por %p103, %p104
    %p106 = scmp.ne.s32.totalorder %s98, %s100
    %p107 = scmp.eq.s32.totalorder %s17, 1
    %p108 = por %p106, %p107
    %p109 = scmp.ne.s32.totalorder %s100, %s101
    %p110 = scmp.eq.s32.totalorder %s17, 0
    %p111 = por %p109, %p110
    %p112 = scmp.ne.s32.totalorder %s100, %s101
    %p113 = scmp.eq.s32.totalorder %s18, 1
    %p114 = por %p112, %p113
    %p116 = scmp.ne.s32.totalorder %s101, %s115
    %p117 = scmp.eq.s32.totalorder %s18, 0
    %p118 = por %p116, %p117
    %s120 = sadd.s32 %s119, 1
    %p123 = scmp.eq.s32.totalorder %s12, 1
    %p124 = scmp.ne.s32.totalorder %s119, %s121
    %p125 = scmp.eq.s32.totalorder %s12, 0
    %p126 = por %p124, %p125
    %p127 = scmp.ne.s32.totalorder %s119, %s121
    %p128 = scmp.eq.s32.totalorder %s17, 1
    %p129 = por %p127, %p128
    %p130 = scmp.ne.s32.totalorder %s121, %s122
    %p131 = scmp.eq.s32.totalorder %s17, 0
    %p132 = por %p130, %p131
    %p133 = scmp.ne.s32.totalorder %s121, %s122
    %p134 = scmp.eq.s32.totalorder %s18, 1
    %p135 = por %p133, %p134
    %p137 = scmp.ne.s32.totalorder %s122, %s136
    %p138 = scmp.eq.s32.totalorder %s18, 0
    %p139 = por %p137, %p138
    %s141 = sadd.s32 %s140, 1
    %p144 = scmp.eq.s32.totalorder %s12, 1
    %p145 = scmp.ne.s32.totalorder %s140, %s142
    %p146 = scmp.eq.s32.totalorder %s12, 0
    %p147 = por %p145, %p146
    %p148 = scmp.ne.s32.totalorder %s140, %s142
    %p149 = scmp.eq.s32.totalorder %s17, 1
    %p150 = por %p148, %p149
    %p151 = scmp.ne.s32.totalorder %s142, %s143
    %p152 = scmp.eq.s32.totalorder %s17, 0
    %p153 = por %p151, %p152
    %p154 = scmp.ne.s32.totalorder %s142, %s143
    %p155 = scmp.eq.s32.totalorder %s18, 1
    %p156 = por %p154, %p155
    %p158 = scmp.ne.s32.totalorder %s143, %s157
    %p159 = scmp.eq.s32.totalorder %s18, 0
    %p160 = por %p158, %p159
    %s161 = ssub.s32 %s12, %s19
    %p162 = scmp.eq.s32.totalorder %s161, 0
    %s164 = sadd.s32 %s163, 1
    %s165 = scalar_select %p162, %s163, %s164
    %p168 = pneg %p162
    %p169 = scmp.eq.s32.totalorder %s12, 1
    %p170 = por %p168, %p169
    %p171 = scmp.ne.s32.totalorder %s163, %s166
    %p172 = scmp.eq.s32.totalorder %s12, 0
    %p173 = por %p171, %p172
    %p174 = scmp.ne.s32.totalorder %s163, %s166
    %p175 = scmp.eq.s32.totalorder %s17, 1
    %p176 = por %p174, %p175
    %p177 = scmp.ne.s32.totalorder %s166, %s167
    %p178 = scmp.eq.s32.totalorder %s17, 0
    %p179 = por %p177, %p178
    %p180 = scmp.ne.s32.totalorder %s166, %s167
    %p181 = scmp.eq.s32.totalorder %s18, 1
    %p182 = por %p180, %p181
    %p184 = scmp.ne.s32.totalorder %s167, %s183
    %p185 = scmp.eq.s32.totalorder %s18, 0
    %p186 = por %p184, %p185
    %p187 = scmp.le.s32.totalorder 1, %s12
    %p188 = scmp.lt.s32.totalorder %s12, 3
    %p189 = pnand %p187, %p188
    %p190 = pneg %p189
    // Predicated region
    $region9: #{vae_forward.1} parent=5 // pred_check
      _
    $region10: #{vae_forward.1} parent=5 // pred_check_branch
      %192 = sbr.rel (%p189) target = $region12
    $region11: #{vae_forward.1} parent=5 // pred_region
      %s193 = ssub.s32 %s12, 1
      // Predicated region
      $region13: #{vae_forward.1} parent=11 // pred_check
        %p194 = pneg %p111
      $region14: #{vae_forward.1} parent=11 // pred_check_branch
        %196 = sbr.rel (%p194) target = $region16
      $region15: #{vae_forward.1} parent=11 // pred_region
        _
      $region16: #{vae_forward.1} parent=11 // pred_fallthru
        _
      // Predicated region
      $region17: #{vae_forward.1} parent=11 // pred_check
        %p197 = pneg %p132
      $region18: #{vae_forward.1} parent=11 // pred_check_branch
        %199 = sbr.rel (%p197) target = $region20
      $region19: #{vae_forward.1} parent=11 // pred_region
        _
      $region20: #{vae_forward.1} parent=11 // pred_fallthru
        _
      // Predicated region
      $region21: #{vae_forward.1} parent=11 // pred_check
        %p200 = pneg %p153
      $region22: #{vae_forward.1} parent=11 // pred_check_branch
        %202 = sbr.rel (%p200) target = $region24
      $region23: #{vae_forward.1} parent=11 // pred_region
        _
      $region24: #{vae_forward.1} parent=11 // pred_fallthru
        _
    $region12: #{vae_forward.1} parent=5 // pred_fallthru
      _
    %p203 = scmp.lt.s32.totalorder %s12, 2
    // Predicated region
    $region25: #{vae_forward.1} parent=5 // pred_check
      %p204 = pneg %p203
    $region26: #{vae_forward.1} parent=5 // pred_check_branch
      %206 = sbr.rel (%p204) target = $region28
    $region27: #{vae_forward.1} parent=5 // pred_region
      // Predicated region
      $region29: #{vae_forward.1} parent=27 // pred_check
        %p207 = pneg %p32
      $region30: #{vae_forward.1} parent=27 // pred_check_branch
        %209 = sbr.rel (%p207) target = $region32
      $region31: #{vae_forward.1} parent=27 // pred_region
        %p210 = scmp.lt.s32.totalorder %s12, 1
        %s211 = scalar_select %p210, %s12, 1
        %s212 = smul.addr %s211, 32
        %s213 = smul.addr %s212, 8
        %s214 = scalar_lea.vmem %s0, %s213
      $region32: #{vae_forward.1} parent=27 // pred_fallthru
        _
      // Predicated region
      $region33: #{vae_forward.1} parent=27 // pred_check
        %p215 = pneg %p58
      $region34: #{vae_forward.1} parent=27 // pred_check_branch
        %217 = sbr.rel (%p215) target = $region36
      $region35: #{vae_forward.1} parent=27 // pred_region
        %p218 = scmp.lt.s32.totalorder %s12, 1
        %s219 = scalar_select %p218, %s12, 1
        %s220 = smul.addr %s219, 64
        %s221 = smul.addr %s220, 8
        %s222 = scalar_lea.vmem %s1, %s221
      $region36: #{vae_forward.1} parent=27 // pred_fallthru
        _
      // Predicated region
      $region37: #{vae_forward.1} parent=27 // pred_check
        %p223 = pneg %p84
      $region38: #{vae_forward.1} parent=27 // pred_check_branch
        %225 = sbr.rel (%p223) target = $region40
      $region39: #{vae_forward.1} parent=27 // pred_region
        %p226 = scmp.lt.s32.totalorder %s12, 1
        %s227 = scalar_select %p226, %s12, 1
        %s228 = smul.addr %s227, 32
        %s229 = smul.addr %s228, 8
        %s230 = scalar_lea.vmem %s2, %s229
      $region40: #{vae_forward.1} parent=27 // pred_fallthru
        _
    $region28: #{vae_forward.1} parent=5 // pred_fallthru
      _
    %p231 = scmp.le.s32.totalorder 1, %s12
    %p232 = scmp.lt.s32.totalorder %s12, 3
    %p233 = pnand %p231, %p232
    %p234 = pneg %p233
    // Predicated region
    $region41: #{vae_forward.1} parent=5 // pred_check
      _
    $region42: #{vae_forward.1} parent=5 // pred_check_branch
      %236 = sbr.rel (%p233) target = $region44
    $region43: #{vae_forward.1} parent=5 // pred_region
      %s237 = ssub.s32 %s12, 1
      %p238 = scmp.lt.s32.totalorder %s17, 1
      %s239 = scalar_select %p238, %s17, 1
      %s240 = smul.addr %s239, 32
      %s241 = smul.addr %s240, 8
      %s242 = scalar_lea.vmem %s0, %s241
      %p243 = pneg %p38
      %p244 = pneg %p35
      %p245 = scmp.lt.s32.totalorder %s17, 1
      %s246 = scalar_select %p245, %s17, 1
      %s247 = smul.addr %s246, 64
      %s248 = smul.addr %s247, 8
      %s249 = scalar_lea.vmem %s1, %s248
      %p250 = pneg %p64
      %p251 = pneg %p61
      %p252 = scmp.lt.s32.totalorder %s17, 1
      %s253 = scalar_select %p252, %s17, 1
      %s254 = smul.addr %s253, 32
      %s255 = smul.addr %s254, 8
      %s256 = scalar_lea.vmem %s2, %s255
      %p257 = pneg %p90
      %p258 = pneg %p87
      %p259 = pneg %p111
      %p260 = pneg %p108
      %p261 = pneg %p132
      %p262 = pneg %p129
      %p263 = pneg %p153
      %p264 = pneg %p150
      %p265 = pneg %p179
      %p266 = pneg %p176
      %p267 = scmp.lt.s32.totalorder %s17, 1
      %s268 = scalar_select %p267, %s17, 1
      %s269 = smul.addr %s268, 64
      %s270 = smul.addr %s269, 8
      %s271 = scalar_lea.vmem %s6, %s270
      %p272 = scmp.lt.s32.totalorder %s17, 1
      %s273 = scalar_select %p272, %s17, 1
      %s274 = smul.addr %s273, 32
      %s275 = smul.addr %s274, 8
      %s276 = scalar_lea.vmem %s0, %s275
      %p277 = scmp.lt.s32.totalorder %s17, 1
      %s278 = scalar_select %p277, %s17, 1
      %s279 = smul.addr %s278, 64
      %s280 = smul.addr %s279, 8
      %s281 = scalar_lea.vmem %s1, %s280
      %p282 = scmp.lt.s32.totalorder %s17, 1
      %s283 = scalar_select %p282, %s17, 1
      %s284 = smul.addr %s283, 32
      %s285 = smul.addr %s284, 8
      %s286 = scalar_lea.vmem %s2, %s285
      %p287 = scmp.lt.s32.totalorder %s17, 1
      %s288 = scalar_select %p287, %s17, 1
      %s289 = smul.addr %s288, 64
      %s290 = smul.addr %s289, 8
      %s291 = scalar_lea.vmem %s6, %s290
      %v292 = vld [vmem:[%s276] sm:$0xff]
      %v293 = vld [vmem:[%s276 + $0x8] sm:$0xff]
      %v294 = vld [vmem:[%s276 + $0x10] sm:$0xff]
      %v295 = vld [vmem:[%s276 + $0x18] sm:$0xff]
      %v296 = vld [vmem:[%s276 + $0x20] sm:$0xff]
      %v297 = vld [vmem:[%s276 + $0x28] sm:$0xff]
      %v298 = vld [vmem:[%s276 + $0x30] sm:$0xff]
      %v299 = vld [vmem:[%s276 + $0x38] sm:$0xff]
      %v300 = vld [vmem:[%s276 + $0x40] sm:$0xff]
      %v301 = vld [vmem:[%s276 + $0x48] sm:$0xff]
      %v302 = vld [vmem:[%s276 + $0x50] sm:$0xff]
      %v303 = vld [vmem:[%s276 + $0x58] sm:$0xff]
      %v304 = vld [vmem:[%s276 + $0x60] sm:$0xff]
      %v305 = vld [vmem:[%s276 + $0x68] sm:$0xff]
      %v306 = vld [vmem:[%s276 + $0x70] sm:$0xff]
      %v307 = vld [vmem:[%s276 + $0x78] sm:$0xff]
      %v308 = vld [vmem:[%s276 + $0x80] sm:$0xff]
      %v309 = vld [vmem:[%s276 + $0x88] sm:$0xff]
      %v310 = vld [vmem:[%s276 + $0x90] sm:$0xff]
      %v311 = vld [vmem:[%s276 + $0x98] sm:$0xff]
      %v312 = vld [vmem:[%s276 + $0xa0] sm:$0xff]
      %v313 = vld [vmem:[%s276 + $0xa8] sm:$0xff]
      %v314 = vld [vmem:[%s276 + $0xb0] sm:$0xff]
      %v315 = vld [vmem:[%s276 + $0xb8] sm:$0xff]
      %v316 = vld [vmem:[%s276 + $0xc0] sm:$0xff]
      %v317 = vld [vmem:[%s276 + $0xc8] sm:$0xff]
      %v318 = vld [vmem:[%s276 + $0xd0] sm:$0xff]
      %v319 = vld [vmem:[%s276 + $0xd8] sm:$0xff]
      %v320 = vld [vmem:[%s276 + $0xe0] sm:$0xff]
      %v321 = vld [vmem:[%s276 + $0xe8] sm:$0xff]
      %v322 = vld [vmem:[%s276 + $0xf0] sm:$0xff]
      %v323 = vld [vmem:[%s276 + $0xf8] sm:$0xff]
      %v324 = vld [vmem:[%s281] sm:$0xff]
      %v325 = vld [vmem:[%s281 + $0x8] sm:$0xff]
      %v326 = vld [vmem:[%s281 + $0x10] sm:$0xff]
      %v327 = vld [vmem:[%s281 + $0x18] sm:$0xff]
      %v328 = vld [vmem:[%s281 + $0x20] sm:$0xff]
      %v329 = vld [vmem:[%s281 + $0x28] sm:$0xff]
      %v330 = vld [vmem:[%s281 + $0x30] sm:$0xff]
      %v331 = vld [vmem:[%s281 + $0x38] sm:$0xff]
      %v332 = vld [vmem:[%s281 + $0x40] sm:$0xff]
      %v333 = vld [vmem:[%s281 + $0x48] sm:$0xff]
      %v334 = vld [vmem:[%s281 + $0x50] sm:$0xff]
      %v335 = vld [vmem:[%s281 + $0x58] sm:$0xff]
      %v336 = vld [vmem:[%s281 + $0x60] sm:$0xff]
      %v337 = vld [vmem:[%s281 + $0x68] sm:$0xff]
      %v338 = vld [vmem:[%s281 + $0x70] sm:$0xff]
      %v339 = vld [vmem:[%s281 + $0x78] sm:$0xff]
      %v340 = vld [vmem:[%s281 + $0x80] sm:$0xff]
      %v341 = vld [vmem:[%s281 + $0x88] sm:$0xff]
      %v342 = vld [vmem:[%s281 + $0x90] sm:$0xff]
      %v343 = vld [vmem:[%s281 + $0x98] sm:$0xff]
      %v344 = vld [vmem:[%s281 + $0xa0] sm:$0xff]
      %v345 = vld [vmem:[%s281 + $0xa8] sm:$0xff]
      %v346 = vld [vmem:[%s281 + $0xb0] sm:$0xff]
      %v347 = vld [vmem:[%s281 + $0xb8] sm:$0xff]
      %v348 = vld [vmem:[%s281 + $0xc0] sm:$0xff]
      %v349 = vld [vmem:[%s281 + $0xc8] sm:$0xff]
      %v350 = vld [vmem:[%s281 + $0xd0] sm:$0xff]
      %v351 = vld [vmem:[%s281 + $0xd8] sm:$0xff]
      %v352 = vld [vmem:[%s281 + $0xe0] sm:$0xff]
      %v353 = vld [vmem:[%s281 + $0xe8] sm:$0xff]
      %v354 = vld [vmem:[%s281 + $0xf0] sm:$0xff]
      %v355 = vld [vmem:[%s281 + $0xf8] sm:$0xff]
      %v356 = vld [vmem:[%s281 + $0x100] sm:$0xff]
      %v357 = vld [vmem:[%s281 + $0x108] sm:$0xff]
      %v358 = vld [vmem:[%s281 + $0x110] sm:$0xff]
      %v359 = vld [vmem:[%s281 + $0x118] sm:$0xff]
      %v360 = vld [vmem:[%s281 + $0x120] sm:$0xff]
      %v361 = vld [vmem:[%s281 + $0x128] sm:$0xff]
      %v362 = vld [vmem:[%s281 + $0x130] sm:$0xff]
      %v363 = vld [vmem:[%s281 + $0x138] sm:$0xff]
      %v364 = vld [vmem:[%s281 + $0x140] sm:$0xff]
      %v365 = vld [vmem:[%s281 + $0x148] sm:$0xff]
      %v366 = vld [vmem:[%s281 + $0x150] sm:$0xff]
      %v367 = vld [vmem:[%s281 + $0x158] sm:$0xff]
      %v368 = vld [vmem:[%s281 + $0x160] sm:$0xff]
      %v369 = vld [vmem:[%s281 + $0x168] sm:$0xff]
      %v370 = vld [vmem:[%s281 + $0x170] sm:$0xff]
      %v371 = vld [vmem:[%s281 + $0x178] sm:$0xff]
      %v372 = vld [vmem:[%s281 + $0x180] sm:$0xff]
      %v373 = vld [vmem:[%s281 + $0x188] sm:$0xff]
      %v374 = vld [vmem:[%s281 + $0x190] sm:$0xff]
      %v375 = vld [vmem:[%s281 + $0x198] sm:$0xff]
      %v376 = vld [vmem:[%s281 + $0x1a0] sm:$0xff]
      %v377 = vld [vmem:[%s281 + $0x1a8] sm:$0xff]
      %v378 = vld [vmem:[%s281 + $0x1b0] sm:$0xff]
      %v379 = vld [vmem:[%s281 + $0x1b8] sm:$0xff]
      %v380 = vld [vmem:[%s281 + $0x1c0] sm:$0xff]
      %v381 = vld [vmem:[%s281 + $0x1c8] sm:$0xff]
      %v382 = vld [vmem:[%s281 + $0x1d0] sm:$0xff]
      %v383 = vld [vmem:[%s281 + $0x1d8] sm:$0xff]
      %v384 = vld [vmem:[%s281 + $0x1e0] sm:$0xff]
      %v385 = vld [vmem:[%s281 + $0x1e8] sm:$0xff]
      %v386 = vld [vmem:[%s281 + $0x1f0] sm:$0xff]
      %v387 = vld [vmem:[%s281 + $0x1f8] sm:$0xff]
      %v388 = vld [vmem:[%s4] sm:$0xff]
      %v389 = vld [vmem:[%s4 + $0x8] sm:$0xff]
      %v390 = vld [vmem:[%s4 + $0x28] sm:$0xff]
      %v391 = vld [vmem:[%s4 + $0x48] sm:$0xff]
      %v392 = vld [vmem:[%s4 + $0x68] sm:$0xff]
      %v393 = vld [vmem:[%s4 + $0x88] sm:$0xff]
      %v394 = vld [vmem:[%s4 + $0xa8] sm:$0xff]
      %v395 = vld [vmem:[%s4 + $0xc8] sm:$0xff]
      %v396 = vld [vmem:[%s4 + $0xe8] sm:$0xff]
      %v397 = vld [vmem:[%s4 + $0x108] sm:$0xff]
      %v398 = vld [vmem:[%s4 + $0x128] sm:$0xff]
      %v399 = vld [vmem:[%s4 + $0x148] sm:$0xff]
      %v400 = vld [vmem:[%s4 + $0x168] sm:$0xff]
      %v401 = vld [vmem:[%s4 + $0x188] sm:$0xff]
      %v402 = vld [vmem:[%s4 + $0x1a8] sm:$0xff]
      %v403 = vld [vmem:[%s4 + $0x1c8] sm:$0xff]
      %v404 = vld [vmem:[%s4 + $0x1e8] sm:$0xff]
      %v405 = vld [vmem:[%s4 + $0x10] sm:$0xff]
      %v406 = vld [vmem:[%s4 + $0x18] sm:$0xff]
      %v407 = vld [vmem:[%s4 + $0x30] sm:$0xff]
      %v408 = vld [vmem:[%s4 + $0x38] sm:$0xff]
      %v409 = vld [vmem:[%s4 + $0x50] sm:$0xff]
      %v410 = vld [vmem:[%s4 + $0x58] sm:$0xff]
      %v411 = vld [vmem:[%s4 + $0x70] sm:$0xff]
      %v412 = vld [vmem:[%s4 + $0x78] sm:$0xff]
      %v413 = vld [vmem:[%s4 + $0x90] sm:$0xff]
      %v414 = vld [vmem:[%s4 + $0x98] sm:$0xff]
      %v415 = vld [vmem:[%s4 + $0xb0] sm:$0xff]
      %v416 = vld [vmem:[%s4 + $0xb8] sm:$0xff]
      %v417 = vld [vmem:[%s4 + $0xd0] sm:$0xff]
      %v418 = vld [vmem:[%s4 + $0xd8] sm:$0xff]
      %v419 = vld [vmem:[%s4 + $0xf0] sm:$0xff]
      %v420 = vld [vmem:[%s4 + $0xf8] sm:$0xff]
      %v421 = vld [vmem:[%s4 + $0x110] sm:$0xff]
      %v422 = vld [vmem:[%s4 + $0x118] sm:$0xff]
      %v423 = vld [vmem:[%s4 + $0x130] sm:$0xff]
      %v424 = vld [vmem:[%s4 + $0x138] sm:$0xff]
      %v425 = vld [vmem:[%s4 + $0x150] sm:$0xff]
      %v426 = vld [vmem:[%s4 + $0x158] sm:$0xff]
      %v427 = vld [vmem:[%s4 + $0x170] sm:$0xff]
      %v428 = vld [vmem:[%s4 + $0x178] sm:$0xff]
      %v429 = vld [vmem:[%s4 + $0x190] sm:$0xff]
      %v430 = vld [vmem:[%s4 + $0x198] sm:$0xff]
      %v431 = vld [vmem:[%s4 + $0x1b0] sm:$0xff]
      %v432 = vld [vmem:[%s4 + $0x1b8] sm:$0xff]
      %v433 = vld [vmem:[%s4 + $0x1d0] sm:$0xff]
      %v434 = vld [vmem:[%s4 + $0x1d8] sm:$0xff]
      %v435 = vld [vmem:[%s4 + $0x1f0] sm:$0xff]
      %v436 = vld [vmem:[%s4 + $0x1f8] sm:$0xff]
      %v437 = vld [vmem:[%s5] sm:$0x1]
      %v438 = vld [vmem:[%s5 + $0x1] sm:$0x1]
      %v439 = vld [vmem:[%s5 + $0x2] sm:$0x1]
      %v440 = vld [vmem:[%s5 + $0x3] sm:$0x3]
      %v441 = vadd.f32 %v324, %v325
      %442 = vadd.xlane.f32.xlu0 %v441
      %v443 = vpop.xlane.xlu0 %442
      %v444 = vadd.f32 %v326, %v327
      %445 = vadd.xlane.f32.xlu0 %v444
      %v446 = vpop.xlane.xlu0 %445
      %v447 = vadd.f32 %v328, %v329
      %448 = vadd.xlane.f32.xlu0 %v447
      %v449 = vpop.xlane.xlu0 %448
      %v450 = vadd.f32 %v330, %v331
      %451 = vadd.xlane.f32.xlu0 %v450
      %v452 = vpop.xlane.xlu0 %451
      %v453 = vadd.f32 %v332, %v333
      %454 = vadd.xlane.f32.xlu0 %v453
      %v455 = vpop.xlane.xlu0 %454
      %v456 = vadd.f32 %v334, %v335
      %457 = vadd.xlane.f32.xlu0 %v456
      %v458 = vpop.xlane.xlu0 %457
      %v459 = vadd.f32 %v336, %v337
      %460 = vadd.xlane.f32.xlu0 %v459
      %v461 = vpop.xlane.xlu0 %460
      %v462 = vadd.f32 %v338, %v339
      %463 = vadd.xlane.f32.xlu0 %v462
      %v464 = vpop.xlane.xlu0 %463
      %v465 = vadd.f32 %v340, %v341
      %466 = vadd.xlane.f32.xlu0 %v465
      %v467 = vpop.xlane.xlu0 %466
      %v468 = vadd.f32 %v342, %v343
      %469 = vadd.xlane.f32.xlu0 %v468
      %v470 = vpop.xlane.xlu0 %469
      %v471 = vadd.f32 %v344, %v345
      %472 = vadd.xlane.f32.xlu0 %v471
      %v473 = vpop.xlane.xlu0 %472
      %v474 = vadd.f32 %v346, %v347
      %475 = vadd.xlane.f32.xlu0 %v474
      %v476 = vpop.xlane.xlu0 %475
      %v477 = vadd.f32 %v348, %v349
      %478 = vadd.xlane.f32.xlu0 %v477
      %v479 = vpop.xlane.xlu0 %478
      %v480 = vadd.f32 %v350, %v351
      %481 = vadd.xlane.f32.xlu0 %v480
      %v482 = vpop.xlane.xlu0 %481
      %v483 = vadd.f32 %v352, %v353
      %484 = vadd.xlane.f32.xlu0 %v483
      %v485 = vpop.xlane.xlu0 %484
      %v486 = vadd.f32 %v354, %v355
      %487 = vadd.xlane.f32.xlu0 %v486
      %v488 = vpop.xlane.xlu0 %487
      %v489 = vadd.f32 %v356, %v357
      %490 = vadd.xlane.f32.xlu0 %v489
      %v491 = vpop.xlane.xlu0 %490
      %v492 = vadd.f32 %v358, %v359
      %493 = vadd.xlane.f32.xlu0 %v492
      %v494 = vpop.xlane.xlu0 %493
      %v495 = vadd.f32 %v360, %v361
      %496 = vadd.xlane.f32.xlu0 %v495
      %v497 = vpop.xlane.xlu0 %496
      %v498 = vadd.f32 %v362, %v363
      %499 = vadd.xlane.f32.xlu0 %v498
      %v500 = vpop.xlane.xlu0 %499
      %v501 = vadd.f32 %v364, %v365
      %502 = vadd.xlane.f32.xlu0 %v501
      %v503 = vpop.xlane.xlu0 %502
      %v504 = vadd.f32 %v366, %v367
      %505 = vadd.xlane.f32.xlu0 %v504
      %v506 = vpop.xlane.xlu0 %505
      %v507 = vadd.f32 %v368, %v369
      %508 = vadd.xlane.f32.xlu0 %v507
      %v509 = vpop.xlane.xlu0 %508
      %v510 = vadd.f32 %v370, %v371
      %511 = vadd.xlane.f32.xlu0 %v510
      %v512 = vpop.xlane.xlu0 %511
      %v513 = vadd.f32 %v372, %v373
      %514 = vadd.xlane.f32.xlu0 %v513
      %v515 = vpop.xlane.xlu0 %514
      %v516 = vadd.f32 %v374, %v375
      %517 = vadd.xlane.f32.xlu0 %v516
      %v518 = vpop.xlane.xlu0 %517
      %v519 = vadd.f32 %v376, %v377
      %520 = vadd.xlane.f32.xlu0 %v519
      %v521 = vpop.xlane.xlu0 %520
      %v522 = vadd.f32 %v378, %v379
      %523 = vadd.xlane.f32.xlu0 %v522
      %v524 = vpop.xlane.xlu0 %523
      %v525 = vadd.f32 %v380, %v381
      %526 = vadd.xlane.f32.xlu0 %v525
      %v527 = vpop.xlane.xlu0 %526
      %v528 = vadd.f32 %v382, %v383
      %529 = vadd.xlane.f32.xlu0 %v528
      %v530 = vpop.xlane.xlu0 %529
      %v531 = vadd.f32 %v384, %v385
      %532 = vadd.xlane.f32.xlu0 %v531
      %v533 = vpop.xlane.xlu0 %532
      %v534 = vadd.f32 %v386, %v387
      %535 = vadd.xlane.f32.xlu0 %v534
      %v536 = vpop.xlane.xlu0 %535
      %vm537 = vcmask 64512
      %v539 = vsel %vm537, %v292, 0
      %v542 = vsel %vm537, %v293, 0
      %v545 = vsel %vm537, %v294, 0
      %v548 = vsel %vm537, %v295, 0
      %v551 = vsel %vm537, %v296, 0
      %v554 = vsel %vm537, %v297, 0
      %v557 = vsel %vm537, %v298, 0
      %v560 = vsel %vm537, %v299, 0
      %v563 = vsel %vm537, %v300, 0
      %v566 = vsel %vm537, %v301, 0
      %v569 = vsel %vm537, %v302, 0
      %v572 = vsel %vm537, %v303, 0
      %v575 = vsel %vm537, %v304, 0
      %v578 = vsel %vm537, %v305, 0
      %v581 = vsel %vm537, %v306, 0
      %v584 = vsel %vm537, %v307, 0
      %v587 = vsel %vm537, %v308, 0
      %v590 = vsel %vm537, %v309, 0
      %v593 = vsel %vm537, %v310, 0
      %v596 = vsel %vm537, %v311, 0
      %v599 = vsel %vm537, %v312, 0
      %v602 = vsel %vm537, %v313, 0
      %v605 = vsel %vm537, %v314, 0
      %v608 = vsel %vm537, %v315, 0
      %v611 = vsel %vm537, %v316, 0
      %v614 = vsel %vm537, %v317, 0
      %v617 = vsel %vm537, %v318, 0
      %v620 = vsel %vm537, %v319, 0
      %v623 = vsel %vm537, %v320, 0
      %v626 = vsel %vm537, %v321, 0
      %v629 = vsel %vm537, %v322, 0
      %v632 = vsel %vm537, %v323, 0
      %634 = vmatprep.subr.mxu0 0.0
      %635 = vmatpush1.msra.mxu0 %v388
      %636 = vmatprep.subr.mxu0 0.0
      %637 = vmatpush1.msra.mxu0 0.0
      %638 = vmatprep.subr.mxu0 0.0
      %639 = vmatpush1.msra.mxu0 0.0
      %640 = vmatprep.subr.mxu0 0.0
      %641 = vmatpush1.msra.mxu0 0.0
      %642 = vmatprep.subr.mxu0 0.0
      %643 = vmatpush1.msra.mxu0 0.0
      %644 = vmatprep.subr.mxu0 0.0
      %645 = vmatpush1.msra.mxu0 0.0
      %646 = vmatprep.subr.mxu0 0.0
      %647 = vmatpush1.msra.mxu0 0.0
      %648 = vmatprep.subr.mxu0 0.0
      %649 = vmatpush1.msra.mxu0 0.0
      %650 = vmatprep.subr.mxu0 0.0
      %651 = vmatpush1.msra.mxu0 0.0
      %652 = vmatprep.subr.mxu0 0.0
      %653 = vmatpush1.msra.mxu0 0.0
      %654 = vmatprep.subr.mxu0 0.0
      %655 = vmatpush1.msra.mxu0 0.0
      %656 = vmatprep.subr.mxu0 0.0
      %657 = vmatpush1.msra.mxu0 0.0
      %658 = vmatprep.subr.mxu0 0.0
      %659 = vmatpush1.msra.mxu0 0.0
      %660 = vmatprep.subr.mxu0 0.0
      %661 = vmatpush1.msra.mxu0 0.0
      %662 = vmatprep.subr.mxu0 0.0
      %663 = vmatpush1.msra.mxu0 0.0
      %664 = vmatprep.subr.mxu0 0.0
      %665 = vmatpush1.msra.mxu0 0.0
      %666 = vmatprep.subr.mxu0 0.0
      %667 = vmatpush1.msra.mxu0 0.0
      %668 = vmatprep.subr.mxu0 0.0
      %669 = vmatpush1.msra.mxu0 0.0
      %670 = vmatprep.subr.mxu0 0.0
      %671 = vmatpush1.msra.mxu0 0.0
      %672 = vmatprep.subr.mxu0 0.0
      %673 = vmatpush1.msra.mxu0 0.0
      %674 = vmatprep.subr.mxu0 0.0
      %675 = vmatpush1.msra.mxu0 0.0
      %676 = vmatprep.subr.mxu0 0.0
      %677 = vmatpush1.msra.mxu0 0.0
      %678 = vmatprep.subr.mxu0 0.0
      %679 = vmatpush1.msra.mxu0 0.0
      %680 = vmatprep.subr.mxu0 0.0
      %681 = vmatpush1.msra.mxu0 0.0
      %682 = vmatprep.subr.mxu0 0.0
      %683 = vmatpush1.msra.mxu0 0.0
      %684 = vmatprep.subr.mxu0 0.0
      %685 = vmatpush1.msra.mxu0 0.0
      %686 = vmatprep.subr.mxu0 0.0
      %687 = vmatpush1.msra.mxu0 0.0
      %688 = vmatprep.subr.mxu0 0.0
      %689 = vmatpush1.msra.mxu0 0.0
      %690 = vmatprep.subr.mxu0 0.0
      %691 = vmatpush1.msra.mxu0 0.0
      %692 = vmatprep.subr.mxu0 0.0
      %693 = vmatpush1.msra.mxu0 0.0
      %694 = vmatprep.subr.mxu0 0.0
      %695 = vmatpush1.msra.mxu0 0.0
      %696 = vmatprep.subr.mxu0 0.0
      %697 = vmatpush1.msra.mxu0 0.0
      %698 = vmatprep.mubr.f32.mxu0 0.0
      %699 = vmatmul.mubr.f32.gmra.mrb[0].mxu0 %v539
      %v700 = vpop.f32.mrb[0].mxu0
      %v701 = vadd.f32 0.0, %v700
      %v702 = vpop.f32.mrb[0].mxu0
      %703 = vmatprep.mubr.f32.mxu0 0.0
      %704 = vmatmul.mubr.f32.gmra.mrb[0].mxu0 %v542
      %v705 = vpop.f32.mrb[0].mxu0
      %v706 = vadd.f32 0.0, %v705
      %v707 = vpop.f32.mrb[0].mxu0
      %708 = vmatprep.mubr.f32.mxu0 0.0
      %709 = vmatmul.mubr.f32.gmra.mrb[0].mxu0 %v545
      %v710 = vpop.f32.mrb[0].mxu0
      %v711 = vadd.f32 0.0, %v710
      %v712 = vpop.f32.mrb[0].mxu0
      %713 = vmatprep.mubr.f32.mxu0 0.0
      %714 = vmatmul.mubr.f32.gmra.mrb[0].mxu0 %v548
      %v715 = vpop.f32.mrb[0].mxu0
      %v716 = vadd.f32 0.0, %v715
      %v717 = vpop.f32.mrb[0].mxu0
      %718 = vmatprep.mubr.f32.mxu0 0.0
      %719 = vmatmul.mubr.f32.gmra.mrb[0].mxu0 %v551
      %v720 = vpop.f32.mrb[0].mxu0
      %v721 = vadd.f32 0.0, %v720
      %v722 = vpop.f32.mrb[0].mxu0
      %723 = vmatprep.mubr.f32.mxu0 0.0
      %724 = vmatmul.mubr.f32.gmra.mrb[0].mxu0 %v554
      %v725 = vpop.f32.mrb[0].mxu0
      %v726 = vadd.f32 0.0, %v725
      %v727 = vpop.f32.mrb[0].mxu0
      %728 = vmatprep.mubr.f32.mxu0 0.0
      %729 = vmatmul.mubr.f32.gmra.mrb[0].mxu0 %v557
      %v730 = vpop.f32.mrb[0].mxu0
      %v731 = vadd.f32 0.0, %v730
      %v732 = vpop.f32.mrb[0].mxu0
      %733 = vmatprep.mubr.f32.mxu0 0.0
      %734 = vmatmul.mubr.f32.gmra.mrb[0].mxu0 %v560
      %v735 = vpop.f32.mrb[0].mxu0
      %v736 = vadd.f32 0.0, %v735
      %v737 = vpop.f32.mrb[0].mxu0
      %738 = vmatprep.mubr.f32.mxu0 0.0
      %739 = vmatmul.mubr.f32.gmra.mrb[0].mxu0 %v563
      %v740 = vpop.f32.mrb[0].mxu0
      %v741 = vadd.f32 0.0, %v740
      %v742 = vpop.f32.mrb[0].mxu0
      %743 = vmatprep.mubr.f32.mxu0 0.0
      %744 = vmatmul.mubr.f32.gmra.mrb[0].mxu0 %v566
      %v745 = vpop.f32.mrb[0].mxu0
      %v746 = vadd.f32 0.0, %v745
      %v747 = vpop.f32.mrb[0].mxu0
      %748 = vmatprep.mubr.f32.mxu0 0.0
      %749 = vmatmul.mubr.f32.gmra.mrb[0].mxu0 %v569
      %v750 = vpop.f32.mrb[0].mxu0
      %v751 = vadd.f32 0.0, %v750
      %v752 = vpop.f32.mrb[0].mxu0
      %753 = vmatprep.mubr.f32.mxu0 0.0
      %754 = vmatmul.mubr.f32.gmra.mrb[0].mxu0 %v572
      %v755 = vpop.f32.mrb[0].mxu0
      %v756 = vadd.f32 0.0, %v755
      %v757 = vpop.f32.mrb[0].mxu0
      %758 = vmatprep.mubr.f32.mxu0 0.0
      %759 = vmatmul.mubr.f32.gmra.mrb[0].mxu0 %v575
      %v760 = vpop.f32.mrb[0].mxu0
      %v761 = vadd.f32 0.0, %v760
      %v762 = vpop.f32.mrb[0].mxu0
      %763 = vmatprep.mubr.f32.mxu0 0.0
      %764 = vmatmul.mubr.f32.gmra.mrb[0].mxu0 %v578
      %v765 = vpop.f32.mrb[0].mxu0
      %v766 = vadd.f32 0.0, %v765
      %v767 = vpop.f32.mrb[0].mxu0
      %768 = vmatprep.mubr.f32.mxu0 0.0
      %769 = vmatmul.mubr.f32.gmra.mrb[0].mxu0 %v581
      %v770 = vpop.f32.mrb[0].mxu0
      %v771 = vadd.f32 0.0, %v770
      %v772 = vpop.f32.mrb[0].mxu0
      %773 = vmatprep.mubr.f32.mxu0 0.0
      %774 = vmatmul.mubr.f32.gmra.mrb[0].mxu0 %v584
      %v775 = vpop.f32.mrb[0].mxu0
      %v776 = vadd.f32 0.0, %v775
      %v777 = vpop.f32.mrb[0].mxu0
      %778 = vmatprep.mubr.f32.mxu0 0.0
      %779 = vmatmul.mubr.f32.gmra.mrb[0].mxu0 %v587
      %v780 = vpop.f32.mrb[0].mxu0
      %v781 = vadd.f32 0.0, %v780
      %v782 = vpop.f32.mrb[0].mxu0
      %783 = vmatprep.mubr.f32.mxu0 0.0
      %784 = vmatmul.mubr.f32.gmra.mrb[0].mxu0 %v590
      %v785 = vpop.f32.mrb[0].mxu0
      %v786 = vadd.f32 0.0, %v785
      %v787 = vpop.f32.mrb[0].mxu0
      %788 = vmatprep.mubr.f32.mxu0 0.0
      %789 = vmatmul.mubr.f32.gmra.mrb[0].mxu0 %v593
      %v790 = vpop.f32.mrb[0].mxu0
      %v791 = vadd.f32 0.0, %v790
      %v792 = vpop.f32.mrb[0].mxu0
      %793 = vmatprep.mubr.f32.mxu0 0.0
      %794 = vmatmul.mubr.f32.gmra.mrb[0].mxu0 %v596
      %v795 = vpop.f32.mrb[0].mxu0
      %v796 = vadd.f32 0.0, %v795
      %v797 = vpop.f32.mrb[0].mxu0
      %798 = vmatprep.mubr.f32.mxu0 0.0
      %799 = vmatmul.mubr.f32.gmra.mrb[0].mxu0 %v599
      %v800 = vpop.f32.mrb[0].mxu0
      %v801 = vadd.f32 0.0, %v800
      %v802 = vpop.f32.mrb[0].mxu0
      %803 = vmatprep.mubr.f32.mxu0 0.0
      %804 = vmatmul.mubr.f32.gmra.mrb[0].mxu0 %v602
      %v805 = vpop.f32.mrb[0].mxu0
      %v806 = vadd.f32 0.0, %v805
      %v807 = vpop.f32.mrb[0].mxu0
      %808 = vmatprep.mubr.f32.mxu0 0.0
      %809 = vmatmul.mubr.f32.gmra.mrb[0].mxu0 %v605
      %v810 = vpop.f32.mrb[0].mxu0
      %v811 = vadd.f32 0.0, %v810
      %v812 = vpop.f32.mrb[0].mxu0
      %813 = vmatprep.mubr.f32.mxu0 0.0
      %814 = vmatmul.mubr.f32.gmra.mrb[0].mxu0 %v608
      %v815 = vpop.f32.mrb[0].mxu0
      %v816 = vadd.f32 0.0, %v815
      %v817 = vpop.f32.mrb[0].mxu0
      %818 = vmatprep.mubr.f32.mxu0 0.0
      %819 = vmatmul.mubr.f32.gmra.mrb[0].mxu0 %v611
      %v820 = vpop.f32.mrb[0].mxu0
      %v821 = vadd.f32 0.0, %v820
      %v822 = vpop.f32.mrb[0].mxu0
      %823 = vmatprep.mubr.f32.mxu0 0.0
      %824 = vmatmul.mubr.f32.gmra.mrb[0].mxu0 %v614
      %v825 = vpop.f32.mrb[0].mxu0
      %v826 = vadd.f32 0.0, %v825
      %v827 = vpop.f32.mrb[0].mxu0
      %828 = vmatprep.mubr.f32.mxu0 0.0
      %829 = vmatmul.mubr.f32.gmra.mrb[0].mxu0 %v617
      %v830 = vpop.f32.mrb[0].mxu0
      %v831 = vadd.f32 0.0, %v830
      %v832 = vpop.f32.mrb[0].mxu0
      %833 = vmatprep.mubr.f32.mxu0 0.0
      %834 = vmatmul.mubr.f32.gmra.mrb[0].mxu0 %v620
      %v835 = vpop.f32.mrb[0].mxu0
      %v836 = vadd.f32 0.0, %v835
      %v837 = vpop.f32.mrb[0].mxu0
      %838 = vmatprep.mubr.f32.mxu0 0.0
      %839 = vmatmul.mubr.f32.gmra.mrb[0].mxu0 %v623
      %v840 = vpop.f32.mrb[0].mxu0
      %v841 = vadd.f32 0.0, %v840
      %v842 = vpop.f32.mrb[0].mxu0
      %843 = vmatprep.mubr.f32.mxu0 0.0
      %844 = vmatmul.mubr.f32.gmra.mrb[0].mxu0 %v626
      %v845 = vpop.f32.mrb[0].mxu0
      %v846 = vadd.f32 0.0, %v845
      %v847 = vpop.f32.mrb[0].mxu0
      %848 = vmatprep.mubr.f32.mxu0 0.0
      %849 = vmatmul.mubr.f32.gmra.mrb[0].mxu0 %v629
      %v850 = vpop.f32.mrb[0].mxu0
      %v851 = vadd.f32 0.0, %v850
      %v852 = vpop.f32.mrb[0].mxu0
      %853 = vmatprep.mubr.f32.mxu0 0.0
      %854 = vmatmul.mubr.f32.gmra.mrb[0].mxu0 %v632
      %v855 = vpop.f32.mrb[0].mxu0
      %v856 = vadd.f32 0.0, %v855
      %v857 = vpop.f32.mrb[0].mxu0
      %858 = vdwg.mxu0
      %v860 = vlaneseq
      %v861 = vshrl.u32 %v860, 7
      %v862 = vsub.s32 0, %v861
      %v863 = vrot.slane %v437, %v862
      %v865 = vmul.f32 %v443, %v863
      %v866 = vmul.f32 %v446, %v863
      %v867 = vmul.f32 %v449, %v863
      %v868 = vmul.f32 %v452, %v863
      %v869 = vmul.f32 %v455, %v863
      %v870 = vmul.f32 %v458, %v863
      %v871 = vmul.f32 %v461, %v863
      %v872 = vmul.f32 %v464, %v863
      %v873 = vmul.f32 %v467, %v863
      %v874 = vmul.f32 %v470, %v863
      %v875 = vmul.f32 %v473, %v863
      %v876 = vmul.f32 %v476, %v863
      %v877 = vmul.f32 %v479, %v863
      %v878 = vmul.f32 %v482, %v863
      %v879 = vmul.f32 %v485, %v863
      %v880 = vmul.f32 %v488, %v863
      %v881 = vmul.f32 %v491, %v863
      %v882 = vmul.f32 %v494, %v863
      %v883 = vmul.f32 %v497, %v863
      %v884 = vmul.f32 %v500, %v863
      %v885 = vmul.f32 %v503, %v863
      %v886 = vmul.f32 %v506, %v863
      %v887 = vmul.f32 %v509, %v863
      %v888 = vmul.f32 %v512, %v863
      %v889 = vmul.f32 %v515, %v863
      %v890 = vmul.f32 %v518, %v863
      %v891 = vmul.f32 %v521, %v863
      %v892 = vmul.f32 %v524, %v863
      %v893 = vmul.f32 %v527, %v863
      %v894 = vmul.f32 %v530, %v863
      %v895 = vmul.f32 %v533, %v863
      %v896 = vmul.f32 %v536, %v863
      %897 = vmatprep.subr.mxu0 0.0
      %898 = vmatpush1.msra.mxu0 %v701
      %899 = vmatprep.subr.mxu0 0.0
      %900 = vmatpush1.msra.mxu0 %v706
      %901 = vmatprep.subr.mxu0 0.0
      %902 = vmatpush1.msra.mxu0 %v711
      %903 = vmatprep.subr.mxu0 0.0
      %904 = vmatpush1.msra.mxu0 %v716
      %905 = vmatprep.subr.mxu0 0.0
      %906 = vmatpush1.msra.mxu0 %v721
      %907 = vmatprep.subr.mxu0 0.0
      %908 = vmatpush1.msra.mxu0 %v726
      %909 = vmatprep.subr.mxu0 0.0
      %910 = vmatpush1.msra.mxu0 %v731
      %911 = vmatprep.subr.mxu0 0.0
      %912 = vmatpush1.msra.mxu0 %v736
      %913 = vmatprep.subr.mxu0 0.0
      %914 = vmatpush1.msra.mxu0 %v741
      %915 = vmatprep.subr.mxu0 0.0
      %916 = vmatpush1.msra.mxu0 %v746
      %917 = vmatprep.subr.mxu0 0.0
      %918 = vmatpush1.msra.mxu0 %v751
      %919 = vmatprep.subr.mxu0 0.0
      %920 = vmatpush1.msra.mxu0 %v756
      %921 = vmatprep.subr.mxu0 0.0
      %922 = vmatpush1.msra.mxu0 %v761
      %923 = vmatprep.subr.mxu0 0.0
      %924 = vmatpush1.msra.mxu0 %v766
      %925 = vmatprep.subr.mxu0 0.0
      %926 = vmatpush1.msra.mxu0 %v771
      %927 = vmatprep.subr.mxu0 0.0
      %928 = vmatpush1.msra.mxu0 %v776
      %929 = vmatprep.subr.mxu0 0.0
      %930 = vmatpush1.msra.mxu0 %v781
      %931 = vmatprep.subr.mxu0 0.0
      %932 = vmatpush1.msra.mxu0 %v786
      %933 = vmatprep.subr.mxu0 0.0
      %934 = vmatpush1.msra.mxu0 %v791
      %935 = vmatprep.subr.mxu0 0.0
      %936 = vmatpush1.msra.mxu0 %v796
      %937 = vmatprep.subr.mxu0 0.0
      %938 = vmatpush1.msra.mxu0 %v801
      %939 = vmatprep.subr.mxu0 0.0
      %940 = vmatpush1.msra.mxu0 %v806
      %941 = vmatprep.subr.mxu0 0.0
      %942 = vmatpush1.msra.mxu0 %v811
      %943 = vmatprep.subr.mxu0 0.0
      %944 = vmatpush1.msra.mxu0 %v816
      %945 = vmatprep.subr.mxu0 0.0
      %946 = vmatpush1.msra.mxu0 %v821
      %947 = vmatprep.subr.mxu0 0.0
      %948 = vmatpush1.msra.mxu0 %v826
      %949 = vmatprep.subr.mxu0 0.0
      %950 = vmatpush1.msra.mxu0 %v831
      %951 = vmatprep.subr.mxu0 0.0
      %952 = vmatpush1.msra.mxu0 %v836
      %953 = vmatprep.subr.mxu0 0.0
      %954 = vmatpush1.msra.mxu0 %v841
      %955 = vmatprep.subr.mxu0 0.0
      %956 = vmatpush1.msra.mxu0 %v846
      %957 = vmatprep.subr.mxu0 0.0
      %958 = vmatpush1.msra.mxu0 %v851
      %959 = vmatprep.subr.mxu0 0.0
      %960 = vmatpush1.msra.mxu0 %v856
      %961 = vmatprep.mubr.f32.mxu0 %v325
      %962 = vmatmul.mubr.f32.gmra.mrb[0].mxu0 %v324
      %v963 = vpop.f32.mrb[0].mxu0
      %v964 = vadd.f32 %v865, %v963
      %v965 = vpop.f32.mrb[0].mxu0
      %966 = vmatprep.mubr.f32.mxu0 %v327
      %967 = vmatmul.mubr.f32.gmra.mrb[0].mxu0 %v326
      %v968 = vpop.f32.mrb[0].mxu0
      %v969 = vadd.f32 %v866, %v968
      %v970 = vpop.f32.mrb[0].mxu0
      %971 = vmatprep.mubr.f32.mxu0 %v329
      %972 = vmatmul.mubr.f32.gmra.mrb[0].mxu0 %v328
      %v973 = vpop.f32.mrb[0].mxu0
      %v974 = vadd.f32 %v867, %v973
      %v975 = vpop.f32.mrb[0].mxu0
      %976 = vmatprep.mubr.f32.mxu0 %v331
      %977 = vmatmul.mubr.f32.gmra.mrb[0].mxu0 %v330
      %v978 = vpop.f32.mrb[0].mxu0
      %v979 = vadd.f32 %v868, %v978
      %v980 = vpop.f32.mrb[0].mxu0
      %981 = vmatprep.mubr.f32.mxu0 %v333
      %982 = vmatmul.mubr.f32.gmra.mrb[0].mxu0 %v332
      %v983 = vpop.f32.mrb[0].mxu0
      %v984 = vadd.f32 %v869, %v983
      %v985 = vpop.f32.mrb[0].mxu0
      %986 = vmatprep.mubr.f32.mxu0 %v335
      %987 = vmatmul.mubr.f32.gmra.mrb[0].mxu0 %v334
      %v988 = vpop.f32.mrb[0].mxu0
      %v989 = vadd.f32 %v870, %v988
      %v990 = vpop.f32.mrb[0].mxu0
      %991 = vmatprep.mubr.f32.mxu0 %v337
      %992 = vmatmul.mubr.f32.gmra.mrb[0].mxu0 %v336
      %v993 = vpop.f32.mrb[0].mxu0
      %v994 = vadd.f32 %v871, %v993
      %v995 = vpop.f32.mrb[0].mxu0
      %996 = vmatprep.mubr.f32.mxu0 %v339
      %997 = vmatmul.mubr.f32.gmra.mrb[0].mxu0 %v338
      %v998 = vpop.f32.mrb[0].mxu0
      %v999 = vadd.f32 %v872, %v998
      %v1000 = vpop.f32.mrb[0].mxu0
      %1001 = vmatprep.mubr.f32.mxu0 %v341
      %1002 = vmatmul.mubr.f32.gmra.mrb[0].mxu0 %v340
      %v1003 = vpop.f32.mrb[0].mxu0
      %v1004 = vadd.f32 %v873, %v1003
      %v1005 = vpop.f32.mrb[0].mxu0
      %1006 = vmatprep.mubr.f32.mxu0 %v343
      %1007 = vmatmul.mubr.f32.gmra.mrb[0].mxu0 %v342
      %v1008 = vpop.f32.mrb[0].mxu0
      %v1009 = vadd.f32 %v874, %v1008
      %v1010 = vpop.f32.mrb[0].mxu0
      %1011 = vmatprep.mubr.f32.mxu0 %v345
      %1012 = vmatmul.mubr.f32.gmra.mrb[0].mxu0 %v344
      %v1013 = vpop.f32.mrb[0].mxu0
      %v1014 = vadd.f32 %v875, %v1013
      %v1015 = vpop.f32.mrb[0].mxu0
      %1016 = vmatprep.mubr.f32.mxu0 %v347
      %1017 = vmatmul.mubr.f32.gmra.mrb[0].mxu0 %v346
      %v1018 = vpop.f32.mrb[0].mxu0
      %v1019 = vadd.f32 %v876, %v1018
      %v1020 = vpop.f32.mrb[0].mxu0
      %1021 = vmatprep.mubr.f32.mxu0 %v349
      %1022 = vmatmul.mubr.f32.gmra.mrb[0].mxu0 %v348
      %v1023 = vpop.f32.mrb[0].mxu0
      %v1024 = vadd.f32 %v877, %v1023
      %v1025 = vpop.f32.mrb[0].mxu0
      %1026 = vmatprep.mubr.f32.mxu0 %v351
      %1027 = vmatmul.mubr.f32.gmra.mrb[0].mxu0 %v350
      %v1028 = vpop.f32.mrb[0].mxu0
      %v1029 = vadd.f32 %v878, %v1028
      %v1030 = vpop.f32.mrb[0].mxu0
      %1031 = vmatprep.mubr.f32.mxu0 %v353
      %1032 = vmatmul.mubr.f32.gmra.mrb[0].mxu0 %v352
      %v1033 = vpop.f32.mrb[0].mxu0
      %v1034 = vadd.f32 %v879, %v1033
      %v1035 = vpop.f32.mrb[0].mxu0
      %1036 = vmatprep.mubr.f32.mxu0 %v355
      %1037 = vmatmul.mubr.f32.gmra.mrb[0].mxu0 %v354
      %v1038 = vpop.f32.mrb[0].mxu0
      %v1039 = vadd.f32 %v880, %v1038
      %v1040 = vpop.f32.mrb[0].mxu0
      %1041 = vmatprep.mubr.f32.mxu0 %v357
      %1042 = vmatmul.mubr.f32.gmra.mrb[0].mxu0 %v356
      %v1043 = vpop.f32.mrb[0].mxu0
      %v1044 = vadd.f32 %v881, %v1043
      %v1045 = vpop.f32.mrb[0].mxu0
      %1046 = vmatprep.mubr.f32.mxu0 %v359
      %1047 = vmatmul.mubr.f32.gmra.mrb[0].mxu0 %v358
      %v1048 = vpop.f32.mrb[0].mxu0
      %v1049 = vadd.f32 %v882, %v1048
      %v1050 = vpop.f32.mrb[0].mxu0
      %1051 = vmatprep.mubr.f32.mxu0 %v361
      %1052 = vmatmul.mubr.f32.gmra.mrb[0].mxu0 %v360
      %v1053 = vpop.f32.mrb[0].mxu0
      %v1054 = vadd.f32 %v883, %v1053
      %v1055 = vpop.f32.mrb[0].mxu0
      %1056 = vmatprep.mubr.f32.mxu0 %v363
      %1057 = vmatmul.mubr.f32.gmra.mrb[0].mxu0 %v362
      %v1058 = vpop.f32.mrb[0].mxu0
      %v1059 = vadd.f32 %v884, %v1058
      %v1060 = vpop.f32.mrb[0].mxu0
      %1061 = vmatprep.mubr.f32.mxu0 %v365
      %1062 = vmatmul.mubr.f32.gmra.mrb[0].mxu0 %v364
      %v1063 = vpop.f32.mrb[0].mxu0
      %v1064 = vadd.f32 %v885, %v1063
      %v1065 = vpop.f32.mrb[0].mxu0
      %1066 = vmatprep.mubr.f32.mxu0 %v367
      %1067 = vmatmul.mubr.f32.gmra.mrb[0].mxu0 %v366
      %v1068 = vpop.f32.mrb[0].mxu0
      %v1069 = vadd.f32 %v886, %v1068
      %v1070 = vpop.f32.mrb[0].mxu0
      %1071 = vmatprep.mubr.f32.mxu0 %v369
      %1072 = vmatmul.mubr.f32.gmra.mrb[0].mxu0 %v368
      %v1073 = vpop.f32.mrb[0].mxu0
      %v1074 = vadd.f32 %v887, %v1073
      %v1075 = vpop.f32.mrb[0].mxu0
      %1076 = vmatprep.mubr.f32.mxu0 %v371
      %1077 = vmatmul.mubr.f32.gmra.mrb[0].mxu0 %v370
      %v1078 = vpop.f32.mrb[0].mxu0
      %v1079 = vadd.f32 %v888, %v1078
      %v1080 = vpop.f32.mrb[0].mxu0
      %1081 = vmatprep.mubr.f32.mxu0 %v373
      %1082 = vmatmul.mubr.f32.gmra.mrb[0].mxu0 %v372
      %v1083 = vpop.f32.mrb[0].mxu0
      %v1084 = vadd.f32 %v889, %v1083
      %v1085 = vpop.f32.mrb[0].mxu0
      %1086 = vmatprep.mubr.f32.mxu0 %v375
      %1087 = vmatmul.mubr.f32.gmra.mrb[0].mxu0 %v374
      %v1088 = vpop.f32.mrb[0].mxu0
      %v1089 = vadd.f32 %v890, %v1088
      %v1090 = vpop.f32.mrb[0].mxu0
      %1091 = vmatprep.mubr.f32.mxu0 %v377
      %1092 = vmatmul.mubr.f32.gmra.mrb[0].mxu0 %v376
      %v1093 = vpop.f32.mrb[0].mxu0
      %v1094 = vadd.f32 %v891, %v1093
      %v1095 = vpop.f32.mrb[0].mxu0
      %1096 = vmatprep.mubr.f32.mxu0 %v379
      %1097 = vmatmul.mubr.f32.gmra.mrb[0].mxu0 %v378
      %v1098 = vpop.f32.mrb[0].mxu0
      %v1099 = vadd.f32 %v892, %v1098
      %v1100 = vpop.f32.mrb[0].mxu0
      %1101 = vmatprep.mubr.f32.mxu0 %v381
      %1102 = vmatmul.mubr.f32.gmra.mrb[0].mxu0 %v380
      %v1103 = vpop.f32.mrb[0].mxu0
      %v1104 = vadd.f32 %v893, %v1103
      %v1105 = vpop.f32.mrb[0].mxu0
      %1106 = vmatprep.mubr.f32.mxu0 %v383
      %1107 = vmatmul.mubr.f32.gmra.mrb[0].mxu0 %v382
      %v1108 = vpop.f32.mrb[0].mxu0
      %v1109 = vadd.f32 %v894, %v1108
      %v1110 = vpop.f32.mrb[0].mxu0
      %1111 = vmatprep.mubr.f32.mxu0 %v385
      %1112 = vmatmul.mubr.f32.gmra.mrb[0].mxu0 %v384
      %v1113 = vpop.f32.mrb[0].mxu0
      %v1114 = vadd.f32 %v895, %v1113
      %v1115 = vpop.f32.mrb[0].mxu0
      %1116 = vmatprep.mubr.f32.mxu0 %v387
      %1117 = vmatmul.mubr.f32.gmra.mrb[0].mxu0 %v386
      %v1118 = vpop.f32.mrb[0].mxu0
      %v1119 = vadd.f32 %v896, %v1118
      %v1120 = vpop.f32.mrb[0].mxu0
      %1121 = vdwg.mxu0
      %v1123 = vlaneseq
      %v1124 = vshrl.u32 %v1123, 7
      %v1125 = vsub.s32 0, %v1124
      %v1126 = vrot.slane %v438, %v1125
      %v1128 = vadd.f32 %v964, %v1126
      %v1129 = vadd.f32 %v969, %v1126
      %v1130 = vadd.f32 %v974, %v1126
      %v1131 = vadd.f32 %v979, %v1126
      %v1132 = vadd.f32 %v984, %v1126
      %v1133 = vadd.f32 %v989, %v1126
      %v1134 = vadd.f32 %v994, %v1126
      %v1135 = vadd.f32 %v999, %v1126
      %v1136 = vadd.f32 %v1004, %v1126
      %v1137 = vadd.f32 %v1009, %v1126
      %v1138 = vadd.f32 %v1014, %v1126
      %v1139 = vadd.f32 %v1019, %v1126
      %v1140 = vadd.f32 %v1024, %v1126
      %v1141 = vadd.f32 %v1029, %v1126
      %v1142 = vadd.f32 %v1034, %v1126
      %v1143 = vadd.f32 %v1039, %v1126
      %v1144 = vadd.f32 %v1044, %v1126
      %v1145 = vadd.f32 %v1049, %v1126
      %v1146 = vadd.f32 %v1054, %v1126
      %v1147 = vadd.f32 %v1059, %v1126
      %v1148 = vadd.f32 %v1064, %v1126
      %v1149 = vadd.f32 %v1069, %v1126
      %v1150 = vadd.f32 %v1074, %v1126
      %v1151 = vadd.f32 %v1079, %v1126
      %v1152 = vadd.f32 %v1084, %v1126
      %v1153 = vadd.f32 %v1089, %v1126
      %v1154 = vadd.f32 %v1094, %v1126
      %v1155 = vadd.f32 %v1099, %v1126
      %v1156 = vadd.f32 %v1104, %v1126
      %v1157 = vadd.f32 %v1109, %v1126
      %v1158 = vadd.f32 %v1114, %v1126
      %v1159 = vadd.f32 %v1119, %v1126
      %v1160 = vmax.f32 %v1128, 0.0
      %v1161 = vmax.f32 %v1129, 0.0
      %v1162 = vmax.f32 %v1130, 0.0
      %v1163 = vmax.f32 %v1131, 0.0
      %v1164 = vmax.f32 %v1132, 0.0
      %v1165 = vmax.f32 %v1133, 0.0
      %v1166 = vmax.f32 %v1134, 0.0
      %v1167 = vmax.f32 %v1135, 0.0
      %v1168 = vmax.f32 %v1136, 0.0
      %v1169 = vmax.f32 %v1137, 0.0
      %v1170 = vmax.f32 %v1138, 0.0
      %v1171 = vmax.f32 %v1139, 0.0
      %v1172 = vmax.f32 %v1140, 0.0
      %v1173 = vmax.f32 %v1141, 0.0
      %v1174 = vmax.f32 %v1142, 0.0
      %v1175 = vmax.f32 %v1143, 0.0
      %v1176 = vmax.f32 %v1144, 0.0
      %v1177 = vmax.f32 %v1145, 0.0
      %v1178 = vmax.f32 %v1146, 0.0
      %v1179 = vmax.f32 %v1147, 0.0
      %v1180 = vmax.f32 %v1148, 0.0
      %v1181 = vmax.f32 %v1149, 0.0
      %v1182 = vmax.f32 %v1150, 0.0
      %v1183 = vmax.f32 %v1151, 0.0
      %v1184 = vmax.f32 %v1152, 0.0
      %v1185 = vmax.f32 %v1153, 0.0
      %v1186 = vmax.f32 %v1154, 0.0
      %v1187 = vmax.f32 %v1155, 0.0
      %v1188 = vmax.f32 %v1156, 0.0
      %v1189 = vmax.f32 %v1157, 0.0
      %v1190 = vmax.f32 %v1158, 0.0
      %v1191 = vmax.f32 %v1159, 0.0
      %1192 = vmatprep.subr.mxu0 0.0
      %1193 = vmatpush1.msra.mxu0 %v389
      %1194 = vmatprep.subr.mxu0 0.0
      %1195 = vmatpush1.msra.mxu0 %v390
      %1196 = vmatprep.subr.mxu0 0.0
      %1197 = vmatpush1.msra.mxu0 %v391
      %1198 = vmatprep.subr.mxu0 0.0
      %1199 = vmatpush1.msra.mxu0 %v392
      %1200 = vmatprep.subr.mxu0 0.0
      %1201 = vmatpush1.msra.mxu0 %v393
      %1202 = vmatprep.subr.mxu0 0.0
      %1203 = vmatpush1.msra.mxu0 %v394
      %1204 = vmatprep.subr.mxu0 0.0
      %1205 = vmatpush1.msra.mxu0 %v395
      %1206 = vmatprep.subr.mxu0 0.0
      %1207 = vmatpush1.msra.mxu0 %v396
      %1208 = vmatprep.subr.mxu0 0.0
      %1209 = vmatpush1.msra.mxu0 %v397
      %1210 = vmatprep.subr.mxu0 0.0
      %1211 = vmatpush1.msra.mxu0 %v398
      %1212 = vmatprep.subr.mxu0 0.0
      %1213 = vmatpush1.msra.mxu0 %v399
      %1214 = vmatprep.subr.mxu0 0.0
      %1215 = vmatpush1.msra.mxu0 %v400
      %1216 = vmatprep.subr.mxu0 0.0
      %1217 = vmatpush1.msra.mxu0 %v401
      %1218 = vmatprep.subr.mxu0 0.0
      %1219 = vmatpush1.msra.mxu0 %v402
      %1220 = vmatprep.subr.mxu0 0.0
      %1221 = vmatpush1.msra.mxu0 %v403
      %1222 = vmatprep.subr.mxu0 0.0
      %1223 = vmatpush1.msra.mxu0 %v404
      %1224 = vmatprep.subr.mxu0 0.0
      %1225 = vmatpush1.msra.mxu0 0.0
      %1226 = vmatprep.subr.mxu0 0.0
      %1227 = vmatpush1.msra.mxu0 0.0
      %1228 = vmatprep.subr.mxu0 0.0
      %1229 = vmatpush1.msra.mxu0 0.0
      %1230 = vmatprep.subr.mxu0 0.0
      %1231 = vmatpush1.msra.mxu0 0.0
      %1232 = vmatprep.subr.mxu0 0.0
      %1233 = vmatpush1.msra.mxu0 0.0
      %1234 = vmatprep.subr.mxu0 0.0
      %1235 = vmatpush1.msra.mxu0 0.0
      %1236 = vmatprep.subr.mxu0 0.0
      %1237 = vmatpush1.msra.mxu0 0.0
      %1238 = vmatprep.subr.mxu0 0.0
      %1239 = vmatpush1.msra.mxu0 0.0
      %1240 = vmatprep.subr.mxu0 0.0
      %1241 = vmatpush1.msra.mxu0 0.0
      %1242 = vmatprep.subr.mxu0 0.0
      %1243 = vmatpush1.msra.mxu0 0.0
      %1244 = vmatprep.subr.mxu0 0.0
      %1245 = vmatpush1.msra.mxu0 0.0
      %1246 = vmatprep.subr.mxu0 0.0
      %1247 = vmatpush1.msra.mxu0 0.0
      %1248 = vmatprep.subr.mxu0 0.0
      %1249 = vmatpush1.msra.mxu0 0.0
      %1250 = vmatprep.subr.mxu0 0.0
      %1251 = vmatpush1.msra.mxu0 0.0
      %1252 = vmatprep.subr.mxu0 0.0
      %1253 = vmatpush1.msra.mxu0 0.0
      %1254 = vmatprep.subr.mxu0 0.0
      %1255 = vmatpush1.msra.mxu0 0.0
      %1256 = vmatprep.mubr.f32.mxu0 0.0
      %1257 = vmatmul.mubr.f32.gmra.mrb[0].mxu0 %v1160
      %v1258 = vpop.f32.mrb[0].mxu0
      %v1259 = vadd.f32 0.0, %v1258
      %v1260 = vpop.f32.mrb[0].mxu0
      %1261 = vmatprep.mubr.f32.mxu0 0.0
      %1262 = vmatmul.mubr.f32.gmra.mrb[0].mxu0 %v1161
      %v1263 = vpop.f32.mrb[0].mxu0
      %v1264 = vadd.f32 0.0, %v1263
      %v1265 = vpop.f32.mrb[0].mxu0
      %1266 = vmatprep.mubr.f32.mxu0 0.0
      %1267 = vmatmul.mubr.f32.gmra.mrb[0].mxu0 %v1162
      %v1268 = vpop.f32.mrb[0].mxu0
      %v1269 = vadd.f32 0.0, %v1268
      %v1270 = vpop.f32.mrb[0].mxu0
      %1271 = vmatprep.mubr.f32.mxu0 0.0
      %1272 = vmatmul.mubr.f32.gmra.mrb[0].mxu0 %v1163
      %v1273 = vpop.f32.mrb[0].mxu0
      %v1274 = vadd.f32 0.0, %v1273
      %v1275 = vpop.f32.mrb[0].mxu0
      %1276 = vmatprep.mubr.f32.mxu0 0.0
      %1277 = vmatmul.mubr.f32.gmra.mrb[0].mxu0 %v1164
      %v1278 = vpop.f32.mrb[0].mxu0
      %v1279 = vadd.f32 0.0, %v1278
      %v1280 = vpop.f32.mrb[0].mxu0
      %1281 = vmatprep.mubr.f32.mxu0 0.0
      %1282 = vmatmul.mubr.f32.gmra.mrb[0].mxu0 %v1165
      %v1283 = vpop.f32.mrb[0].mxu0
      %v1284 = vadd.f32 0.0, %v1283
      %v1285 = vpop.f32.mrb[0].mxu0
      %1286 = vmatprep.mubr.f32.mxu0 0.0
      %1287 = vmatmul.mubr.f32.gmra.mrb[0].mxu0 %v1166
      %v1288 = vpop.f32.mrb[0].mxu0
      %v1289 = vadd.f32 0.0, %v1288
      %v1290 = vpop.f32.mrb[0].mxu0
      %1291 = vmatprep.mubr.f32.mxu0 0.0
      %1292 = vmatmul.mubr.f32.gmra.mrb[0].mxu0 %v1167
      %v1293 = vpop.f32.mrb[0].mxu0
      %v1294 = vadd.f32 0.0, %v1293
      %v1295 = vpop.f32.mrb[0].mxu0
      %1296 = vmatprep.mubr.f32.mxu0 0.0
      %1297 = vmatmul.mubr.f32.gmra.mrb[0].mxu0 %v1168
      %v1298 = vpop.f32.mrb[0].mxu0
      %v1299 = vadd.f32 0.0, %v1298
      %v1300 = vpop.f32.mrb[0].mxu0
      %1301 = vmatprep.mubr.f32.mxu0 0.0
      %1302 = vmatmul.mubr.f32.gmra.mrb[0].mxu0 %v1169
      %v1303 = vpop.f32.mrb[0].mxu0
      %v1304 = vadd.f32 0.0, %v1303
      %v1305 = vpop.f32.mrb[0].mxu0
      %1306 = vmatprep.mubr.f32.mxu0 0.0
      %1307 = vmatmul.mubr.f32.gmra.mrb[0].mxu0 %v1170
      %v1308 = vpop.f32.mrb[0].mxu0
      %v1309 = vadd.f32 0.0, %v1308
      %v1310 = vpop.f32.mrb[0].mxu0
      %1311 = vmatprep.mubr.f32.mxu0 0.0
      %1312 = vmatmul.mubr.f32.gmra.mrb[0].mxu0 %v1171
      %v1313 = vpop.f32.mrb[0].mxu0
      %v1314 = vadd.f32 0.0, %v1313
      %v1315 = vpop.f32.mrb[0].mxu0
      %1316 = vmatprep.mubr.f32.mxu0 0.0
      %1317 = vmatmul.mubr.f32.gmra.mrb[0].mxu0 %v1172
      %v1318 = vpop.f32.mrb[0].mxu0
      %v1319 = vadd.f32 0.0, %v1318
      %v1320 = vpop.f32.mrb[0].mxu0
      %1321 = vmatprep.mubr.f32.mxu0 0.0
      %1322 = vmatmul.mubr.f32.gmra.mrb[0].mxu0 %v1173
      %v1323 = vpop.f32.mrb[0].mxu0
      %v1324 = vadd.f32 0.0, %v1323
      %v1325 = vpop.f32.mrb[0].mxu0
      %1326 = vmatprep.mubr.f32.mxu0 0.0
      %1327 = vmatmul.mubr.f32.gmra.mrb[0].mxu0 %v1174
      %v1328 = vpop.f32.mrb[0].mxu0
      %v1329 = vadd.f32 0.0, %v1328
      %v1330 = vpop.f32.mrb[0].mxu0
      %1331 = vmatprep.mubr.f32.mxu0 0.0
      %1332 = vmatmul.mubr.f32.gmra.mrb[0].mxu0 %v1175
      %v1333 = vpop.f32.mrb[0].mxu0
      %v1334 = vadd.f32 0.0, %v1333
      %v1335 = vpop.f32.mrb[0].mxu0
      %1336 = vmatprep.mubr.f32.mxu0 0.0
      %1337 = vmatmul.mubr.f32.gmra.mrb[0].mxu0 %v1176
      %v1338 = vpop.f32.mrb[0].mxu0
      %v1339 = vadd.f32 0.0, %v1338
      %v1340 = vpop.f32.mrb[0].mxu0
      %1341 = vmatprep.mubr.f32.mxu0 0.0
      %1342 = vmatmul.mubr.f32.gmra.mrb[0].mxu0 %v1177
      %v1343 = vpop.f32.mrb[0].mxu0
      %v1344 = vadd.f32 0.0, %v1343
      %v1345 = vpop.f32.mrb[0].mxu0
      %1346 = vmatprep.mubr.f32.mxu0 0.0
      %1347 = vmatmul.mubr.f32.gmra.mrb[0].mxu0 %v1178
      %v1348 = vpop.f32.mrb[0].mxu0
      %v1349 = vadd.f32 0.0, %v1348
      %v1350 = vpop.f32.mrb[0].mxu0
      %1351 = vmatprep.mubr.f32.mxu0 0.0
      %1352 = vmatmul.mubr.f32.gmra.mrb[0].mxu0 %v1179
      %v1353 = vpop.f32.mrb[0].mxu0
      %v1354 = vadd.f32 0.0, %v1353
      %v1355 = vpop.f32.mrb[0].mxu0
      %1356 = vmatprep.mubr.f32.mxu0 0.0
      %1357 = vmatmul.mubr.f32.gmra.mrb[0].mxu0 %v1180
      %v1358 = vpop.f32.mrb[0].mxu0
      %v1359 = vadd.f32 0.0, %v1358
      %v1360 = vpop.f32.mrb[0].mxu0
      %1361 = vmatprep.mubr.f32.mxu0 0.0
      %1362 = vmatmul.mubr.f32.gmra.mrb[0].mxu0 %v1181
      %v1363 = vpop.f32.mrb[0].mxu0
      %v1364 = vadd.f32 0.0, %v1363
      %v1365 = vpop.f32.mrb[0].mxu0
      %1366 = vmatprep.mubr.f32.mxu0 0.0
      %1367 = vmatmul.mubr.f32.gmra.mrb[0].mxu0 %v1182
      %v1368 = vpop.f32.mrb[0].mxu0
      %v1369 = vadd.f32 0.0, %v1368
      %v1370 = vpop.f32.mrb[0].mxu0
      %1371 = vmatprep.mubr.f32.mxu0 0.0
      %1372 = vmatmul.mubr.f32.gmra.mrb[0].mxu0 %v1183
      %v1373 = vpop.f32.mrb[0].mxu0
      %v1374 = vadd.f32 0.0, %v1373
      %v1375 = vpop.f32.mrb[0].mxu0
      %1376 = vmatprep.mubr.f32.mxu0 0.0
      %1377 = vmatmul.mubr.f32.gmra.mrb[0].mxu0 %v1184
      %v1378 = vpop.f32.mrb[0].mxu0
      %v1379 = vadd.f32 0.0, %v1378
      %v1380 = vpop.f32.mrb[0].mxu0
      %1381 = vmatprep.mubr.f32.mxu0 0.0
      %1382 = vmatmul.mubr.f32.gmra.mrb[0].mxu0 %v1185
      %v1383 = vpop.f32.mrb[0].mxu0
      %v1384 = vadd.f32 0.0, %v1383
      %v1385 = vpop.f32.mrb[0].mxu0
      %1386 = vmatprep.mubr.f32.mxu0 0.0
      %1387 = vmatmul.mubr.f32.gmra.mrb[0].mxu0 %v1186
      %v1388 = vpop.f32.mrb[0].mxu0
      %v1389 = vadd.f32 0.0, %v1388
      %v1390 = vpop.f32.mrb[0].mxu0
      %1391 = vmatprep.mubr.f32.mxu0 0.0
      %1392 = vmatmul.mubr.f32.gmra.mrb[0].mxu0 %v1187
      %v1393 = vpop.f32.mrb[0].mxu0
      %v1394 = vadd.f32 0.0, %v1393
      %v1395 = vpop.f32.mrb[0].mxu0
      %1396 = vmatprep.mubr.f32.mxu0 0.0
      %1397 = vmatmul.mubr.f32.gmra.mrb[0].mxu0 %v1188
      %v1398 = vpop.f32.mrb[0].mxu0
      %v1399 = vadd.f32 0.0, %v1398
      %v1400 = vpop.f32.mrb[0].mxu0
      %1401 = vmatprep.mubr.f32.mxu0 0.0
      %1402 = vmatmul.mubr.f32.gmra.mrb[0].mxu0 %v1189
      %v1403 = vpop.f32.mrb[0].mxu0
      %v1404 = vadd.f32 0.0, %v1403
      %v1405 = vpop.f32.mrb[0].mxu0
      %1406 = vmatprep.mubr.f32.mxu0 0.0
      %1407 = vmatmul.mubr.f32.gmra.mrb[0].mxu0 %v1190
      %v1408 = vpop.f32.mrb[0].mxu0
      %v1409 = vadd.f32 0.0, %v1408
      %v1410 = vpop.f32.mrb[0].mxu0
      %1411 = vmatprep.mubr.f32.mxu0 0.0
      %1412 = vmatmul.mubr.f32.gmra.mrb[0].mxu0 %v1191
      %v1413 = vpop.f32.mrb[0].mxu0
      %v1414 = vadd.f32 0.0, %v1413
      %v1415 = vpop.f32.mrb[0].mxu0
      %1416 = vdwg.mxu0
      %v1418 = vlaneseq
      %v1419 = vshrl.u32 %v1418, 7
      %v1420 = vsub.s32 0, %v1419
      %v1421 = vrot.slane %v439, %v1420
      %1423 = vmatprep.subr.mxu0 0.0
      %1424 = vmatpush1.msra.mxu0 %v1259
      %1425 = vmatprep.subr.mxu0 0.0
      %1426 = vmatpush1.msra.mxu0 %v1264
      %1427 = vmatprep.subr.mxu0 0.0
      %1428 = vmatpush1.msra.mxu0 %v1269
      %1429 = vmatprep.subr.mxu0 0.0
      %1430 = vmatpush1.msra.mxu0 %v1274
      %1431 = vmatprep.subr.mxu0 0.0
      %1432 = vmatpush1.msra.mxu0 %v1279
      %1433 = vmatprep.subr.mxu0 0.0
      %1434 = vmatpush1.msra.mxu0 %v1284
      %1435 = vmatprep.subr.mxu0 0.0
      %1436 = vmatpush1.msra.mxu0 %v1289
      %1437 = vmatprep.subr.mxu0 0.0
      %1438 = vmatpush1.msra.mxu0 %v1294
      %1439 = vmatprep.subr.mxu0 0.0
      %1440 = vmatpush1.msra.mxu0 %v1299
      %1441 = vmatprep.subr.mxu0 0.0
      %1442 = vmatpush1.msra.mxu0 %v1304
      %1443 = vmatprep.subr.mxu0 0.0
      %1444 = vmatpush1.msra.mxu0 %v1309
      %1445 = vmatprep.subr.mxu0 0.0
      %1446 = vmatpush1.msra.mxu0 %v1314
      %1447 = vmatprep.subr.mxu0 0.0
      %1448 = vmatpush1.msra.mxu0 %v1319
      %1449 = vmatprep.subr.mxu0 0.0
      %1450 = vmatpush1.msra.mxu0 %v1324
      %1451 = vmatprep.subr.mxu0 0.0
      %1452 = vmatpush1.msra.mxu0 %v1329
      %1453 = vmatprep.subr.mxu0 0.0
      %1454 = vmatpush1.msra.mxu0 %v1334
      %1455 = vmatprep.subr.mxu0 0.0
      %1456 = vmatpush1.msra.mxu0 %v1339
      %1457 = vmatprep.subr.mxu0 0.0
      %1458 = vmatpush1.msra.mxu0 %v1344
      %1459 = vmatprep.subr.mxu0 0.0
      %1460 = vmatpush1.msra.mxu0 %v1349
      %1461 = vmatprep.subr.mxu0 0.0
      %1462 = vmatpush1.msra.mxu0 %v1354
      %1463 = vmatprep.subr.mxu0 0.0
      %1464 = vmatpush1.msra.mxu0 %v1359
      %1465 = vmatprep.subr.mxu0 0.0
      %1466 = vmatpush1.msra.mxu0 %v1364
      %1467 = vmatprep.subr.mxu0 0.0
      %1468 = vmatpush1.msra.mxu0 %v1369
      %1469 = vmatprep.subr.mxu0 0.0
      %1470 = vmatpush1.msra.mxu0 %v1374
      %1471 = vmatprep.subr.mxu0 0.0
      %1472 = vmatpush1.msra.mxu0 %v1379
      %1473 = vmatprep.subr.mxu0 0.0
      %1474 = vmatpush1.msra.mxu0 %v1384
      %1475 = vmatprep.subr.mxu0 0.0
      %1476 = vmatpush1.msra.mxu0 %v1389
      %1477 = vmatprep.subr.mxu0 0.0
      %1478 = vmatpush1.msra.mxu0 %v1394
      %1479 = vmatprep.subr.mxu0 0.0
      %1480 = vmatpush1.msra.mxu0 %v1399
      %1481 = vmatprep.subr.mxu0 0.0
      %1482 = vmatpush1.msra.mxu0 %v1404
      %1483 = vmatprep.subr.mxu0 0.0
      %1484 = vmatpush1.msra.mxu0 %v1409
      %1485 = vmatprep.subr.mxu0 0.0
      %1486 = vmatpush1.msra.mxu0 %v1414
      %1487 = vmatprep.mubr.f32.mxu0 %v325
      %1488 = vmatmul.mubr.f32.gmra.mrb[0].mxu0 %v324
      %v1489 = vpop.f32.mrb[0].mxu0
      %v1490 = vadd.f32 %v1421, %v1489
      %v1491 = vpop.f32.mrb[0].mxu0
      %1492 = vmatprep.mubr.f32.mxu0 %v327
      %1493 = vmatmul.mubr.f32.gmra.mrb[0].mxu0 %v326
      %v1494 = vpop.f32.mrb[0].mxu0
      %v1495 = vadd.f32 %v1421, %v1494
      %v1496 = vpop.f32.mrb[0].mxu0
      %1497 = vmatprep.mubr.f32.mxu0 %v329
      %1498 = vmatmul.mubr.f32.gmra.mrb[0].mxu0 %v328
      %v1499 = vpop.f32.mrb[0].mxu0
      %v1500 = vadd.f32 %v1421, %v1499
      %v1501 = vpop.f32.mrb[0].mxu0
      %1502 = vmatprep.mubr.f32.mxu0 %v331
      %1503 = vmatmul.mubr.f32.gmra.mrb[0].mxu0 %v330
      %v1504 = vpop.f32.mrb[0].mxu0
      %v1505 = vadd.f32 %v1421, %v1504
      %v1506 = vpop.f32.mrb[0].mxu0
      %1507 = vmatprep.mubr.f32.mxu0 %v333
      %1508 = vmatmul.mubr.f32.gmra.mrb[0].mxu0 %v332
      %v1509 = vpop.f32.mrb[0].mxu0
      %v1510 = vadd.f32 %v1421, %v1509
      %v1511 = vpop.f32.mrb[0].mxu0
      %1512 = vmatprep.mubr.f32.mxu0 %v335
      %1513 = vmatmul.mubr.f32.gmra.mrb[0].mxu0 %v334
      %v1514 = vpop.f32.mrb[0].mxu0
      %v1515 = vadd.f32 %v1421, %v1514
      %v1516 = vpop.f32.mrb[0].mxu0
      %1517 = vmatprep.mubr.f32.mxu0 %v337
      %1518 = vmatmul.mubr.f32.gmra.mrb[0].mxu0 %v336
      %v1519 = vpop.f32.mrb[0].mxu0
      %v1520 = vadd.f32 %v1421, %v1519
      %v1521 = vpop.f32.mrb[0].mxu0
      %1522 = vmatprep.mubr.f32.mxu0 %v339
      %1523 = vmatmul.mubr.f32.gmra.mrb[0].mxu0 %v338
      %v1524 = vpop.f32.mrb[0].mxu0
      %v1525 = vadd.f32 %v1421, %v1524
      %v1526 = vpop.f32.mrb[0].mxu0
      %1527 = vmatprep.mubr.f32.mxu0 %v341
      %1528 = vmatmul.mubr.f32.gmra.mrb[0].mxu0 %v340
      %v1529 = vpop.f32.mrb[0].mxu0
      %v1530 = vadd.f32 %v1421, %v1529
      %v1531 = vpop.f32.mrb[0].mxu0
      %1532 = vmatprep.mubr.f32.mxu0 %v343
      %1533 = vmatmul.mubr.f32.gmra.mrb[0].mxu0 %v342
      %v1534 = vpop.f32.mrb[0].mxu0
      %v1535 = vadd.f32 %v1421, %v1534
      %v1536 = vpop.f32.mrb[0].mxu0
      %1537 = vmatprep.mubr.f32.mxu0 %v345
      %1538 = vmatmul.mubr.f32.gmra.mrb[0].mxu0 %v344
      %v1539 = vpop.f32.mrb[0].mxu0
      %v1540 = vadd.f32 %v1421, %v1539
      %v1541 = vpop.f32.mrb[0].mxu0
      %1542 = vmatprep.mubr.f32.mxu0 %v347
      %1543 = vmatmul.mubr.f32.gmra.mrb[0].mxu0 %v346
      %v1544 = vpop.f32.mrb[0].mxu0
      %v1545 = vadd.f32 %v1421, %v1544
      %v1546 = vpop.f32.mrb[0].mxu0
      %1547 = vmatprep.mubr.f32.mxu0 %v349
      %1548 = vmatmul.mubr.f32.gmra.mrb[0].mxu0 %v348
      %v1549 = vpop.f32.mrb[0].mxu0
      %v1550 = vadd.f32 %v1421, %v1549
      %v1551 = vpop.f32.mrb[0].mxu0
      %1552 = vmatprep.mubr.f32.mxu0 %v351
      %1553 = vmatmul.mubr.f32.gmra.mrb[0].mxu0 %v350
      %v1554 = vpop.f32.mrb[0].mxu0
      %v1555 = vadd.f32 %v1421, %v1554
      %v1556 = vpop.f32.mrb[0].mxu0
      %1557 = vmatprep.mubr.f32.mxu0 %v353
      %1558 = vmatmul.mubr.f32.gmra.mrb[0].mxu0 %v352
      %v1559 = vpop.f32.mrb[0].mxu0
      %v1560 = vadd.f32 %v1421, %v1559
      %v1561 = vpop.f32.mrb[0].mxu0
      %1562 = vmatprep.mubr.f32.mxu0 %v355
      %1563 = vmatmul.mubr.f32.gmra.mrb[0].mxu0 %v354
      %v1564 = vpop.f32.mrb[0].mxu0
      %v1565 = vadd.f32 %v1421, %v1564
      %v1566 = vpop.f32.mrb[0].mxu0
      %1567 = vmatprep.mubr.f32.mxu0 %v357
      %1568 = vmatmul.mubr.f32.gmra.mrb[0].mxu0 %v356
      %v1569 = vpop.f32.mrb[0].mxu0
      %v1570 = vadd.f32 %v1421, %v1569
      %v1571 = vpop.f32.mrb[0].mxu0
      %1572 = vmatprep.mubr.f32.mxu0 %v359
      %1573 = vmatmul.mubr.f32.gmra.mrb[0].mxu0 %v358
      %v1574 = vpop.f32.mrb[0].mxu0
      %v1575 = vadd.f32 %v1421, %v1574
      %v1576 = vpop.f32.mrb[0].mxu0
      %1577 = vmatprep.mubr.f32.mxu0 %v361
      %1578 = vmatmul.mubr.f32.gmra.mrb[0].mxu0 %v360
      %v1579 = vpop.f32.mrb[0].mxu0
      %v1580 = vadd.f32 %v1421, %v1579
      %v1581 = vpop.f32.mrb[0].mxu0
      %1582 = vmatprep.mubr.f32.mxu0 %v363
      %1583 = vmatmul.mubr.f32.gmra.mrb[0].mxu0 %v362
      %v1584 = vpop.f32.mrb[0].mxu0
      %v1585 = vadd.f32 %v1421, %v1584
      %v1586 = vpop.f32.mrb[0].mxu0
      %1587 = vmatprep.mubr.f32.mxu0 %v365
      %1588 = vmatmul.mubr.f32.gmra.mrb[0].mxu0 %v364
      %v1589 = vpop.f32.mrb[0].mxu0
      %v1590 = vadd.f32 %v1421, %v1589
      %v1591 = vpop.f32.mrb[0].mxu0
      %1592 = vmatprep.mubr.f32.mxu0 %v367
      %1593 = vmatmul.mubr.f32.gmra.mrb[0].mxu0 %v366
      %v1594 = vpop.f32.mrb[0].mxu0
      %v1595 = vadd.f32 %v1421, %v1594
      %v1596 = vpop.f32.mrb[0].mxu0
      %1597 = vmatprep.mubr.f32.mxu0 %v369
      %1598 = vmatmul.mubr.f32.gmra.mrb[0].mxu0 %v368
      %v1599 = vpop.f32.mrb[0].mxu0
      %v1600 = vadd.f32 %v1421, %v1599
      %v1601 = vpop.f32.mrb[0].mxu0
      %1602 = vmatprep.mubr.f32.mxu0 %v371
      %1603 = vmatmul.mubr.f32.gmra.mrb[0].mxu0 %v370
      %v1604 = vpop.f32.mrb[0].mxu0
      %v1605 = vadd.f32 %v1421, %v1604
      %v1606 = vpop.f32.mrb[0].mxu0
      %1607 = vmatprep.mubr.f32.mxu0 %v373
      %1608 = vmatmul.mubr.f32.gmra.mrb[0].mxu0 %v372
      %v1609 = vpop.f32.mrb[0].mxu0
      %v1610 = vadd.f32 %v1421, %v1609
      %v1611 = vpop.f32.mrb[0].mxu0
      %1612 = vmatprep.mubr.f32.mxu0 %v375
      %1613 = vmatmul.mubr.f32.gmra.mrb[0].mxu0 %v374
      %v1614 = vpop.f32.mrb[0].mxu0
      %v1615 = vadd.f32 %v1421, %v1614
      %v1616 = vpop.f32.mrb[0].mxu0
      %1617 = vmatprep.mubr.f32.mxu0 %v377
      %1618 = vmatmul.mubr.f32.gmra.mrb[0].mxu0 %v376
      %v1619 = vpop.f32.mrb[0].mxu0
      %v1620 = vadd.f32 %v1421, %v1619
      %v1621 = vpop.f32.mrb[0].mxu0
      %1622 = vmatprep.mubr.f32.mxu0 %v379
      %1623 = vmatmul.mubr.f32.gmra.mrb[0].mxu0 %v378
      %v1624 = vpop.f32.mrb[0].mxu0
      %v1625 = vadd.f32 %v1421, %v1624
      %v1626 = vpop.f32.mrb[0].mxu0
      %1627 = vmatprep.mubr.f32.mxu0 %v381
      %1628 = vmatmul.mubr.f32.gmra.mrb[0].mxu0 %v380
      %v1629 = vpop.f32.mrb[0].mxu0
      %v1630 = vadd.f32 %v1421, %v1629
      %v1631 = vpop.f32.mrb[0].mxu0
      %1632 = vmatprep.mubr.f32.mxu0 %v383
      %1633 = vmatmul.mubr.f32.gmra.mrb[0].mxu0 %v382
      %v1634 = vpop.f32.mrb[0].mxu0
      %v1635 = vadd.f32 %v1421, %v1634
      %v1636 = vpop.f32.mrb[0].mxu0
      %1637 = vmatprep.mubr.f32.mxu0 %v385
      %1638 = vmatmul.mubr.f32.gmra.mrb[0].mxu0 %v384
      %v1639 = vpop.f32.mrb[0].mxu0
      %v1640 = vadd.f32 %v1421, %v1639
      %v1641 = vpop.f32.mrb[0].mxu0
      %1642 = vmatprep.mubr.f32.mxu0 %v387
      %1643 = vmatmul.mubr.f32.gmra.mrb[0].mxu0 %v386
      %v1644 = vpop.f32.mrb[0].mxu0
      %v1645 = vadd.f32 %v1421, %v1644
      %v1646 = vpop.f32.mrb[0].mxu0
      %1647 = vdwg.mxu0
      %v1648 = vmax.f32 %v1490, 0.0
      %v1649 = vmax.f32 %v1495, 0.0
      %v1650 = vmax.f32 %v1500, 0.0
      %v1651 = vmax.f32 %v1505, 0.0
      %v1652 = vmax.f32 %v1510, 0.0
      %v1653 = vmax.f32 %v1515, 0.0
      %v1654 = vmax.f32 %v1520, 0.0
      %v1655 = vmax.f32 %v1525, 0.0
      %v1656 = vmax.f32 %v1530, 0.0
      %v1657 = vmax.f32 %v1535, 0.0
      %v1658 = vmax.f32 %v1540, 0.0
      %v1659 = vmax.f32 %v1545, 0.0
      %v1660 = vmax.f32 %v1550, 0.0
      %v1661 = vmax.f32 %v1555, 0.0
      %v1662 = vmax.f32 %v1560, 0.0
      %v1663 = vmax.f32 %v1565, 0.0
      %v1664 = vmax.f32 %v1570, 0.0
      %v1665 = vmax.f32 %v1575, 0.0
      %v1666 = vmax.f32 %v1580, 0.0
      %v1667 = vmax.f32 %v1585, 0.0
      %v1668 = vmax.f32 %v1590, 0.0
      %v1669 = vmax.f32 %v1595, 0.0
      %v1670 = vmax.f32 %v1600, 0.0
      %v1671 = vmax.f32 %v1605, 0.0
      %v1672 = vmax.f32 %v1610, 0.0
      %v1673 = vmax.f32 %v1615, 0.0
      %v1674 = vmax.f32 %v1620, 0.0
      %v1675 = vmax.f32 %v1625, 0.0
      %v1676 = vmax.f32 %v1630, 0.0
      %v1677 = vmax.f32 %v1635, 0.0
      %v1678 = vmax.f32 %v1640, 0.0
      %v1679 = vmax.f32 %v1645, 0.0
      %1680 = vmatprep.subr.mxu0 %v406
      %1681 = vmatpush1.msra.mxu0 %v405
      %1682 = vmatprep.subr.mxu0 %v408
      %1683 = vmatpush1.msra.mxu0 %v407
      %1684 = vmatprep.subr.mxu0 %v410
      %1685 = vmatpush1.msra.mxu0 %v409
      %1686 = vmatprep.subr.mxu0 %v412
      %1687 = vmatpush1.msra.mxu0 %v411
      %1688 = vmatprep.subr.mxu0 %v414
      %1689 = vmatpush1.msra.mxu0 %v413
      %1690 = vmatprep.subr.mxu0 %v416
      %1691 = vmatpush1.msra.mxu0 %v415
      %1692 = vmatprep.subr.mxu0 %v418
      %1693 = vmatpush1.msra.mxu0 %v417
      %1694 = vmatprep.subr.mxu0 %v420
      %1695 = vmatpush1.msra.mxu0 %v419
      %1696 = vmatprep.subr.mxu0 %v422
      %1697 = vmatpush1.msra.mxu0 %v421
      %1698 = vmatprep.subr.mxu0 %v424
      %1699 = vmatpush1.msra.mxu0 %v423
      %1700 = vmatprep.subr.mxu0 %v426
      %1701 = vmatpush1.msra.mxu0 %v425
      %1702 = vmatprep.subr.mxu0 %v428
      %1703 = vmatpush1.msra.mxu0 %v427
      %1704 = vmatprep.subr.mxu0 %v430
      %1705 = vmatpush1.msra.mxu0 %v429
      %1706 = vmatprep.subr.mxu0 %v432
      %1707 = vmatpush1.msra.mxu0 %v431
      %1708 = vmatprep.subr.mxu0 %v434
      %1709 = vmatpush1.msra.mxu0 %v433
      %1710 = vmatprep.subr.mxu0 %v436
      %1711 = vmatpush1.msra.mxu0 %v435
      %1712 = vmatprep.subr.mxu0 0.0
      %1713 = vmatpush1.msra.mxu0 0.0
      %1714 = vmatprep.subr.mxu0 0.0
      %1715 = vmatpush1.msra.mxu0 0.0
      %1716 = vmatprep.subr.mxu0 0.0
      %1717 = vmatpush1.msra.mxu0 0.0
      %1718 = vmatprep.subr.mxu0 0.0
      %1719 = vmatpush1.msra.mxu0 0.0
      %1720 = vmatprep.subr.mxu0 0.0
      %1721 = vmatpush1.msra.mxu0 0.0
      %1722 = vmatprep.subr.mxu0 0.0
      %1723 = vmatpush1.msra.mxu0 0.0
      %1724 = vmatprep.subr.mxu0 0.0
      %1725 = vmatpush1.msra.mxu0 0.0
      %1726 = vmatprep.subr.mxu0 0.0
      %1727 = vmatpush1.msra.mxu0 0.0
      %1728 = vmatprep.subr.mxu0 0.0
      %1729 = vmatpush1.msra.mxu0 0.0
      %1730 = vmatprep.subr.mxu0 0.0
      %1731 = vmatpush1.msra.mxu0 0.0
      %1732 = vmatprep.subr.mxu0 0.0
      %1733 = vmatpush1.msra.mxu0 0.0
      %1734 = vmatprep.subr.mxu0 0.0
      %1735 = vmatpush1.msra.mxu0 0.0
      %1736 = vmatprep.subr.mxu0 0.0
      %1737 = vmatpush1.msra.mxu0 0.0
      %1738 = vmatprep.subr.mxu0 0.0
      %1739 = vmatpush1.msra.mxu0 0.0
      %1740 = vmatprep.subr.mxu0 0.0
      %1741 = vmatpush1.msra.mxu0 0.0
      %1742 = vmatprep.subr.mxu0 0.0
      %1743 = vmatpush1.msra.mxu0 0.0
      %1744 = vmatprep.mubr.f32.mxu0 0.0
      %1745 = vmatmul.mubr.f32.gmra.mrb[0].mxu0 %v1648
      %v1746 = vpop.f32.mrb[0].mxu0
      %v1747 = vadd.f32 0.0, %v1746
      %v1748 = vpop.f32.mrb[0].mxu0
      %v1749 = vadd.f32 0.0, %v1748
      %1750 = vmatprep.mubr.f32.mxu0 0.0
      %1751 = vmatmul.mubr.f32.gmra.mrb[0].mxu0 %v1649
      %v1752 = vpop.f32.mrb[0].mxu0
      %v1753 = vadd.f32 0.0, %v1752
      %v1754 = vpop.f32.mrb[0].mxu0
      %v1755 = vadd.f32 0.0, %v1754
      %1756 = vmatprep.mubr.f32.mxu0 0.0
      %1757 = vmatmul.mubr.f32.gmra.mrb[0].mxu0 %v1650
      %v1758 = vpop.f32.mrb[0].mxu0
      %v1759 = vadd.f32 0.0, %v1758
      %v1760 = vpop.f32.mrb[0].mxu0
      %v1761 = vadd.f32 0.0, %v1760
      %1762 = vmatprep.mubr.f32.mxu0 0.0
      %1763 = vmatmul.mubr.f32.gmra.mrb[0].mxu0 %v1651
      %v1764 = vpop.f32.mrb[0].mxu0
      %v1765 = vadd.f32 0.0, %v1764
      %v1766 = vpop.f32.mrb[0].mxu0
      %v1767 = vadd.f32 0.0, %v1766
      %1768 = vmatprep.mubr.f32.mxu0 0.0
      %1769 = vmatmul.mubr.f32.gmra.mrb[0].mxu0 %v1652
      %v1770 = vpop.f32.mrb[0].mxu0
      %v1771 = vadd.f32 0.0, %v1770
      %v1772 = vpop.f32.mrb[0].mxu0
      %v1773 = vadd.f32 0.0, %v1772
      %1774 = vmatprep.mubr.f32.mxu0 0.0
      %1775 = vmatmul.mubr.f32.gmra.mrb[0].mxu0 %v1653
      %v1776 = vpop.f32.mrb[0].mxu0
      %v1777 = vadd.f32 0.0, %v1776
      %v1778 = vpop.f32.mrb[0].mxu0
      %v1779 = vadd.f32 0.0, %v1778
      %1780 = vmatprep.mubr.f32.mxu0 0.0
      %1781 = vmatmul.mubr.f32.gmra.mrb[0].mxu0 %v1654
      %v1782 = vpop.f32.mrb[0].mxu0
      %v1783 = vadd.f32 0.0, %v1782
      %v1784 = vpop.f32.mrb[0].mxu0
      %v1785 = vadd.f32 0.0, %v1784
      %1786 = vmatprep.mubr.f32.mxu0 0.0
      %1787 = vmatmul.mubr.f32.gmra.mrb[0].mxu0 %v1655
      %v1788 = vpop.f32.mrb[0].mxu0
      %v1789 = vadd.f32 0.0, %v1788
      %v1790 = vpop.f32.mrb[0].mxu0
      %v1791 = vadd.f32 0.0, %v1790
      %1792 = vmatprep.mubr.f32.mxu0 0.0
      %1793 = vmatmul.mubr.f32.gmra.mrb[0].mxu0 %v1656
      %v1794 = vpop.f32.mrb[0].mxu0
      %v1795 = vadd.f32 0.0, %v1794
      %v1796 = vpop.f32.mrb[0].mxu0
      %v1797 = vadd.f32 0.0, %v1796
      %1798 = vmatprep.mubr.f32.mxu0 0.0
      %1799 = vmatmul.mubr.f32.gmra.mrb[0].mxu0 %v1657
      %v1800 = vpop.f32.mrb[0].mxu0
      %v1801 = vadd.f32 0.0, %v1800
      %v1802 = vpop.f32.mrb[0].mxu0
      %v1803 = vadd.f32 0.0, %v1802
      %1804 = vmatprep.mubr.f32.mxu0 0.0
      %1805 = vmatmul.mubr.f32.gmra.mrb[0].mxu0 %v1658
      %v1806 = vpop.f32.mrb[0].mxu0
      %v1807 = vadd.f32 0.0, %v1806
      %v1808 = vpop.f32.mrb[0].mxu0
      %v1809 = vadd.f32 0.0, %v1808
      %1810 = vmatprep.mubr.f32.mxu0 0.0
      %1811 = vmatmul.mubr.f32.gmra.mrb[0].mxu0 %v1659
      %v1812 = vpop.f32.mrb[0].mxu0
      %v1813 = vadd.f32 0.0, %v1812
      %v1814 = vpop.f32.mrb[0].mxu0
      %v1815 = vadd.f32 0.0, %v1814
      %1816 = vmatprep.mubr.f32.mxu0 0.0
      %1817 = vmatmul.mubr.f32.gmra.mrb[0].mxu0 %v1660
      %v1818 = vpop.f32.mrb[0].mxu0
      %v1819 = vadd.f32 0.0, %v1818
      %v1820 = vpop.f32.mrb[0].mxu0
      %v1821 = vadd.f32 0.0, %v1820
      %1822 = vmatprep.mubr.f32.mxu0 0.0
      %1823 = vmatmul.mubr.f32.gmra.mrb[0].mxu0 %v1661
      %v1824 = vpop.f32.mrb[0].mxu0
      %v1825 = vadd.f32 0.0, %v1824
      %v1826 = vpop.f32.mrb[0].mxu0
      %v1827 = vadd.f32 0.0, %v1826
      %1828 = vmatprep.mubr.f32.mxu0 0.0
      %1829 = vmatmul.mubr.f32.gmra.mrb[0].mxu0 %v1662
      %v1830 = vpop.f32.mrb[0].mxu0
      %v1831 = vadd.f32 0.0, %v1830
      %v1832 = vpop.f32.mrb[0].mxu0
      %v1833 = vadd.f32 0.0, %v1832
      %1834 = vmatprep.mubr.f32.mxu0 0.0
      %1835 = vmatmul.mubr.f32.gmra.mrb[0].mxu0 %v1663
      %v1836 = vpop.f32.mrb[0].mxu0
      %v1837 = vadd.f32 0.0, %v1836
      %v1838 = vpop.f32.mrb[0].mxu0
      %v1839 = vadd.f32 0.0, %v1838
      %1840 = vmatprep.mubr.f32.mxu0 0.0
      %1841 = vmatmul.mubr.f32.gmra.mrb[0].mxu0 %v1664
      %v1842 = vpop.f32.mrb[0].mxu0
      %v1843 = vadd.f32 0.0, %v1842
      %v1844 = vpop.f32.mrb[0].mxu0
      %v1845 = vadd.f32 0.0, %v1844
      %1846 = vmatprep.mubr.f32.mxu0 0.0
      %1847 = vmatmul.mubr.f32.gmra.mrb[0].mxu0 %v1665
      %v1848 = vpop.f32.mrb[0].mxu0
      %v1849 = vadd.f32 0.0, %v1848
      %v1850 = vpop.f32.mrb[0].mxu0
      %v1851 = vadd.f32 0.0, %v1850
      %1852 = vmatprep.mubr.f32.mxu0 0.0
      %1853 = vmatmul.mubr.f32.gmra.mrb[0].mxu0 %v1666
      %v1854 = vpop.f32.mrb[0].mxu0
      %v1855 = vadd.f32 0.0, %v1854
      %v1856 = vpop.f32.mrb[0].mxu0
      %v1857 = vadd.f32 0.0, %v1856
      %1858 = vmatprep.mubr.f32.mxu0 0.0
      %1859 = vmatmul.mubr.f32.gmra.mrb[0].mxu0 %v1667
      %v1860 = vpop.f32.mrb[0].mxu0
      %v1861 = vadd.f32 0.0, %v1860
      %v1862 = vpop.f32.mrb[0].mxu0
      %v1863 = vadd.f32 0.0, %v1862
      %1864 = vmatprep.mubr.f32.mxu0 0.0
      %1865 = vmatmul.mubr.f32.gmra.mrb[0].mxu0 %v1668
      %v1866 = vpop.f32.mrb[0].mxu0
      %v1867 = vadd.f32 0.0, %v1866
      %v1868 = vpop.f32.mrb[0].mxu0
      %v1869 = vadd.f32 0.0, %v1868
      %1870 = vmatprep.mubr.f32.mxu0 0.0
      %1871 = vmatmul.mubr.f32.gmra.mrb[0].mxu0 %v1669
      %v1872 = vpop.f32.mrb[0].mxu0
      %v1873 = vadd.f32 0.0, %v1872
      %v1874 = vpop.f32.mrb[0].mxu0
      %v1875 = vadd.f32 0.0, %v1874
      %1876 = vmatprep.mubr.f32.mxu0 0.0
      %1877 = vmatmul.mubr.f32.gmra.mrb[0].mxu0 %v1670
      %v1878 = vpop.f32.mrb[0].mxu0
      %v1879 = vadd.f32 0.0, %v1878
      %v1880 = vpop.f32.mrb[0].mxu0
      %v1881 = vadd.f32 0.0, %v1880
      %1882 = vmatprep.mubr.f32.mxu0 0.0
      %1883 = vmatmul.mubr.f32.gmra.mrb[0].mxu0 %v1671
      %v1884 = vpop.f32.mrb[0].mxu0
      %v1885 = vadd.f32 0.0, %v1884
      %v1886 = vpop.f32.mrb[0].mxu0
      %v1887 = vadd.f32 0.0, %v1886
      %1888 = vmatprep.mubr.f32.mxu0 0.0
      %1889 = vmatmul.mubr.f32.gmra.mrb[0].mxu0 %v1672
      %v1890 = vpop.f32.mrb[0].mxu0
      %v1891 = vadd.f32 0.0, %v1890
      %v1892 = vpop.f32.mrb[0].mxu0
      %v1893 = vadd.f32 0.0, %v1892
      %1894 = vmatprep.mubr.f32.mxu0 0.0
      %1895 = vmatmul.mubr.f32.gmra.mrb[0].mxu0 %v1673
      %v1896 = vpop.f32.mrb[0].mxu0
      %v1897 = vadd.f32 0.0, %v1896
      %v1898 = vpop.f32.mrb[0].mxu0
      %v1899 = vadd.f32 0.0, %v1898
      %1900 = vmatprep.mubr.f32.mxu0 0.0
      %1901 = vmatmul.mubr.f32.gmra.mrb[0].mxu0 %v1674
      %v1902 = vpop.f32.mrb[0].mxu0
      %v1903 = vadd.f32 0.0, %v1902
      %v1904 = vpop.f32.mrb[0].mxu0
      %v1905 = vadd.f32 0.0, %v1904
      %1906 = vmatprep.mubr.f32.mxu0 0.0
      %1907 = vmatmul.mubr.f32.gmra.mrb[0].mxu0 %v1675
      %v1908 = vpop.f32.mrb[0].mxu0
      %v1909 = vadd.f32 0.0, %v1908
      %v1910 = vpop.f32.mrb[0].mxu0
      %v1911 = vadd.f32 0.0, %v1910
      %1912 = vmatprep.mubr.f32.mxu0 0.0
      %1913 = vmatmul.mubr.f32.gmra.mrb[0].mxu0 %v1676
      %v1914 = vpop.f32.mrb[0].mxu0
      %v1915 = vadd.f32 0.0, %v1914
      %v1916 = vpop.f32.mrb[0].mxu0
      %v1917 = vadd.f32 0.0, %v1916
      %1918 = vmatprep.mubr.f32.mxu0 0.0
      %1919 = vmatmul.mubr.f32.gmra.mrb[0].mxu0 %v1677
      %v1920 = vpop.f32.mrb[0].mxu0
      %v1921 = vadd.f32 0.0, %v1920
      %v1922 = vpop.f32.mrb[0].mxu0
      %v1923 = vadd.f32 0.0, %v1922
      %1924 = vmatprep.mubr.f32.mxu0 0.0
      %1925 = vmatmul.mubr.f32.gmra.mrb[0].mxu0 %v1678
      %v1926 = vpop.f32.mrb[0].mxu0
      %v1927 = vadd.f32 0.0, %v1926
      %v1928 = vpop.f32.mrb[0].mxu0
      %v1929 = vadd.f32 0.0, %v1928
      %1930 = vmatprep.mubr.f32.mxu0 0.0
      %1931 = vmatmul.mubr.f32.gmra.mrb[0].mxu0 %v1679
      %v1932 = vpop.f32.mrb[0].mxu0
      %v1933 = vadd.f32 0.0, %v1932
      %v1934 = vpop.f32.mrb[0].mxu0
      %v1935 = vadd.f32 0.0, %v1934
      %1936 = vdwg.mxu0
      %v1938 = vlaneseq
      %v1939 = vshrl.u32 %v1938, 7
      %v1940 = vsub.s32 0, %v1939
      %v1941 = vrot.slane %v440, %v1940
      %v1942 = vlaneseq
      %v1943 = vshrl.u32 %v1942, 7
      %v1944 = vsub.s32 1, %v1943
      %v1945 = vrot.slane %v440, %v1944
      %1948 = vmatprep.subr.mxu0 %v1749
      %1949 = vmatpush1.msra.mxu0 %v1747
      %1950 = vmatprep.subr.mxu0 %v1755
      %1951 = vmatpush1.msra.mxu0 %v1753
      %1952 = vmatprep.subr.mxu0 %v1761
      %1953 = vmatpush1.msra.mxu0 %v1759
      %1954 = vmatprep.subr.mxu0 %v1767
      %1955 = vmatpush1.msra.mxu0 %v1765
      %1956 = vmatprep.subr.mxu0 %v1773
      %1957 = vmatpush1.msra.mxu0 %v1771
      %1958 = vmatprep.subr.mxu0 %v1779
      %1959 = vmatpush1.msra.mxu0 %v1777
      %1960 = vmatprep.subr.mxu0 %v1785
      %1961 = vmatpush1.msra.mxu0 %v1783
      %1962 = vmatprep.subr.mxu0 %v1791
      %1963 = vmatpush1.msra.mxu0 %v1789
      %1964 = vmatprep.subr.mxu0 %v1797
      %1965 = vmatpush1.msra.mxu0 %v1795
      %1966 = vmatprep.subr.mxu0 %v1803
      %1967 = vmatpush1.msra.mxu0 %v1801
      %1968 = vmatprep.subr.mxu0 %v1809
      %1969 = vmatpush1.msra.mxu0 %v1807
      %1970 = vmatprep.subr.mxu0 %v1815
      %1971 = vmatpush1.msra.mxu0 %v1813
      %1972 = vmatprep.subr.mxu0 %v1821
      %1973 = vmatpush1.msra.mxu0 %v1819
      %1974 = vmatprep.subr.mxu0 %v1827
      %1975 = vmatpush1.msra.mxu0 %v1825
      %1976 = vmatprep.subr.mxu0 %v1833
      %1977 = vmatpush1.msra.mxu0 %v1831
      %1978 = vmatprep.subr.mxu0 %v1839
      %1979 = vmatpush1.msra.mxu0 %v1837
      %1980 = vmatprep.subr.mxu0 %v1845
      %1981 = vmatpush1.msra.mxu0 %v1843
      %1982 = vmatprep.subr.mxu0 %v1851
      %1983 = vmatpush1.msra.mxu0 %v1849
      %1984 = vmatprep.subr.mxu0 %v1857
      %1985 = vmatpush1.msra.mxu0 %v1855
      %1986 = vmatprep.subr.mxu0 %v1863
      %1987 = vmatpush1.msra.mxu0 %v1861
      %1988 = vmatprep.subr.mxu0 %v1869
      %1989 = vmatpush1.msra.mxu0 %v1867
      %1990 = vmatprep.subr.mxu0 %v1875
      %1991 = vmatpush1.msra.mxu0 %v1873
      %1992 = vmatprep.subr.mxu0 %v1881
      %1993 = vmatpush1.msra.mxu0 %v1879
      %1994 = vmatprep.subr.mxu0 %v1887
      %1995 = vmatpush1.msra.mxu0 %v1885
      %1996 = vmatprep.subr.mxu0 %v1893
      %1997 = vmatpush1.msra.mxu0 %v1891
      %1998 = vmatprep.subr.mxu0 %v1899
      %1999 = vmatpush1.msra.mxu0 %v1897
      %2000 = vmatprep.subr.mxu0 %v1905
      %2001 = vmatpush1.msra.mxu0 %v1903
      %2002 = vmatprep.subr.mxu0 %v1911
      %2003 = vmatpush1.msra.mxu0 %v1909
      %2004 = vmatprep.subr.mxu0 %v1917
      %2005 = vmatpush1.msra.mxu0 %v1915
      %2006 = vmatprep.subr.mxu0 %v1923
      %2007 = vmatpush1.msra.mxu0 %v1921
      %2008 = vmatprep.subr.mxu0 %v1929
      %2009 = vmatpush1.msra.mxu0 %v1927
      %2010 = vmatprep.subr.mxu0 %v1935
      %2011 = vmatpush1.msra.mxu0 %v1933
      %2012 = vmatprep.mubr.f32.mxu0 %v325
      %2013 = vmatmul.mubr.f32.gmra.mrb[0].mxu0 %v324
      %v2014 = vpop.f32.mrb[0].mxu0
      %v2015 = vadd.f32 %v1941, %v2014
      %v2016 = vpop.f32.mrb[0].mxu0
      %v2017 = vadd.f32 %v1945, %v2016
      %2018 = vmatprep.mubr.f32.mxu0 %v327
      %2019 = vmatmul.mubr.f32.gmra.mrb[0].mxu0 %v326
      %v2020 = vpop.f32.mrb[0].mxu0
      %v2021 = vadd.f32 %v1941, %v2020
      %v2022 = vpop.f32.mrb[0].mxu0
      %v2023 = vadd.f32 %v1945, %v2022
      %2024 = vmatprep.mubr.f32.mxu0 %v329
      %2025 = vmatmul.mubr.f32.gmra.mrb[0].mxu0 %v328
      %v2026 = vpop.f32.mrb[0].mxu0
      %v2027 = vadd.f32 %v1941, %v2026
      %v2028 = vpop.f32.mrb[0].mxu0
      %v2029 = vadd.f32 %v1945, %v2028
      %2030 = vmatprep.mubr.f32.mxu0 %v331
      %2031 = vmatmul.mubr.f32.gmra.mrb[0].mxu0 %v330
      %v2032 = vpop.f32.mrb[0].mxu0
      %v2033 = vadd.f32 %v1941, %v2032
      %v2034 = vpop.f32.mrb[0].mxu0
      %v2035 = vadd.f32 %v1945, %v2034
      %2036 = vmatprep.mubr.f32.mxu0 %v333
      %2037 = vmatmul.mubr.f32.gmra.mrb[0].mxu0 %v332
      %v2038 = vpop.f32.mrb[0].mxu0
      %v2039 = vadd.f32 %v1941, %v2038
      %v2040 = vpop.f32.mrb[0].mxu0
      %v2041 = vadd.f32 %v1945, %v2040
      %2042 = vmatprep.mubr.f32.mxu0 %v335
      %2043 = vmatmul.mubr.f32.gmra.mrb[0].mxu0 %v334
      %v2044 = vpop.f32.mrb[0].mxu0
      %v2045 = vadd.f32 %v1941, %v2044
      %v2046 = vpop.f32.mrb[0].mxu0
      %v2047 = vadd.f32 %v1945, %v2046
      %2048 = vmatprep.mubr.f32.mxu0 %v337
      %2049 = vmatmul.mubr.f32.gmra.mrb[0].mxu0 %v336
      %v2050 = vpop.f32.mrb[0].mxu0
      %v2051 = vadd.f32 %v1941, %v2050
      %v2052 = vpop.f32.mrb[0].mxu0
      %v2053 = vadd.f32 %v1945, %v2052
      %2054 = vmatprep.mubr.f32.mxu0 %v339
      %2055 = vmatmul.mubr.f32.gmra.mrb[0].mxu0 %v338
      %v2056 = vpop.f32.mrb[0].mxu0
      %v2057 = vadd.f32 %v1941, %v2056
      %v2058 = vpop.f32.mrb[0].mxu0
      %v2059 = vadd.f32 %v1945, %v2058
      %2060 = vmatprep.mubr.f32.mxu0 %v341
      %2061 = vmatmul.mubr.f32.gmra.mrb[0].mxu0 %v340
      %v2062 = vpop.f32.mrb[0].mxu0
      %v2063 = vadd.f32 %v1941, %v2062
      %v2064 = vpop.f32.mrb[0].mxu0
      %v2065 = vadd.f32 %v1945, %v2064
      %2066 = vmatprep.mubr.f32.mxu0 %v343
      %2067 = vmatmul.mubr.f32.gmra.mrb[0].mxu0 %v342
      %v2068 = vpop.f32.mrb[0].mxu0
      %v2069 = vadd.f32 %v1941, %v2068
      %v2070 = vpop.f32.mrb[0].mxu0
      %v2071 = vadd.f32 %v1945, %v2070
      %2072 = vmatprep.mubr.f32.mxu0 %v345
      %2073 = vmatmul.mubr.f32.gmra.mrb[0].mxu0 %v344
      %v2074 = vpop.f32.mrb[0].mxu0
      %v2075 = vadd.f32 %v1941, %v2074
      %v2076 = vpop.f32.mrb[0].mxu0
      %v2077 = vadd.f32 %v1945, %v2076
      %2078 = vmatprep.mubr.f32.mxu0 %v347
      %2079 = vmatmul.mubr.f32.gmra.mrb[0].mxu0 %v346
      %v2080 = vpop.f32.mrb[0].mxu0
      %v2081 = vadd.f32 %v1941, %v2080
      %v2082 = vpop.f32.mrb[0].mxu0
      %v2083 = vadd.f32 %v1945, %v2082
      %2084 = vmatprep.mubr.f32.mxu0 %v349
      %2085 = vmatmul.mubr.f32.gmra.mrb[0].mxu0 %v348
      %v2086 = vpop.f32.mrb[0].mxu0
      %v2087 = vadd.f32 %v1941, %v2086
      %v2088 = vpop.f32.mrb[0].mxu0
      %v2089 = vadd.f32 %v1945, %v2088
      %2090 = vmatprep.mubr.f32.mxu0 %v351
      %2091 = vmatmul.mubr.f32.gmra.mrb[0].mxu0 %v350
      %v2092 = vpop.f32.mrb[0].mxu0
      %v2093 = vadd.f32 %v1941, %v2092
      %v2094 = vpop.f32.mrb[0].mxu0
      %v2095 = vadd.f32 %v1945, %v2094
      %2096 = vmatprep.mubr.f32.mxu0 %v353
      %2097 = vmatmul.mubr.f32.gmra.mrb[0].mxu0 %v352
      %v2098 = vpop.f32.mrb[0].mxu0
      %v2099 = vadd.f32 %v1941, %v2098
      %v2100 = vpop.f32.mrb[0].mxu0
      %v2101 = vadd.f32 %v1945, %v2100
      %2102 = vmatprep.mubr.f32.mxu0 %v355
      %2103 = vmatmul.mubr.f32.gmra.mrb[0].mxu0 %v354
      %v2104 = vpop.f32.mrb[0].mxu0
      %v2105 = vadd.f32 %v1941, %v2104
      %v2106 = vpop.f32.mrb[0].mxu0
      %v2107 = vadd.f32 %v1945, %v2106
      %2108 = vmatprep.mubr.f32.mxu0 %v357
      %2109 = vmatmul.mubr.f32.gmra.mrb[0].mxu0 %v356
      %v2110 = vpop.f32.mrb[0].mxu0
      %v2111 = vadd.f32 %v1941, %v2110
      %v2112 = vpop.f32.mrb[0].mxu0
      %v2113 = vadd.f32 %v1945, %v2112
      %2114 = vmatprep.mubr.f32.mxu0 %v359
      %2115 = vmatmul.mubr.f32.gmra.mrb[0].mxu0 %v358
      %v2116 = vpop.f32.mrb[0].mxu0
      %v2117 = vadd.f32 %v1941, %v2116
      %v2118 = vpop.f32.mrb[0].mxu0
      %v2119 = vadd.f32 %v1945, %v2118
      %2120 = vmatprep.mubr.f32.mxu0 %v361
      %2121 = vmatmul.mubr.f32.gmra.mrb[0].mxu0 %v360
      %v2122 = vpop.f32.mrb[0].mxu0
      %v2123 = vadd.f32 %v1941, %v2122
      %v2124 = vpop.f32.mrb[0].mxu0
      %v2125 = vadd.f32 %v1945, %v2124
      %2126 = vmatprep.mubr.f32.mxu0 %v363
      %2127 = vmatmul.mubr.f32.gmra.mrb[0].mxu0 %v362
      %v2128 = vpop.f32.mrb[0].mxu0
      %v2129 = vadd.f32 %v1941, %v2128
      %v2130 = vpop.f32.mrb[0].mxu0
      %v2131 = vadd.f32 %v1945, %v2130
      %2132 = vmatprep.mubr.f32.mxu0 %v365
      %2133 = vmatmul.mubr.f32.gmra.mrb[0].mxu0 %v364
      %v2134 = vpop.f32.mrb[0].mxu0
      %v2135 = vadd.f32 %v1941, %v2134
      %v2136 = vpop.f32.mrb[0].mxu0
      %v2137 = vadd.f32 %v1945, %v2136
      %2138 = vmatprep.mubr.f32.mxu0 %v367
      %2139 = vmatmul.mubr.f32.gmra.mrb[0].mxu0 %v366
      %v2140 = vpop.f32.mrb[0].mxu0
      %v2141 = vadd.f32 %v1941, %v2140
      %v2142 = vpop.f32.mrb[0].mxu0
      %v2143 = vadd.f32 %v1945, %v2142
      %2144 = vmatprep.mubr.f32.mxu0 %v369
      %2145 = vmatmul.mubr.f32.gmra.mrb[0].mxu0 %v368
      %v2146 = vpop.f32.mrb[0].mxu0
      %v2147 = vadd.f32 %v1941, %v2146
      %v2148 = vpop.f32.mrb[0].mxu0
      %v2149 = vadd.f32 %v1945, %v2148
      %2150 = vmatprep.mubr.f32.mxu0 %v371
      %2151 = vmatmul.mubr.f32.gmra.mrb[0].mxu0 %v370
      %v2152 = vpop.f32.mrb[0].mxu0
      %v2153 = vadd.f32 %v1941, %v2152
      %v2154 = vpop.f32.mrb[0].mxu0
      %v2155 = vadd.f32 %v1945, %v2154
      %2156 = vmatprep.mubr.f32.mxu0 %v373
      %2157 = vmatmul.mubr.f32.gmra.mrb[0].mxu0 %v372
      %v2158 = vpop.f32.mrb[0].mxu0
      %v2159 = vadd.f32 %v1941, %v2158
      %v2160 = vpop.f32.mrb[0].mxu0
      %v2161 = vadd.f32 %v1945, %v2160
      %2162 = vmatprep.mubr.f32.mxu0 %v375
      %2163 = vmatmul.mubr.f32.gmra.mrb[0].mxu0 %v374
      %v2164 = vpop.f32.mrb[0].mxu0
      %v2165 = vadd.f32 %v1941, %v2164
      %v2166 = vpop.f32.mrb[0].mxu0
      %v2167 = vadd.f32 %v1945, %v2166
      %2168 = vmatprep.mubr.f32.mxu0 %v377
      %2169 = vmatmul.mubr.f32.gmra.mrb[0].mxu0 %v376
      %v2170 = vpop.f32.mrb[0].mxu0
      %v2171 = vadd.f32 %v1941, %v2170
      %v2172 = vpop.f32.mrb[0].mxu0
      %v2173 = vadd.f32 %v1945, %v2172
      %2174 = vmatprep.mubr.f32.mxu0 %v379
      %2175 = vmatmul.mubr.f32.gmra.mrb[0].mxu0 %v378
      %v2176 = vpop.f32.mrb[0].mxu0
      %v2177 = vadd.f32 %v1941, %v2176
      %v2178 = vpop.f32.mrb[0].mxu0
      %v2179 = vadd.f32 %v1945, %v2178
      %2180 = vmatprep.mubr.f32.mxu0 %v381
      %2181 = vmatmul.mubr.f32.gmra.mrb[0].mxu0 %v380
      %v2182 = vpop.f32.mrb[0].mxu0
      %v2183 = vadd.f32 %v1941, %v2182
      %v2184 = vpop.f32.mrb[0].mxu0
      %v2185 = vadd.f32 %v1945, %v2184
      %2186 = vmatprep.mubr.f32.mxu0 %v383
      %2187 = vmatmul.mubr.f32.gmra.mrb[0].mxu0 %v382
      %v2188 = vpop.f32.mrb[0].mxu0
      %v2189 = vadd.f32 %v1941, %v2188
      %v2190 = vpop.f32.mrb[0].mxu0
      %v2191 = vadd.f32 %v1945, %v2190
      %2192 = vmatprep.mubr.f32.mxu0 %v385
      %2193 = vmatmul.mubr.f32.gmra.mrb[0].mxu0 %v384
      %v2194 = vpop.f32.mrb[0].mxu0
      %v2195 = vadd.f32 %v1941, %v2194
      %v2196 = vpop.f32.mrb[0].mxu0
      %v2197 = vadd.f32 %v1945, %v2196
      %2198 = vmatprep.mubr.f32.mxu0 %v387
      %2199 = vmatmul.mubr.f32.gmra.mrb[0].mxu0 %v386
      %v2200 = vpop.f32.mrb[0].mxu0
      %v2201 = vadd.f32 %v1941, %v2200
      %v2202 = vpop.f32.mrb[0].mxu0
      %v2203 = vadd.f32 %v1945, %v2202
      %2204 = vdwg.mxu0
      %v2205 = vmax.f32 %v2015, 0.0
      %v2206 = vmax.f32 %v2021, 0.0
      %v2207 = vmax.f32 %v2027, 0.0
      %v2208 = vmax.f32 %v2033, 0.0
      %v2209 = vmax.f32 %v2039, 0.0
      %v2210 = vmax.f32 %v2045, 0.0
      %v2211 = vmax.f32 %v2051, 0.0
      %v2212 = vmax.f32 %v2057, 0.0
      %v2213 = vmax.f32 %v2063, 0.0
      %v2214 = vmax.f32 %v2069, 0.0
      %v2215 = vmax.f32 %v2075, 0.0
      %v2216 = vmax.f32 %v2081, 0.0
      %v2217 = vmax.f32 %v2087, 0.0
      %v2218 = vmax.f32 %v2093, 0.0
      %v2219 = vmax.f32 %v2099, 0.0
      %v2220 = vmax.f32 %v2105, 0.0
      %v2221 = vmax.f32 %v2111, 0.0
      %v2222 = vmax.f32 %v2117, 0.0
      %v2223 = vmax.f32 %v2123, 0.0
      %v2224 = vmax.f32 %v2129, 0.0
      %v2225 = vmax.f32 %v2135, 0.0
      %v2226 = vmax.f32 %v2141, 0.0
      %v2227 = vmax.f32 %v2147, 0.0
      %v2228 = vmax.f32 %v2153, 0.0
      %v2229 = vmax.f32 %v2159, 0.0
      %v2230 = vmax.f32 %v2165, 0.0
      %v2231 = vmax.f32 %v2171, 0.0
      %v2232 = vmax.f32 %v2177, 0.0
      %v2233 = vmax.f32 %v2183, 0.0
      %v2234 = vmax.f32 %v2189, 0.0
      %v2235 = vmax.f32 %v2195, 0.0
      %v2236 = vmax.f32 %v2201, 0.0
      %v2237 = vmax.f32 %v2017, 0.0
      %v2238 = vmax.f32 %v2023, 0.0
      %v2239 = vmax.f32 %v2029, 0.0
      %v2240 = vmax.f32 %v2035, 0.0
      %v2241 = vmax.f32 %v2041, 0.0
      %v2242 = vmax.f32 %v2047, 0.0
      %v2243 = vmax.f32 %v2053, 0.0
      %v2244 = vmax.f32 %v2059, 0.0
      %v2245 = vmax.f32 %v2065, 0.0
      %v2246 = vmax.f32 %v2071, 0.0
      %v2247 = vmax.f32 %v2077, 0.0
      %v2248 = vmax.f32 %v2083, 0.0
      %v2249 = vmax.f32 %v2089, 0.0
      %v2250 = vmax.f32 %v2095, 0.0
      %v2251 = vmax.f32 %v2101, 0.0
      %v2252 = vmax.f32 %v2107, 0.0
      %v2253 = vmax.f32 %v2113, 0.0
      %v2254 = vmax.f32 %v2119, 0.0
      %v2255 = vmax.f32 %v2125, 0.0
      %v2256 = vmax.f32 %v2131, 0.0
      %v2257 = vmax.f32 %v2137, 0.0
      %v2258 = vmax.f32 %v2143, 0.0
      %v2259 = vmax.f32 %v2149, 0.0
      %v2260 = vmax.f32 %v2155, 0.0
      %v2261 = vmax.f32 %v2161, 0.0
      %v2262 = vmax.f32 %v2167, 0.0
      %v2263 = vmax.f32 %v2173, 0.0
      %v2264 = vmax.f32 %v2179, 0.0
      %v2265 = vmax.f32 %v2185, 0.0
      %v2266 = vmax.f32 %v2191, 0.0
      %v2267 = vmax.f32 %v2197, 0.0
      %v2268 = vmax.f32 %v2203, 0.0
      %v2269 = vld [vmem:[%s286] sm:$0xff]
      %v2270 = vld [vmem:[%s286 + $0x8] sm:$0xff]
      %v2271 = vld [vmem:[%s286 + $0x10] sm:$0xff]
      %v2272 = vld [vmem:[%s286 + $0x18] sm:$0xff]
      %v2273 = vld [vmem:[%s286 + $0x20] sm:$0xff]
      %v2274 = vld [vmem:[%s286 + $0x28] sm:$0xff]
      %v2275 = vld [vmem:[%s286 + $0x30] sm:$0xff]
      %v2276 = vld [vmem:[%s286 + $0x38] sm:$0xff]
      %v2277 = vld [vmem:[%s286 + $0x40] sm:$0xff]
      %v2278 = vld [vmem:[%s286 + $0x48] sm:$0xff]
      %v2279 = vld [vmem:[%s286 + $0x50] sm:$0xff]
      %v2280 = vld [vmem:[%s286 + $0x58] sm:$0xff]
      %v2281 = vld [vmem:[%s286 + $0x60] sm:$0xff]
      %v2282 = vld [vmem:[%s286 + $0x68] sm:$0xff]
      %v2283 = vld [vmem:[%s286 + $0x70] sm:$0xff]
      %v2284 = vld [vmem:[%s286 + $0x78] sm:$0xff]
      %v2285 = vld [vmem:[%s286 + $0x80] sm:$0xff]
      %v2286 = vld [vmem:[%s286 + $0x88] sm:$0xff]
      %v2287 = vld [vmem:[%s286 + $0x90] sm:$0xff]
      %v2288 = vld [vmem:[%s286 + $0x98] sm:$0xff]
      %v2289 = vld [vmem:[%s286 + $0xa0] sm:$0xff]
      %v2290 = vld [vmem:[%s286 + $0xa8] sm:$0xff]
      %v2291 = vld [vmem:[%s286 + $0xb0] sm:$0xff]
      %v2292 = vld [vmem:[%s286 + $0xb8] sm:$0xff]
      %v2293 = vld [vmem:[%s286 + $0xc0] sm:$0xff]
      %v2294 = vld [vmem:[%s286 + $0xc8] sm:$0xff]
      %v2295 = vld [vmem:[%s286 + $0xd0] sm:$0xff]
      %v2296 = vld [vmem:[%s286 + $0xd8] sm:$0xff]
      %v2297 = vld [vmem:[%s286 + $0xe0] sm:$0xff]
      %v2298 = vld [vmem:[%s286 + $0xe8] sm:$0xff]
      %v2299 = vld [vmem:[%s286 + $0xf0] sm:$0xff]
      %v2300 = vld [vmem:[%s286 + $0xf8] sm:$0xff]
      %v2301 = vmul.f32 %v2237, 1.442695
      %v2302 = vpow.pop %v2301
      %v2303 = vmul.f32 %v2238, 1.442695
      %v2304 = vpow.pop %v2303
      %v2305 = vmul.f32 %v2239, 1.442695
      %v2306 = vpow.pop %v2305
      %v2307 = vmul.f32 %v2240, 1.442695
      %v2308 = vpow.pop %v2307
      %v2309 = vmul.f32 %v2241, 1.442695
      %v2310 = vpow.pop %v2309
      %v2311 = vmul.f32 %v2242, 1.442695
      %v2312 = vpow.pop %v2311
      %v2313 = vmul.f32 %v2243, 1.442695
      %v2314 = vpow.pop %v2313
      %v2315 = vmul.f32 %v2244, 1.442695
      %v2316 = vpow.pop %v2315
      %v2317 = vmul.f32 %v2245, 1.442695
      %v2318 = vpow.pop %v2317
      %v2319 = vmul.f32 %v2246, 1.442695
      %v2320 = vpow.pop %v2319
      %v2321 = vmul.f32 %v2247, 1.442695
      %v2322 = vpow.pop %v2321
      %v2323 = vmul.f32 %v2248, 1.442695
      %v2324 = vpow.pop %v2323
      %v2325 = vmul.f32 %v2249, 1.442695
      %v2326 = vpow.pop %v2325
      %v2327 = vmul.f32 %v2250, 1.442695
      %v2328 = vpow.pop %v2327
      %v2329 = vmul.f32 %v2251, 1.442695
      %v2330 = vpow.pop %v2329
      %v2331 = vmul.f32 %v2252, 1.442695
      %v2332 = vpow.pop %v2331
      %v2333 = vmul.f32 %v2253, 1.442695
      %v2334 = vpow.pop %v2333
      %v2335 = vmul.f32 %v2254, 1.442695
      %v2336 = vpow.pop %v2335
      %v2337 = vmul.f32 %v2255, 1.442695
      %v2338 = vpow.pop %v2337
      %v2339 = vmul.f32 %v2256, 1.442695
      %v2340 = vpow.pop %v2339
      %v2341 = vmul.f32 %v2257, 1.442695
      %v2342 = vpow.pop %v2341
      %v2343 = vmul.f32 %v2258, 1.442695
      %v2344 = vpow.pop %v2343
      %v2345 = vmul.f32 %v2259, 1.442695
      %v2346 = vpow.pop %v2345
      %v2347 = vmul.f32 %v2260, 1.442695
      %v2348 = vpow.pop %v2347
      %v2349 = vmul.f32 %v2261, 1.442695
      %v2350 = vpow.pop %v2349
      %v2351 = vmul.f32 %v2262, 1.442695
      %v2352 = vpow.pop %v2351
      %v2353 = vmul.f32 %v2263, 1.442695
      %v2354 = vpow.pop %v2353
      %v2355 = vmul.f32 %v2264, 1.442695
      %v2356 = vpow.pop %v2355
      %v2357 = vmul.f32 %v2265, 1.442695
      %v2358 = vpow.pop %v2357
      %v2359 = vmul.f32 %v2266, 1.442695
      %v2360 = vpow.pop %v2359
      %v2361 = vmul.f32 %v2267, 1.442695
      %v2362 = vpow.pop %v2361
      %v2363 = vmul.f32 %v2268, 1.442695
      %v2364 = vpow.pop %v2363
      %v2365 = vmul.f32 %v2269, %v2302
      %v2366 = vmul.f32 %v2270, %v2304
      %v2367 = vmul.f32 %v2271, %v2306
      %v2368 = vmul.f32 %v2272, %v2308
      %v2369 = vmul.f32 %v2273, %v2310
      %v2370 = vmul.f32 %v2274, %v2312
      %v2371 = vmul.f32 %v2275, %v2314
      %v2372 = vmul.f32 %v2276, %v2316
      %v2373 = vmul.f32 %v2277, %v2318
      %v2374 = vmul.f32 %v2278, %v2320
      %v2375 = vmul.f32 %v2279, %v2322
      %v2376 = vmul.f32 %v2280, %v2324
      %v2377 = vmul.f32 %v2281, %v2326
      %v2378 = vmul.f32 %v2282, %v2328
      %v2379 = vmul.f32 %v2283, %v2330
      %v2380 = vmul.f32 %v2284, %v2332
      %v2381 = vmul.f32 %v2285, %v2334
      %v2382 = vmul.f32 %v2286, %v2336
      %v2383 = vmul.f32 %v2287, %v2338
      %v2384 = vmul.f32 %v2288, %v2340
      %v2385 = vmul.f32 %v2289, %v2342
      %v2386 = vmul.f32 %v2290, %v2344
      %v2387 = vmul.f32 %v2291, %v2346
      %v2388 = vmul.f32 %v2292, %v2348
      %v2389 = vmul.f32 %v2293, %v2350
      %v2390 = vmul.f32 %v2294, %v2352
      %v2391 = vmul.f32 %v2295, %v2354
      %v2392 = vmul.f32 %v2296, %v2356
      %v2393 = vmul.f32 %v2297, %v2358
      %v2394 = vmul.f32 %v2298, %v2360
      %v2395 = vmul.f32 %v2299, %v2362
      %v2396 = vmul.f32 %v2300, %v2364
      %v2397 = vadd.f32 %v2365, %v2205
      %v2398 = vadd.f32 %v2366, %v2206
      %v2399 = vadd.f32 %v2367, %v2207
      %v2400 = vadd.f32 %v2368, %v2208
      %v2401 = vadd.f32 %v2369, %v2209
      %v2402 = vadd.f32 %v2370, %v2210
      %v2403 = vadd.f32 %v2371, %v2211
      %v2404 = vadd.f32 %v2372, %v2212
      %v2405 = vadd.f32 %v2373, %v2213
      %v2406 = vadd.f32 %v2374, %v2214
      %v2407 = vadd.f32 %v2375, %v2215
      %v2408 = vadd.f32 %v2376, %v2216
      %v2409 = vadd.f32 %v2377, %v2217
      %v2410 = vadd.f32 %v2378, %v2218
      %v2411 = vadd.f32 %v2379, %v2219
      %v2412 = vadd.f32 %v2380, %v2220
      %v2413 = vadd.f32 %v2381, %v2221
      %v2414 = vadd.f32 %v2382, %v2222
      %v2415 = vadd.f32 %v2383, %v2223
      %v2416 = vadd.f32 %v2384, %v2224
      %v2417 = vadd.f32 %v2385, %v2225
      %v2418 = vadd.f32 %v2386, %v2226
      %v2419 = vadd.f32 %v2387, %v2227
      %v2420 = vadd.f32 %v2388, %v2228
      %v2421 = vadd.f32 %v2389, %v2229
      %v2422 = vadd.f32 %v2390, %v2230
      %v2423 = vadd.f32 %v2391, %v2231
      %v2424 = vadd.f32 %v2392, %v2232
      %v2425 = vadd.f32 %v2393, %v2233
      %v2426 = vadd.f32 %v2394, %v2234
      %v2427 = vadd.f32 %v2395, %v2235
      %v2428 = vadd.f32 %v2396, %v2236
      %2429 = vmatprep.subr.mxu0 0.0
      %2430 = vmatpush1.xpose.msra.mxu0 %v2397
      %2431 = vmatprep.subr.mxu0 0.0
      %2432 = vmatpush1.xpose.msra.mxu0 %v2398
      %2433 = vmatprep.subr.mxu0 0.0
      %2434 = vmatpush1.xpose.msra.mxu0 %v2399
      %2435 = vmatprep.subr.mxu0 0.0
      %2436 = vmatpush1.xpose.msra.mxu0 %v2400
      %2437 = vmatprep.subr.mxu0 0.0
      %2438 = vmatpush1.xpose.msra.mxu0 %v2401
      %2439 = vmatprep.subr.mxu0 0.0
      %2440 = vmatpush1.xpose.msra.mxu0 %v2402
      %2441 = vmatprep.subr.mxu0 0.0
      %2442 = vmatpush1.xpose.msra.mxu0 %v2403
      %2443 = vmatprep.subr.mxu0 0.0
      %2444 = vmatpush1.xpose.msra.mxu0 %v2404
      %2445 = vmatprep.subr.mxu0 0.0
      %2446 = vmatpush1.xpose.msra.mxu0 %v2405
      %2447 = vmatprep.subr.mxu0 0.0
      %2448 = vmatpush1.xpose.msra.mxu0 %v2406
      %2449 = vmatprep.subr.mxu0 0.0
      %2450 = vmatpush1.xpose.msra.mxu0 %v2407
      %2451 = vmatprep.subr.mxu0 0.0
      %2452 = vmatpush1.xpose.msra.mxu0 %v2408
      %2453 = vmatprep.subr.mxu0 0.0
      %2454 = vmatpush1.xpose.msra.mxu0 %v2409
      %2455 = vmatprep.subr.mxu0 0.0
      %2456 = vmatpush1.xpose.msra.mxu0 %v2410
      %2457 = vmatprep.subr.mxu0 0.0
      %2458 = vmatpush1.xpose.msra.mxu0 %v2411
      %2459 = vmatprep.subr.mxu0 0.0
      %2460 = vmatpush1.xpose.msra.mxu0 %v2412
      %2461 = vmatprep.subr.mxu0 0.0
      %2462 = vmatpush1.xpose.msra.mxu0 %v2413
      %2463 = vmatprep.subr.mxu0 0.0
      %2464 = vmatpush1.xpose.msra.mxu0 %v2414
      %2465 = vmatprep.subr.mxu0 0.0
      %2466 = vmatpush1.xpose.msra.mxu0 %v2415
      %2467 = vmatprep.subr.mxu0 0.0
      %2468 = vmatpush1.xpose.msra.mxu0 %v2416
      %2469 = vmatprep.subr.mxu0 0.0
      %2470 = vmatpush1.xpose.msra.mxu0 %v2417
      %2471 = vmatprep.subr.mxu0 0.0
      %2472 = vmatpush1.xpose.msra.mxu0 %v2418
      %2473 = vmatprep.subr.mxu0 0.0
      %2474 = vmatpush1.xpose.msra.mxu0 %v2419
      %2475 = vmatprep.subr.mxu0 0.0
      %2476 = vmatpush1.xpose.msra.mxu0 %v2420
      %2477 = vmatprep.subr.mxu0 0.0
      %2478 = vmatpush1.xpose.msra.mxu0 %v2421
      %2479 = vmatprep.subr.mxu0 0.0
      %2480 = vmatpush1.xpose.msra.mxu0 %v2422
      %2481 = vmatprep.subr.mxu0 0.0
      %2482 = vmatpush1.xpose.msra.mxu0 %v2423
      %2483 = vmatprep.subr.mxu0 0.0
      %2484 = vmatpush1.xpose.msra.mxu0 %v2424
      %2485 = vmatprep.subr.mxu0 0.0
      %2486 = vmatpush1.xpose.msra.mxu0 %v2425
      %2487 = vmatprep.subr.mxu0 0.0
      %2488 = vmatpush1.xpose.msra.mxu0 %v2426
      %2489 = vmatprep.subr.mxu0 0.0
      %2490 = vmatpush1.xpose.msra.mxu0 %v2427
      %2491 = vmatprep.subr.mxu0 0.0
      %2492 = vmatpush1.xpose.msra.mxu0 %v2428
      %2493 = vmatprep.mubr.f32.mxu0 0.0
      %2494 = vmatmul.mubr.f32.gmra.mrb[0].mxu0 %v2397
      %v2495 = vpop.f32.mrb[0].mxu0
      %v2496 = vadd.f32 0.0, %v2495
      %v2497 = vpop.f32.mrb[0].mxu0
      %v2498 = vadd.f32 0.0, %v2497
      %2499 = vmatprep.mubr.f32.mxu0 0.0
      %2500 = vmatmul.mubr.f32.gmra.mrb[0].mxu0 %v2398
      %v2501 = vpop.f32.mrb[0].mxu0
      %v2502 = vadd.f32 0.0, %v2501
      %v2503 = vpop.f32.mrb[0].mxu0
      %v2504 = vadd.f32 0.0, %v2503
      %2505 = vmatprep.mubr.f32.mxu0 0.0
      %2506 = vmatmul.mubr.f32.gmra.mrb[0].mxu0 %v2399
      %v2507 = vpop.f32.mrb[0].mxu0
      %v2508 = vadd.f32 0.0, %v2507
      %v2509 = vpop.f32.mrb[0].mxu0
      %v2510 = vadd.f32 0.0, %v2509
      %2511 = vmatprep.mubr.f32.mxu0 0.0
      %2512 = vmatmul.mubr.f32.gmra.mrb[0].mxu0 %v2400
      %v2513 = vpop.f32.mrb[0].mxu0
      %v2514 = vadd.f32 0.0, %v2513
      %v2515 = vpop.f32.mrb[0].mxu0
      %v2516 = vadd.f32 0.0, %v2515
      %2517 = vmatprep.mubr.f32.mxu0 0.0
      %2518 = vmatmul.mubr.f32.gmra.mrb[0].mxu0 %v2401
      %v2519 = vpop.f32.mrb[0].mxu0
      %v2520 = vadd.f32 0.0, %v2519
      %v2521 = vpop.f32.mrb[0].mxu0
      %v2522 = vadd.f32 0.0, %v2521
      %2523 = vmatprep.mubr.f32.mxu0 0.0
      %2524 = vmatmul.mubr.f32.gmra.mrb[0].mxu0 %v2402
      %v2525 = vpop.f32.mrb[0].mxu0
      %v2526 = vadd.f32 0.0, %v2525
      %v2527 = vpop.f32.mrb[0].mxu0
      %v2528 = vadd.f32 0.0, %v2527
      %2529 = vmatprep.mubr.f32.mxu0 0.0
      %2530 = vmatmul.mubr.f32.gmra.mrb[0].mxu0 %v2403
      %v2531 = vpop.f32.mrb[0].mxu0
      %v2532 = vadd.f32 0.0, %v2531
      %v2533 = vpop.f32.mrb[0].mxu0
      %v2534 = vadd.f32 0.0, %v2533
      %2535 = vmatprep.mubr.f32.mxu0 0.0
      %2536 = vmatmul.mubr.f32.gmra.mrb[0].mxu0 %v2404
      %v2537 = vpop.f32.mrb[0].mxu0
      %v2538 = vadd.f32 0.0, %v2537
      %v2539 = vpop.f32.mrb[0].mxu0
      %v2540 = vadd.f32 0.0, %v2539
      %2541 = vmatprep.mubr.f32.mxu0 0.0
      %2542 = vmatmul.mubr.f32.gmra.mrb[0].mxu0 %v2405
      %v2543 = vpop.f32.mrb[0].mxu0
      %v2544 = vadd.f32 0.0, %v2543
      %v2545 = vpop.f32.mrb[0].mxu0
      %v2546 = vadd.f32 0.0, %v2545
      %2547 = vmatprep.mubr.f32.mxu0 0.0
      %2548 = vmatmul.mubr.f32.gmra.mrb[0].mxu0 %v2406
      %v2549 = vpop.f32.mrb[0].mxu0
      %v2550 = vadd.f32 0.0, %v2549
      %v2551 = vpop.f32.mrb[0].mxu0
      %v2552 = vadd.f32 0.0, %v2551
      %2553 = vmatprep.mubr.f32.mxu0 0.0
      %2554 = vmatmul.mubr.f32.gmra.mrb[0].mxu0 %v2407
      %v2555 = vpop.f32.mrb[0].mxu0
      %v2556 = vadd.f32 0.0, %v2555
      %v2557 = vpop.f32.mrb[0].mxu0
      %v2558 = vadd.f32 0.0, %v2557
      %2559 = vmatprep.mubr.f32.mxu0 0.0
      %2560 = vmatmul.mubr.f32.gmra.mrb[0].mxu0 %v2408
      %v2561 = vpop.f32.mrb[0].mxu0
      %v2562 = vadd.f32 0.0, %v2561
      %v2563 = vpop.f32.mrb[0].mxu0
      %v2564 = vadd.f32 0.0, %v2563
      %2565 = vmatprep.mubr.f32.mxu0 0.0
      %2566 = vmatmul.mubr.f32.gmra.mrb[0].mxu0 %v2409
      %v2567 = vpop.f32.mrb[0].mxu0
      %v2568 = vadd.f32 0.0, %v2567
      %v2569 = vpop.f32.mrb[0].mxu0
      %v2570 = vadd.f32 0.0, %v2569
      %2571 = vmatprep.mubr.f32.mxu0 0.0
      %2572 = vmatmul.mubr.f32.gmra.mrb[0].mxu0 %v2410
      %v2573 = vpop.f32.mrb[0].mxu0
      %v2574 = vadd.f32 0.0, %v2573
      %v2575 = vpop.f32.mrb[0].mxu0
      %v2576 = vadd.f32 0.0, %v2575
      %2577 = vmatprep.mubr.f32.mxu0 0.0
      %2578 = vmatmul.mubr.f32.gmra.mrb[0].mxu0 %v2411
      %v2579 = vpop.f32.mrb[0].mxu0
      %v2580 = vadd.f32 0.0, %v2579
      %v2581 = vpop.f32.mrb[0].mxu0
      %v2582 = vadd.f32 0.0, %v2581
      %2583 = vmatprep.mubr.f32.mxu0 0.0
      %2584 = vmatmul.mubr.f32.gmra.mrb[0].mxu0 %v2412
      %v2585 = vpop.f32.mrb[0].mxu0
      %v2586 = vadd.f32 0.0, %v2585
      %v2587 = vpop.f32.mrb[0].mxu0
      %v2588 = vadd.f32 0.0, %v2587
      %2589 = vmatprep.mubr.f32.mxu0 0.0
      %2590 = vmatmul.mubr.f32.gmra.mrb[0].mxu0 %v2413
      %v2591 = vpop.f32.mrb[0].mxu0
      %v2592 = vadd.f32 0.0, %v2591
      %v2593 = vpop.f32.mrb[0].mxu0
      %v2594 = vadd.f32 0.0, %v2593
      %2595 = vmatprep.mubr.f32.mxu0 0.0
      %2596 = vmatmul.mubr.f32.gmra.mrb[0].mxu0 %v2414
      %v2597 = vpop.f32.mrb[0].mxu0
      %v2598 = vadd.f32 0.0, %v2597
      %v2599 = vpop.f32.mrb[0].mxu0
      %v2600 = vadd.f32 0.0, %v2599
      %2601 = vmatprep.mubr.f32.mxu0 0.0
      %2602 = vmatmul.mubr.f32.gmra.mrb[0].mxu0 %v2415
      %v2603 = vpop.f32.mrb[0].mxu0
      %v2604 = vadd.f32 0.0, %v2603
      %v2605 = vpop.f32.mrb[0].mxu0
      %v2606 = vadd.f32 0.0, %v2605
      %2607 = vmatprep.mubr.f32.mxu0 0.0
      %2608 = vmatmul.mubr.f32.gmra.mrb[0].mxu0 %v2416
      %v2609 = vpop.f32.mrb[0].mxu0
      %v2610 = vadd.f32 0.0, %v2609
      %v2611 = vpop.f32.mrb[0].mxu0
      %v2612 = vadd.f32 0.0, %v2611
      %2613 = vmatprep.mubr.f32.mxu0 0.0
      %2614 = vmatmul.mubr.f32.gmra.mrb[0].mxu0 %v2417
      %v2615 = vpop.f32.mrb[0].mxu0
      %v2616 = vadd.f32 0.0, %v2615
      %v2617 = vpop.f32.mrb[0].mxu0
      %v2618 = vadd.f32 0.0, %v2617
      %2619 = vmatprep.mubr.f32.mxu0 0.0
      %2620 = vmatmul.mubr.f32.gmra.mrb[0].mxu0 %v2418
      %v2621 = vpop.f32.mrb[0].mxu0
      %v2622 = vadd.f32 0.0, %v2621
      %v2623 = vpop.f32.mrb[0].mxu0
      %v2624 = vadd.f32 0.0, %v2623
      %2625 = vmatprep.mubr.f32.mxu0 0.0
      %2626 = vmatmul.mubr.f32.gmra.mrb[0].mxu0 %v2419
      %v2627 = vpop.f32.mrb[0].mxu0
      %v2628 = vadd.f32 0.0, %v2627
      %v2629 = vpop.f32.mrb[0].mxu0
      %v2630 = vadd.f32 0.0, %v2629
      %2631 = vmatprep.mubr.f32.mxu0 0.0
      %2632 = vmatmul.mubr.f32.gmra.mrb[0].mxu0 %v2420
      %v2633 = vpop.f32.mrb[0].mxu0
      %v2634 = vadd.f32 0.0, %v2633
      %v2635 = vpop.f32.mrb[0].mxu0
      %v2636 = vadd.f32 0.0, %v2635
      %2637 = vmatprep.mubr.f32.mxu0 0.0
      %2638 = vmatmul.mubr.f32.gmra.mrb[0].mxu0 %v2421
      %v2639 = vpop.f32.mrb[0].mxu0
      %v2640 = vadd.f32 0.0, %v2639
      %v2641 = vpop.f32.mrb[0].mxu0
      %v2642 = vadd.f32 0.0, %v2641
      %2643 = vmatprep.mubr.f32.mxu0 0.0
      %2644 = vmatmul.mubr.f32.gmra.mrb[0].mxu0 %v2422
      %v2645 = vpop.f32.mrb[0].mxu0
      %v2646 = vadd.f32 0.0, %v2645
      %v2647 = vpop.f32.mrb[0].mxu0
      %v2648 = vadd.f32 0.0, %v2647
      %2649 = vmatprep.mubr.f32.mxu0 0.0
      %2650 = vmatmul.mubr.f32.gmra.mrb[0].mxu0 %v2423
      %v2651 = vpop.f32.mrb[0].mxu0
      %v2652 = vadd.f32 0.0, %v2651
      %v2653 = vpop.f32.mrb[0].mxu0
      %v2654 = vadd.f32 0.0, %v2653
      %2655 = vmatprep.mubr.f32.mxu0 0.0
      %2656 = vmatmul.mubr.f32.gmra.mrb[0].mxu0 %v2424
      %v2657 = vpop.f32.mrb[0].mxu0
      %v2658 = vadd.f32 0.0, %v2657
      %v2659 = vpop.f32.mrb[0].mxu0
      %v2660 = vadd.f32 0.0, %v2659
      %2661 = vmatprep.mubr.f32.mxu0 0.0
      %2662 = vmatmul.mubr.f32.gmra.mrb[0].mxu0 %v2425
      %v2663 = vpop.f32.mrb[0].mxu0
      %v2664 = vadd.f32 0.0, %v2663
      %v2665 = vpop.f32.mrb[0].mxu0
      %v2666 = vadd.f32 0.0, %v2665
      %2667 = vmatprep.mubr.f32.mxu0 0.0
      %2668 = vmatmul.mubr.f32.gmra.mrb[0].mxu0 %v2426
      %v2669 = vpop.f32.mrb[0].mxu0
      %v2670 = vadd.f32 0.0, %v2669
      %v2671 = vpop.f32.mrb[0].mxu0
      %v2672 = vadd.f32 0.0, %v2671
      %2673 = vmatprep.mubr.f32.mxu0 0.0
      %2674 = vmatmul.mubr.f32.gmra.mrb[0].mxu0 %v2427
      %v2675 = vpop.f32.mrb[0].mxu0
      %v2676 = vadd.f32 0.0, %v2675
      %v2677 = vpop.f32.mrb[0].mxu0
      %v2678 = vadd.f32 0.0, %v2677
      %2679 = vmatprep.mubr.f32.mxu0 0.0
      %2680 = vmatmul.mubr.f32.gmra.mrb[0].mxu0 %v2428
      %v2681 = vpop.f32.mrb[0].mxu0
      %v2682 = vadd.f32 0.0, %v2681
      %v2683 = vpop.f32.mrb[0].mxu0
      %v2684 = vadd.f32 0.0, %v2683
      %2685 = vdwg.mxu0
      %v2686 = vxor.u32 %v2496, 2147483648
      %v2687 = vxor.u32 %v2498, 2147483648
      %v2688 = vxor.u32 %v2502, 2147483648
      %v2689 = vxor.u32 %v2504, 2147483648
      %v2690 = vxor.u32 %v2508, 2147483648
      %v2691 = vxor.u32 %v2510, 2147483648
      %v2692 = vxor.u32 %v2514, 2147483648
      %v2693 = vxor.u32 %v2516, 2147483648
      %v2694 = vxor.u32 %v2520, 2147483648
      %v2695 = vxor.u32 %v2522, 2147483648
      %v2696 = vxor.u32 %v2526, 2147483648
      %v2697 = vxor.u32 %v2528, 2147483648
      %v2698 = vxor.u32 %v2532, 2147483648
      %v2699 = vxor.u32 %v2534, 2147483648
      %v2700 = vxor.u32 %v2538, 2147483648
      %v2701 = vxor.u32 %v2540, 2147483648
      %v2702 = vxor.u32 %v2544, 2147483648
      %v2703 = vxor.u32 %v2546, 2147483648
      %v2704 = vxor.u32 %v2550, 2147483648
      %v2705 = vxor.u32 %v2552, 2147483648
      %v2706 = vxor.u32 %v2556, 2147483648
      %v2707 = vxor.u32 %v2558, 2147483648
      %v2708 = vxor.u32 %v2562, 2147483648
      %v2709 = vxor.u32 %v2564, 2147483648
      %v2710 = vxor.u32 %v2568, 2147483648
      %v2711 = vxor.u32 %v2570, 2147483648
      %v2712 = vxor.u32 %v2574, 2147483648
      %v2713 = vxor.u32 %v2576, 2147483648
      %v2714 = vxor.u32 %v2580, 2147483648
      %v2715 = vxor.u32 %v2582, 2147483648
      %v2716 = vxor.u32 %v2586, 2147483648
      %v2717 = vxor.u32 %v2588, 2147483648
      %v2718 = vxor.u32 %v2592, 2147483648
      %v2719 = vxor.u32 %v2594, 2147483648
      %v2720 = vxor.u32 %v2598, 2147483648
      %v2721 = vxor.u32 %v2600, 2147483648
      %v2722 = vxor.u32 %v2604, 2147483648
      %v2723 = vxor.u32 %v2606, 2147483648
      %v2724 = vxor.u32 %v2610, 2147483648
      %v2725 = vxor.u32 %v2612, 2147483648
      %v2726 = vxor.u32 %v2616, 2147483648
      %v2727 = vxor.u32 %v2618, 2147483648
      %v2728 = vxor.u32 %v2622, 2147483648
      %v2729 = vxor.u32 %v2624, 2147483648
      %v2730 = vxor.u32 %v2628, 2147483648
      %v2731 = vxor.u32 %v2630, 2147483648
      %v2732 = vxor.u32 %v2634, 2147483648
      %v2733 = vxor.u32 %v2636, 2147483648
      %v2734 = vxor.u32 %v2640, 2147483648
      %v2735 = vxor.u32 %v2642, 2147483648
      %v2736 = vxor.u32 %v2646, 2147483648
      %v2737 = vxor.u32 %v2648, 2147483648
      %v2738 = vxor.u32 %v2652, 2147483648
      %v2739 = vxor.u32 %v2654, 2147483648
      %v2740 = vxor.u32 %v2658, 2147483648
      %v2741 = vxor.u32 %v2660, 2147483648
      %v2742 = vxor.u32 %v2664, 2147483648
      %v2743 = vxor.u32 %v2666, 2147483648
      %v2744 = vxor.u32 %v2670, 2147483648
      %v2745 = vxor.u32 %v2672, 2147483648
      %v2746 = vxor.u32 %v2676, 2147483648
      %v2747 = vxor.u32 %v2678, 2147483648
      %v2748 = vxor.u32 %v2682, 2147483648
      %v2749 = vxor.u32 %v2684, 2147483648
      %v2750 = vmul.f32 %v2686, 1.442695
      %v2751 = vpow.pop %v2750
      %v2752 = vmul.f32 %v2687, 1.442695
      %v2753 = vpow.pop %v2752
      %v2754 = vmul.f32 %v2688, 1.442695
      %v2755 = vpow.pop %v2754
      %v2756 = vmul.f32 %v2689, 1.442695
      %v2757 = vpow.pop %v2756
      %v2758 = vmul.f32 %v2690, 1.442695
      %v2759 = vpow.pop %v2758
      %v2760 = vmul.f32 %v2691, 1.442695
      %v2761 = vpow.pop %v2760
      %v2762 = vmul.f32 %v2692, 1.442695
      %v2763 = vpow.pop %v2762
      %v2764 = vmul.f32 %v2693, 1.442695
      %v2765 = vpow.pop %v2764
      %v2766 = vmul.f32 %v2694, 1.442695
      %v2767 = vpow.pop %v2766
      %v2768 = vmul.f32 %v2695, 1.442695
      %v2769 = vpow.pop %v2768
      %v2770 = vmul.f32 %v2696, 1.442695
      %v2771 = vpow.pop %v2770
      %v2772 = vmul.f32 %v2697, 1.442695
      %v2773 = vpow.pop %v2772
      %v2774 = vmul.f32 %v2698, 1.442695
      %v2775 = vpow.pop %v2774
      %v2776 = vmul.f32 %v2699, 1.442695
      %v2777 = vpow.pop %v2776
      %v2778 = vmul.f32 %v2700, 1.442695
      %v2779 = vpow.pop %v2778
      %v2780 = vmul.f32 %v2701, 1.442695
      %v2781 = vpow.pop %v2780
      %v2782 = vmul.f32 %v2702, 1.442695
      %v2783 = vpow.pop %v2782
      %v2784 = vmul.f32 %v2703, 1.442695
      %v2785 = vpow.pop %v2784
      %v2786 = vmul.f32 %v2704, 1.442695
      %v2787 = vpow.pop %v2786
      %v2788 = vmul.f32 %v2705, 1.442695
      %v2789 = vpow.pop %v2788
      %v2790 = vmul.f32 %v2706, 1.442695
      %v2791 = vpow.pop %v2790
      %v2792 = vmul.f32 %v2707, 1.442695
      %v2793 = vpow.pop %v2792
      %v2794 = vmul.f32 %v2708, 1.442695
      %v2795 = vpow.pop %v2794
      %v2796 = vmul.f32 %v2709, 1.442695
      %v2797 = vpow.pop %v2796
      %v2798 = vmul.f32 %v2710, 1.442695
      %v2799 = vpow.pop %v2798
      %v2800 = vmul.f32 %v2711, 1.442695
      %v2801 = vpow.pop %v2800
      %v2802 = vmul.f32 %v2712, 1.442695
      %v2803 = vpow.pop %v2802
      %v2804 = vmul.f32 %v2713, 1.442695
      %v2805 = vpow.pop %v2804
      %v2806 = vmul.f32 %v2714, 1.442695
      %v2807 = vpow.pop %v2806
      %v2808 = vmul.f32 %v2715, 1.442695
      %v2809 = vpow.pop %v2808
      %v2810 = vmul.f32 %v2716, 1.442695
      %v2811 = vpow.pop %v2810
      %v2812 = vmul.f32 %v2717, 1.442695
      %v2813 = vpow.pop %v2812
      %v2814 = vmul.f32 %v2718, 1.442695
      %v2815 = vpow.pop %v2814
      %v2816 = vmul.f32 %v2719, 1.442695
      %v2817 = vpow.pop %v2816
      %v2818 = vmul.f32 %v2720, 1.442695
      %v2819 = vpow.pop %v2818
      %v2820 = vmul.f32 %v2721, 1.442695
      %v2821 = vpow.pop %v2820
      %v2822 = vmul.f32 %v2722, 1.442695
      %v2823 = vpow.pop %v2822
      %v2824 = vmul.f32 %v2723, 1.442695
      %v2825 = vpow.pop %v2824
      %v2826 = vmul.f32 %v2724, 1.442695
      %v2827 = vpow.pop %v2826
      %v2828 = vmul.f32 %v2725, 1.442695
      %v2829 = vpow.pop %v2828
      %v2830 = vmul.f32 %v2726, 1.442695
      %v2831 = vpow.pop %v2830
      %v2832 = vmul.f32 %v2727, 1.442695
      %v2833 = vpow.pop %v2832
      %v2834 = vmul.f32 %v2728, 1.442695
      %v2835 = vpow.pop %v2834
      %v2836 = vmul.f32 %v2729, 1.442695
      %v2837 = vpow.pop %v2836
      %v2838 = vmul.f32 %v2730, 1.442695
      %v2839 = vpow.pop %v2838
      %v2840 = vmul.f32 %v2731, 1.442695
      %v2841 = vpow.pop %v2840
      %v2842 = vmul.f32 %v2732, 1.442695
      %v2843 = vpow.pop %v2842
      %v2844 = vmul.f32 %v2733, 1.442695
      %v2845 = vpow.pop %v2844
      %v2846 = vmul.f32 %v2734, 1.442695
      %v2847 = vpow.pop %v2846
      %v2848 = vmul.f32 %v2735, 1.442695
      %v2849 = vpow.pop %v2848
      %v2850 = vmul.f32 %v2736, 1.442695
      %v2851 = vpow.pop %v2850
      %v2852 = vmul.f32 %v2737, 1.442695
      %v2853 = vpow.pop %v2852
      %v2854 = vmul.f32 %v2738, 1.442695
      %v2855 = vpow.pop %v2854
      %v2856 = vmul.f32 %v2739, 1.442695
      %v2857 = vpow.pop %v2856
      %v2858 = vmul.f32 %v2740, 1.442695
      %v2859 = vpow.pop %v2858
      %v2860 = vmul.f32 %v2741, 1.442695
      %v2861 = vpow.pop %v2860
      %v2862 = vmul.f32 %v2742, 1.442695
      %v2863 = vpow.pop %v2862
      %v2864 = vmul.f32 %v2743, 1.442695
      %v2865 = vpow.pop %v2864
      %v2866 = vmul.f32 %v2744, 1.442695
      %v2867 = vpow.pop %v2866
      %v2868 = vmul.f32 %v2745, 1.442695
      %v2869 = vpow.pop %v2868
      %v2870 = vmul.f32 %v2746, 1.442695
      %v2871 = vpow.pop %v2870
      %v2872 = vmul.f32 %v2747, 1.442695
      %v2873 = vpow.pop %v2872
      %v2874 = vmul.f32 %v2748, 1.442695
      %v2875 = vpow.pop %v2874
      %v2876 = vmul.f32 %v2749, 1.442695
      %v2877 = vpow.pop %v2876
      %v2878 = vadd.f32 %v2751, 1.0
      %v2879 = vadd.f32 %v2753, 1.0
      %v2880 = vadd.f32 %v2755, 1.0
      %v2881 = vadd.f32 %v2757, 1.0
      %v2882 = vadd.f32 %v2759, 1.0
      %v2883 = vadd.f32 %v2761, 1.0
      %v2884 = vadd.f32 %v2763, 1.0
      %v2885 = vadd.f32 %v2765, 1.0
      %v2886 = vadd.f32 %v2767, 1.0
      %v2887 = vadd.f32 %v2769, 1.0
      %v2888 = vadd.f32 %v2771, 1.0
      %v2889 = vadd.f32 %v2773, 1.0
      %v2890 = vadd.f32 %v2775, 1.0
      %v2891 = vadd.f32 %v2777, 1.0
      %v2892 = vadd.f32 %v2779, 1.0
      %v2893 = vadd.f32 %v2781, 1.0
      %v2894 = vadd.f32 %v2783, 1.0
      %v2895 = vadd.f32 %v2785, 1.0
      %v2896 = vadd.f32 %v2787, 1.0
      %v2897 = vadd.f32 %v2789, 1.0
      %v2898 = vadd.f32 %v2791, 1.0
      %v2899 = vadd.f32 %v2793, 1.0
      %v2900 = vadd.f32 %v2795, 1.0
      %v2901 = vadd.f32 %v2797, 1.0
      %v2902 = vadd.f32 %v2799, 1.0
      %v2903 = vadd.f32 %v2801, 1.0
      %v2904 = vadd.f32 %v2803, 1.0
      %v2905 = vadd.f32 %v2805, 1.0
      %v2906 = vadd.f32 %v2807, 1.0
      %v2907 = vadd.f32 %v2809, 1.0
      %v2908 = vadd.f32 %v2811, 1.0
      %v2909 = vadd.f32 %v2813, 1.0
      %v2910 = vadd.f32 %v2815, 1.0
      %v2911 = vadd.f32 %v2817, 1.0
      %v2912 = vadd.f32 %v2819, 1.0
      %v2913 = vadd.f32 %v2821, 1.0
      %v2914 = vadd.f32 %v2823, 1.0
      %v2915 = vadd.f32 %v2825, 1.0
      %v2916 = vadd.f32 %v2827, 1.0
      %v2917 = vadd.f32 %v2829, 1.0
      %v2918 = vadd.f32 %v2831, 1.0
      %v2919 = vadd.f32 %v2833, 1.0
      %v2920 = vadd.f32 %v2835, 1.0
      %v2921 = vadd.f32 %v2837, 1.0
      %v2922 = vadd.f32 %v2839, 1.0
      %v2923 = vadd.f32 %v2841, 1.0
      %v2924 = vadd.f32 %v2843, 1.0
      %v2925 = vadd.f32 %v2845, 1.0
      %v2926 = vadd.f32 %v2847, 1.0
      %v2927 = vadd.f32 %v2849, 1.0
      %v2928 = vadd.f32 %v2851, 1.0
      %v2929 = vadd.f32 %v2853, 1.0
      %v2930 = vadd.f32 %v2855, 1.0
      %v2931 = vadd.f32 %v2857, 1.0
      %v2932 = vadd.f32 %v2859, 1.0
      %v2933 = vadd.f32 %v2861, 1.0
      %v2934 = vadd.f32 %v2863, 1.0
      %v2935 = vadd.f32 %v2865, 1.0
      %v2936 = vadd.f32 %v2867, 1.0
      %v2937 = vadd.f32 %v2869, 1.0
      %v2938 = vadd.f32 %v2871, 1.0
      %v2939 = vadd.f32 %v2873, 1.0
      %v2940 = vadd.f32 %v2875, 1.0
      %v2941 = vadd.f32 %v2877, 1.0
      %v2942 = vrcp.pop %v2878
      %v2943 = vmul.f32 1.0, %v2942
      %v2944 = vrcp.pop %v2879
      %v2945 = vmul.f32 1.0, %v2944
      %v2946 = vrcp.pop %v2880
      %v2947 = vmul.f32 1.0, %v2946
      %v2948 = vrcp.pop %v2881
      %v2949 = vmul.f32 1.0, %v2948
      %v2950 = vrcp.pop %v2882
      %v2951 = vmul.f32 1.0, %v2950
      %v2952 = vrcp.pop %v2883
      %v2953 = vmul.f32 1.0, %v2952
      %v2954 = vrcp.pop %v2884
      %v2955 = vmul.f32 1.0, %v2954
      %v2956 = vrcp.pop %v2885
      %v2957 = vmul.f32 1.0, %v2956
      %v2958 = vrcp.pop %v2886
      %v2959 = vmul.f32 1.0, %v2958
      %v2960 = vrcp.pop %v2887
      %v2961 = vmul.f32 1.0, %v2960
      %v2962 = vrcp.pop %v2888
      %v2963 = vmul.f32 1.0, %v2962
      %v2964 = vrcp.pop %v2889
      %v2965 = vmul.f32 1.0, %v2964
      %v2966 = vrcp.pop %v2890
      %v2967 = vmul.f32 1.0, %v2966
      %v2968 = vrcp.pop %v2891
      %v2969 = vmul.f32 1.0, %v2968
      %v2970 = vrcp.pop %v2892
      %v2971 = vmul.f32 1.0, %v2970
      %v2972 = vrcp.pop %v2893
      %v2973 = vmul.f32 1.0, %v2972
      %v2974 = vrcp.pop %v2894
      %v2975 = vmul.f32 1.0, %v2974
      %v2976 = vrcp.pop %v2895
      %v2977 = vmul.f32 1.0, %v2976
      %v2978 = vrcp.pop %v2896
      %v2979 = vmul.f32 1.0, %v2978
      %v2980 = vrcp.pop %v2897
      %v2981 = vmul.f32 1.0, %v2980
      %v2982 = vrcp.pop %v2898
      %v2983 = vmul.f32 1.0, %v2982
      %v2984 = vrcp.pop %v2899
      %v2985 = vmul.f32 1.0, %v2984
      %v2986 = vrcp.pop %v2900
      %v2987 = vmul.f32 1.0, %v2986
      %v2988 = vrcp.pop %v2901
      %v2989 = vmul.f32 1.0, %v2988
      %v2990 = vrcp.pop %v2902
      %v2991 = vmul.f32 1.0, %v2990
      %v2992 = vrcp.pop %v2903
      %v2993 = vmul.f32 1.0, %v2992
      %v2994 = vrcp.pop %v2904
      %v2995 = vmul.f32 1.0, %v2994
      %v2996 = vrcp.pop %v2905
      %v2997 = vmul.f32 1.0, %v2996
      %v2998 = vrcp.pop %v2906
      %v2999 = vmul.f32 1.0, %v2998
      %v3000 = vrcp.pop %v2907
      %v3001 = vmul.f32 1.0, %v3000
      %v3002 = vrcp.pop %v2908
      %v3003 = vmul.f32 1.0, %v3002
      %v3004 = vrcp.pop %v2909
      %v3005 = vmul.f32 1.0, %v3004
      %v3006 = vrcp.pop %v2910
      %v3007 = vmul.f32 1.0, %v3006
      %v3008 = vrcp.pop %v2911
      %v3009 = vmul.f32 1.0, %v3008
      %v3010 = vrcp.pop %v2912
      %v3011 = vmul.f32 1.0, %v3010
      %v3012 = vrcp.pop %v2913
      %v3013 = vmul.f32 1.0, %v3012
      %v3014 = vrcp.pop %v2914
      %v3015 = vmul.f32 1.0, %v3014
      %v3016 = vrcp.pop %v2915
      %v3017 = vmul.f32 1.0, %v3016
      %v3018 = vrcp.pop %v2916
      %v3019 = vmul.f32 1.0, %v3018
      %v3020 = vrcp.pop %v2917
      %v3021 = vmul.f32 1.0, %v3020
      %v3022 = vrcp.pop %v2918
      %v3023 = vmul.f32 1.0, %v3022
      %v3024 = vrcp.pop %v2919
      %v3025 = vmul.f32 1.0, %v3024
      %v3026 = vrcp.pop %v2920
      %v3027 = vmul.f32 1.0, %v3026
      %v3028 = vrcp.pop %v2921
      %v3029 = vmul.f32 1.0, %v3028
      %v3030 = vrcp.pop %v2922
      %v3031 = vmul.f32 1.0, %v3030
      %v3032 = vrcp.pop %v2923
      %v3033 = vmul.f32 1.0, %v3032
      %v3034 = vrcp.pop %v2924
      %v3035 = vmul.f32 1.0, %v3034
      %v3036 = vrcp.pop %v2925
      %v3037 = vmul.f32 1.0, %v3036
      %v3038 = vrcp.pop %v2926
      %v3039 = vmul.f32 1.0, %v3038
      %v3040 = vrcp.pop %v2927
      %v3041 = vmul.f32 1.0, %v3040
      %v3042 = vrcp.pop %v2928
      %v3043 = vmul.f32 1.0, %v3042
      %v3044 = vrcp.pop %v2929
      %v3045 = vmul.f32 1.0, %v3044
      %v3046 = vrcp.pop %v2930
      %v3047 = vmul.f32 1.0, %v3046
      %v3048 = vrcp.pop %v2931
      %v3049 = vmul.f32 1.0, %v3048
      %v3050 = vrcp.pop %v2932
      %v3051 = vmul.f32 1.0, %v3050
      %v3052 = vrcp.pop %v2933
      %v3053 = vmul.f32 1.0, %v3052
      %v3054 = vrcp.pop %v2934
      %v3055 = vmul.f32 1.0, %v3054
      %v3056 = vrcp.pop %v2935
      %v3057 = vmul.f32 1.0, %v3056
      %v3058 = vrcp.pop %v2936
      %v3059 = vmul.f32 1.0, %v3058
      %v3060 = vrcp.pop %v2937
      %v3061 = vmul.f32 1.0, %v3060
      %v3062 = vrcp.pop %v2938
      %v3063 = vmul.f32 1.0, %v3062
      %v3064 = vrcp.pop %v2939
      %v3065 = vmul.f32 1.0, %v3064
      %v3066 = vrcp.pop %v2940
      %v3067 = vmul.f32 1.0, %v3066
      %v3068 = vrcp.pop %v2941
      %v3069 = vmul.f32 1.0, %v3068
      %v3070 = vld [vmem:[%s3] sm:$0xff]
      %v3071 = vld [vmem:[%s3 + $0x8] sm:$0xff]
      %v3072 = vld [vmem:[%s3 + $0x10] sm:$0xff]
      %v3073 = vld [vmem:[%s3 + $0x18] sm:$0xff]
      %v3074 = vld [vmem:[%s3 + $0x20] sm:$0xff]
      %v3075 = vld [vmem:[%s3 + $0x28] sm:$0xff]
      %v3076 = vld [vmem:[%s3 + $0x30] sm:$0xff]
      %v3077 = vld [vmem:[%s3 + $0x38] sm:$0xff]
      %v3078 = vld [vmem:[%s3 + $0x40] sm:$0xff]
      %v3079 = vld [vmem:[%s3 + $0x48] sm:$0xff]
      %v3080 = vld [vmem:[%s3 + $0x50] sm:$0xff]
      %v3081 = vld [vmem:[%s3 + $0x58] sm:$0xff]
      %v3082 = vld [vmem:[%s3 + $0x60] sm:$0xff]
      %v3083 = vld [vmem:[%s3 + $0x68] sm:$0xff]
      %v3084 = vld [vmem:[%s3 + $0x70] sm:$0xff]
      %v3085 = vld [vmem:[%s3 + $0x78] sm:$0xff]
      %v3086 = vld [vmem:[%s3 + $0x80] sm:$0xff]
      %v3087 = vld [vmem:[%s3 + $0x88] sm:$0xff]
      %v3088 = vld [vmem:[%s3 + $0x90] sm:$0xff]
      %v3089 = vld [vmem:[%s3 + $0x98] sm:$0xff]
      %v3090 = vld [vmem:[%s3 + $0xa0] sm:$0xff]
      %v3091 = vld [vmem:[%s3 + $0xa8] sm:$0xff]
      %v3092 = vld [vmem:[%s3 + $0xb0] sm:$0xff]
      %v3093 = vld [vmem:[%s3 + $0xb8] sm:$0xff]
      %v3094 = vld [vmem:[%s3 + $0xc0] sm:$0xff]
      %v3095 = vld [vmem:[%s3 + $0xc8] sm:$0xff]
      %v3096 = vld [vmem:[%s3 + $0xd0] sm:$0xff]
      %v3097 = vld [vmem:[%s3 + $0xd8] sm:$0xff]
      %v3098 = vld [vmem:[%s3 + $0xe0] sm:$0xff]
      %v3099 = vld [vmem:[%s3 + $0xe8] sm:$0xff]
      %v3100 = vld [vmem:[%s3 + $0xf0] sm:$0xff]
      %v3101 = vld [vmem:[%s3 + $0xf8] sm:$0xff]
      %v3102 = vld [vmem:[%s3 + $0x100] sm:$0xff]
      %v3103 = vld [vmem:[%s3 + $0x108] sm:$0xff]
      %v3104 = vld [vmem:[%s3 + $0x110] sm:$0xff]
      %v3105 = vld [vmem:[%s3 + $0x118] sm:$0xff]
      %v3106 = vld [vmem:[%s3 + $0x120] sm:$0xff]
      %v3107 = vld [vmem:[%s3 + $0x128] sm:$0xff]
      %v3108 = vld [vmem:[%s3 + $0x130] sm:$0xff]
      %v3109 = vld [vmem:[%s3 + $0x138] sm:$0xff]
      %v3110 = vld [vmem:[%s3 + $0x140] sm:$0xff]
      %v3111 = vld [vmem:[%s3 + $0x148] sm:$0xff]
      %v3112 = vld [vmem:[%s3 + $0x150] sm:$0xff]
      %v3113 = vld [vmem:[%s3 + $0x158] sm:$0xff]
      %v3114 = vld [vmem:[%s3 + $0x160] sm:$0xff]
      %v3115 = vld [vmem:[%s3 + $0x168] sm:$0xff]
      %v3116 = vld [vmem:[%s3 + $0x170] sm:$0xff]
      %v3117 = vld [vmem:[%s3 + $0x178] sm:$0xff]
      %v3118 = vld [vmem:[%s3 + $0x180] sm:$0xff]
      %v3119 = vld [vmem:[%s3 + $0x188] sm:$0xff]
      %v3120 = vld [vmem:[%s3 + $0x190] sm:$0xff]
      %v3121 = vld [vmem:[%s3 + $0x198] sm:$0xff]
      %v3122 = vld [vmem:[%s3 + $0x1a0] sm:$0xff]
      %v3123 = vld [vmem:[%s3 + $0x1a8] sm:$0xff]
      %v3124 = vld [vmem:[%s3 + $0x1b0] sm:$0xff]
      %v3125 = vld [vmem:[%s3 + $0x1b8] sm:$0xff]
      %v3126 = vld [vmem:[%s3 + $0x1c0] sm:$0xff]
      %v3127 = vld [vmem:[%s3 + $0x1c8] sm:$0xff]
      %v3128 = vld [vmem:[%s3 + $0x1d0] sm:$0xff]
      %v3129 = vld [vmem:[%s3 + $0x1d8] sm:$0xff]
      %v3130 = vld [vmem:[%s3 + $0x1e0] sm:$0xff]
      %v3131 = vld [vmem:[%s3 + $0x1e8] sm:$0xff]
      %v3132 = vld [vmem:[%s3 + $0x1f0] sm:$0xff]
      %v3133 = vld [vmem:[%s3 + $0x1f8] sm:$0xff]
      %v3134 = vmul.f32 %v2943, %v3070
      %v3135 = vmul.f32 %v2945, %v3071
      %v3136 = vmul.f32 %v2947, %v3072
      %v3137 = vmul.f32 %v2949, %v3073
      %v3138 = vmul.f32 %v2951, %v3074
      %v3139 = vmul.f32 %v2953, %v3075
      %v3140 = vmul.f32 %v2955, %v3076
      %v3141 = vmul.f32 %v2957, %v3077
      %v3142 = vmul.f32 %v2959, %v3078
      %v3143 = vmul.f32 %v2961, %v3079
      %v3144 = vmul.f32 %v2963, %v3080
      %v3145 = vmul.f32 %v2965, %v3081
      %v3146 = vmul.f32 %v2967, %v3082
      %v3147 = vmul.f32 %v2969, %v3083
      %v3148 = vmul.f32 %v2971, %v3084
      %v3149 = vmul.f32 %v2973, %v3085
      %v3150 = vmul.f32 %v2975, %v3086
      %v3151 = vmul.f32 %v2977, %v3087
      %v3152 = vmul.f32 %v2979, %v3088
      %v3153 = vmul.f32 %v2981, %v3089
      %v3154 = vmul.f32 %v2983, %v3090
      %v3155 = vmul.f32 %v2985, %v3091
      %v3156 = vmul.f32 %v2987, %v3092
      %v3157 = vmul.f32 %v2989, %v3093
      %v3158 = vmul.f32 %v2991, %v3094
      %v3159 = vmul.f32 %v2993, %v3095
      %v3160 = vmul.f32 %v2995, %v3096
      %v3161 = vmul.f32 %v2997, %v3097
      %v3162 = vmul.f32 %v2999, %v3098
      %v3163 = vmul.f32 %v3001, %v3099
      %v3164 = vmul.f32 %v3003, %v3100
      %v3165 = vmul.f32 %v3005, %v3101
      %v3166 = vmul.f32 %v3007, %v3102
      %v3167 = vmul.f32 %v3009, %v3103
      %v3168 = vmul.f32 %v3011, %v3104
      %v3169 = vmul.f32 %v3013, %v3105
      %v3170 = vmul.f32 %v3015, %v3106
      %v3171 = vmul.f32 %v3017, %v3107
      %v3172 = vmul.f32 %v3019, %v3108
      %v3173 = vmul.f32 %v3021, %v3109
      %v3174 = vmul.f32 %v3023, %v3110
      %v3175 = vmul.f32 %v3025, %v3111
      %v3176 = vmul.f32 %v3027, %v3112
      %v3177 = vmul.f32 %v3029, %v3113
      %v3178 = vmul.f32 %v3031, %v3114
      %v3179 = vmul.f32 %v3033, %v3115
      %v3180 = vmul.f32 %v3035, %v3116
      %v3181 = vmul.f32 %v3037, %v3117
      %v3182 = vmul.f32 %v3039, %v3118
      %v3183 = vmul.f32 %v3041, %v3119
      %v3184 = vmul.f32 %v3043, %v3120
      %v3185 = vmul.f32 %v3045, %v3121
      %v3186 = vmul.f32 %v3047, %v3122
      %v3187 = vmul.f32 %v3049, %v3123
      %v3188 = vmul.f32 %v3051, %v3124
      %v3189 = vmul.f32 %v3053, %v3125
      %v3190 = vmul.f32 %v3055, %v3126
      %v3191 = vmul.f32 %v3057, %v3127
      %v3192 = vmul.f32 %v3059, %v3128
      %v3193 = vmul.f32 %v3061, %v3129
      %v3194 = vmul.f32 %v3063, %v3130
      %v3195 = vmul.f32 %v3065, %v3131
      %v3196 = vmul.f32 %v3067, %v3132
      %v3197 = vmul.f32 %v3069, %v3133
      %3198 = vst [vmem:[%s291] sm:$0xff] %v3134
      %3199 = vst [vmem:[%s291 + $0x8] sm:$0xff] %v3135
      %3200 = vst [vmem:[%s291 + $0x10] sm:$0xff] %v3136
      %3201 = vst [vmem:[%s291 + $0x18] sm:$0xff] %v3137
      %3202 = vst [vmem:[%s291 + $0x20] sm:$0xff] %v3138
      %3203 = vst [vmem:[%s291 + $0x28] sm:$0xff] %v3139
      %3204 = vst [vmem:[%s291 + $0x30] sm:$0xff] %v3140
      %3205 = vst [vmem:[%s291 + $0x38] sm:$0xff] %v3141
      %3206 = vst [vmem:[%s291 + $0x40] sm:$0xff] %v3142
      %3207 = vst [vmem:[%s291 + $0x48] sm:$0xff] %v3143
      %3208 = vst [vmem:[%s291 + $0x50] sm:$0xff] %v3144
      %3209 = vst [vmem:[%s291 + $0x58] sm:$0xff] %v3145
      %3210 = vst [vmem:[%s291 + $0x60] sm:$0xff] %v3146
      %3211 = vst [vmem:[%s291 + $0x68] sm:$0xff] %v3147
      %3212 = vst [vmem:[%s291 + $0x70] sm:$0xff] %v3148
      %3213 = vst [vmem:[%s291 + $0x78] sm:$0xff] %v3149
      %3214 = vst [vmem:[%s291 + $0x80] sm:$0xff] %v3150
      %3215 = vst [vmem:[%s291 + $0x88] sm:$0xff] %v3151
      %3216 = vst [vmem:[%s291 + $0x90] sm:$0xff] %v3152
      %3217 = vst [vmem:[%s291 + $0x98] sm:$0xff] %v3153
      %3218 = vst [vmem:[%s291 + $0xa0] sm:$0xff] %v3154
      %3219 = vst [vmem:[%s291 + $0xa8] sm:$0xff] %v3155
      %3220 = vst [vmem:[%s291 + $0xb0] sm:$0xff] %v3156
      %3221 = vst [vmem:[%s291 + $0xb8] sm:$0xff] %v3157
      %3222 = vst [vmem:[%s291 + $0xc0] sm:$0xff] %v3158
      %3223 = vst [vmem:[%s291 + $0xc8] sm:$0xff] %v3159
      %3224 = vst [vmem:[%s291 + $0xd0] sm:$0xff] %v3160
      %3225 = vst [vmem:[%s291 + $0xd8] sm:$0xff] %v3161
      %3226 = vst [vmem:[%s291 + $0xe0] sm:$0xff] %v3162
      %3227 = vst [vmem:[%s291 + $0xe8] sm:$0xff] %v3163
      %3228 = vst [vmem:[%s291 + $0xf0] sm:$0xff] %v3164
      %3229 = vst [vmem:[%s291 + $0xf8] sm:$0xff] %v3165
      %3230 = vst [vmem:[%s291 + $0x100] sm:$0xff] %v3166
      %3231 = vst [vmem:[%s291 + $0x108] sm:$0xff] %v3167
      %3232 = vst [vmem:[%s291 + $0x110] sm:$0xff] %v3168
      %3233 = vst [vmem:[%s291 + $0x118] sm:$0xff] %v3169
      %3234 = vst [vmem:[%s291 + $0x120] sm:$0xff] %v3170
      %3235 = vst [vmem:[%s291 + $0x128] sm:$0xff] %v3171
      %3236 = vst [vmem:[%s291 + $0x130] sm:$0xff] %v3172
      %3237 = vst [vmem:[%s291 + $0x138] sm:$0xff] %v3173
      %3238 = vst [vmem:[%s291 + $0x140] sm:$0xff] %v3174
      %3239 = vst [vmem:[%s291 + $0x148] sm:$0xff] %v3175
      %3240 = vst [vmem:[%s291 + $0x150] sm:$0xff] %v3176
      %3241 = vst [vmem:[%s291 + $0x158] sm:$0xff] %v3177
      %3242 = vst [vmem:[%s291 + $0x160] sm:$0xff] %v3178
      %3243 = vst [vmem:[%s291 + $0x168] sm:$0xff] %v3179
      %3244 = vst [vmem:[%s291 + $0x170] sm:$0xff] %v3180
      %3245 = vst [vmem:[%s291 + $0x178] sm:$0xff] %v3181
      %3246 = vst [vmem:[%s291 + $0x180] sm:$0xff] %v3182
      %3247 = vst [vmem:[%s291 + $0x188] sm:$0xff] %v3183
      %3248 = vst [vmem:[%s291 + $0x190] sm:$0xff] %v3184
      %3249 = vst [vmem:[%s291 + $0x198] sm:$0xff] %v3185
      %3250 = vst [vmem:[%s291 + $0x1a0] sm:$0xff] %v3186
      %3251 = vst [vmem:[%s291 + $0x1a8] sm:$0xff] %v3187
      %3252 = vst [vmem:[%s291 + $0x1b0] sm:$0xff] %v3188
      %3253 = vst [vmem:[%s291 + $0x1b8] sm:$0xff] %v3189
      %3254 = vst [vmem:[%s291 + $0x1c0] sm:$0xff] %v3190
      %3255 = vst [vmem:[%s291 + $0x1c8] sm:$0xff] %v3191
      %3256 = vst [vmem:[%s291 + $0x1d0] sm:$0xff] %v3192
      %3257 = vst [vmem:[%s291 + $0x1d8] sm:$0xff] %v3193
      %3258 = vst [vmem:[%s291 + $0x1e0] sm:$0xff] %v3194
      %3259 = vst [vmem:[%s291 + $0x1e8] sm:$0xff] %v3195
      %3260 = vst [vmem:[%s291 + $0x1f0] sm:$0xff] %v3196
      %3261 = vst [vmem:[%s291 + $0x1f8] sm:$0xff] %v3197
      %p3262 = scmp.lt.s32.totalorder %s17, 1
      %s3263 = scalar_select %p3262, %s17, 1
      %s3264 = smul.addr %s3263, 64
      %s3265 = smul.addr %s3264, 8
      %s3266 = scalar_lea.vmem %s6, %s3265
      // Predicated region
      $region45: #{vae_forward.1} parent=43 // pred_check
        %p3267 = pneg %p176
      $region46: #{vae_forward.1} parent=43 // pred_check_branch
        %3269 = sbr.rel (%p3267) target = $region48
      $region47: #{vae_forward.1} parent=43 // pred_region
        _
      $region48: #{vae_forward.1} parent=43 // pred_fallthru
        _
    $region44: #{vae_forward.1} parent=5 // pred_fallthru
      _
    %p3270 = scmp.le.s32.totalorder 2, %s12
    // Predicated region
    $region49: #{vae_forward.1} parent=5 // pred_check
      %p3271 = pneg %p3270
    $region50: #{vae_forward.1} parent=5 // pred_check_branch
      %3273 = sbr.rel (%p3271) target = $region52
    $region51: #{vae_forward.1} parent=5 // pred_region
      %s3274 = ssub.s32 %s12, 2
      // Predicated region
      $region53: #{vae_forward.1} parent=51 // pred_check
        %p3275 = pneg %p182
      $region54: #{vae_forward.1} parent=51 // pred_check_branch
        %3277 = sbr.rel (%p3275) target = $region56
      $region55: #{vae_forward.1} parent=51 // pred_region
        %p3278 = scmp.lt.s32.totalorder %s18, 1
        %s3279 = scalar_select %p3278, %s18, 1
        %s3280 = smul.addr %s3279, 64
        %s3281 = smul.addr %s3280, 8
        %s3282 = scalar_lea.vmem %s6, %s3281
      $region56: #{vae_forward.1} parent=51 // pred_fallthru
        _
    $region52: #{vae_forward.1} parent=5 // pred_fallthru
      _
  $region6: #{vae_forward.1} parent=0 // loop_footer
    %s16 = sadd.s32 1, %s12
  $region7: #{vae_forward.1} parent=0 // loop_footer_branch
    %11 = sbr.rel target = $region3
  $region8: #{vae_forward.1} parent=0 // loop_exit
    _

</llo_original>
